<compile_context>
chip_gen: v5e
topology: v5e:2x2
jax: 0.10.0
libtpu: 0.0.40
codegen_flags: <defaults>
</compile_context>

<pallas_src>
import functools

import jax
import jax.numpy as jnp
from jax import lax
from jax.experimental import pallas as pl
from jax.experimental.pallas import tpu as pltpu


def _mult_deconv_kernel(x_ref, w_ref, b_ref, m_ref, o_ref, *,
                        num_layers, k, pad, W):
    """Fused chain of `num_layers` (deconv stride=1, 'same' + ELU) layers.

    x_ref : (C, NB*H*W)       activations; NB images back-to-back on the lane
                              axis, each flattened row-major (H*W).
    w_ref : (L, k*k, OC, C)   conv-equivalent weights, tap-major.
    b_ref : (L, OC, 1)        biases.
    m_ref : (k*k, C, NB*H*W)  {0,1} float boundary masks per tap (precomputed).
    o_ref : (OC, NB*H*W)      output activations (same layout as x_ref).
    """
    lanes = x_ref.shape[-1]
    act = x_ref[...]                                     # (C, lanes) f32

    # Statically unrolled layer loop (L=5): live set stays well under 64 vregs
    # at this size.  If scaled up, switch to lax.fori_loop with OC padded to 8.
    for l in range(num_layers):
        acc = None
        for a in range(k):
            for b in range(k):
                t = a * k + b
                # Tap (a, b) needs act[c, i + (a-pad), j + (b-pad)], i.e. the
                # activation shifted by s = (a-pad)*W + (b-pad) along the
                # flattened lane axis, with out-of-image lanes zeroed.
                s = (a - pad) * W + (b - pad)
                if s == 0:
                    src = act                            # center tap: as-is
                else:
                    # pltpu.roll matches jnp.roll: result[p] = x[(p - shift) % n],
                    # so shift = (-s) % lanes gives result[p] = x[p + s].
                    src = pltpu.roll(act, (-s) % lanes, axis=1)
                    # Zero lanes whose source pixel is outside the image (this
                    # also kills cross-image wrap when NB > 1).  Masks are tiny
                    # VMEM loads (load slots have slack); not hoisting them
                    # keeps vreg pressure low across the unrolled layers.
                    src = src * m_ref[t]
                part = jnp.dot(w_ref[l, t], src,
                               preferred_element_type=jnp.float32)
                acc = part if acc is None else acc + part
        acc = acc + b_ref[l]                             # (OC, 1) lane-broadcast
        # ELU (alpha=1): x if x > 0 else exp(x) - 1.
        act = jnp.where(acc > 0, acc, jnp.exp(jnp.minimum(acc, 0.0)) - 1.0)

    o_ref[...] = act.astype(o_ref.dtype)                 # full-width lane-dense store


def _num_grid_steps(batch, hw, max_lanes=2048):
    """Smallest grid length (>=2 when batch>=2, so both v7x TensorCores work)
    whose per-step lane width stays modest (bounds mask/acc vreg footprint)."""
    if batch <= 1:
        return 1
    for g in range(2, batch + 1):
        if batch % g == 0 and (batch // g) * hw <= max_lanes:
            return g
    return batch


def mult_deconv_forward(x_nchw, params, *, kernel_size, padding):
    """MultDeConv forward: all (ConvTranspose2d + ELU) layers in one pallas_call.

    x_nchw : (N, C, H, W) float32, PyTorch NCHW layout.
    params : list of (weight (Cin, Cout, k, k) [ConvTranspose2d layout], bias (Cout,)).
    """
    N, C, H, W = x_nchw.shape
    k = kernel_size
    L = len(params)
    OC = params[0][0].shape[1]
    HW = H * W

    # ConvTranspose2d(stride=1, padding=p) == correlation with the flipped,
    # (in,out)-swapped weight and padding (k-1-p).  Chaining layers inside the
    # kernel requires every layer to preserve (H, W)  =>  2*padding == k-1
    # (true for the module's k=3, padding=1 config).
    assert OC == C, "MultDeConv chains layers, so input_dim must equal output_dim"
    assert 2 * padding == k - 1, (
        "in-kernel chaining needs size-preserving layers (2*padding == kernel_size-1)")
    conv_pad = k - 1 - padding

    # --- one-off parameter repack (wrapper-side layout plumbing) -------------
    # w_all[l, a*k + b, oc, c] = weight[c, oc, k-1-a, k-1-b]
    w_stack, b_stack = [], []
    for (w_t, bias) in params:
        w_conv = jnp.transpose(w_t[:, :, ::-1, ::-1], (1, 0, 2, 3))     # (OC,C,k,k)
        w_stack.append(jnp.transpose(w_conv, (2, 3, 0, 1)).reshape(k * k, OC, C))
        b_stack.append(bias.reshape(OC, 1))
    w_all = jnp.stack(w_stack, 0).astype(jnp.float32)                   # (L,k*k,OC,C)
    b_all = jnp.stack(b_stack, 0).astype(jnp.float32)                   # (L,OC,1)

    # --- grid / lane-dense layout --------------------------------------------
    G = _num_grid_steps(N, HW)
    NB = N // G
    lanes = NB * HW

    # Batch folded next to H*W on the lane axis (tiny one-off XLA transpose).
    x_cf = jnp.transpose(x_nchw, (1, 0, 2, 3)).reshape(C, N * HW).astype(jnp.float32)

    # Precomputed {0,1} boundary masks per tap (fully hoisted out of the kernel).
    p = jnp.arange(lanes, dtype=jnp.int32)
    col = p % W
    row = (p % HW) // W

    def _ok(idx, d, size):
        if d == 0:
            return jnp.ones(idx.shape, dtype=bool)
        return (idx >= -d) if d < 0 else (idx < size - d)

    mask_rows = []
    for a in range(k):
        for b in range(k):
            m = _ok(row, a - conv_pad, H) & _ok(col, b - conv_pad, W)
            mask_rows.append(jnp.broadcast_to(m[None, :], (C, lanes)))
    masks = jnp.stack(mask_rows, 0).astype(jnp.float32)                 # (k*k,C,lanes)

    kernel = functools.partial(
        _mult_deconv_kernel, num_layers=L, k=k, pad=conv_pad, W=W)

    out = pl.pallas_call(
        kernel,
        out_shape=jax.ShapeDtypeStruct((OC, N * HW), jnp.float32),
        grid=(G,),
        in_specs=[
            pl.BlockSpec((C, lanes), lambda g: (0, g)),               # activations
            pl.BlockSpec((L, k * k, OC, C), lambda g: (0, 0, 0, 0)),  # weights
            pl.BlockSpec((L, OC, 1), lambda g: (0, 0, 0)),            # biases
            pl.BlockSpec((k * k, C, lanes), lambda g: (0, 0, 0)),     # masks
        ],
        out_specs=pl.BlockSpec((OC, lanes), lambda g: (0, g)),
        compiler_params=pltpu.CompilerParams(
            dimension_semantics=("parallel",)),
    )(x_cf, w_all, b_all, masks)

    return jnp.transpose(out.reshape(OC, N, H, W), (1, 0, 2, 3))


def _reference_forward(x_nchw, params, *, kernel_size, padding):
    """Pure-JAX reference (lax.conv) for correctness checking."""
    k = kernel_size
    x = jnp.transpose(x_nchw, (0, 2, 3, 1))                 # NHWC
    pad = k - 1 - padding
    for (w_t, b) in params:
        w_flip = w_t[:, :, ::-1, ::-1]                      # (Cin, Cout, k, k)
        w_hwio = jnp.transpose(w_flip, (2, 3, 0, 1))        # (k, k, Cin, Cout)
        y = lax.conv_general_dilated(
            x, w_hwio, window_strides=(1, 1),
            padding=((pad, pad), (pad, pad)),
            dimension_numbers=('NHWC', 'HWIO', 'NHWC')) + b
        x = jnp.where(y > 0, y, jnp.exp(jnp.minimum(y, 0.0)) - 1.0)
    return jnp.transpose(x, (0, 3, 1, 2))


if __name__ == "__main__":
    # MultDeConv(input_dim=4, output_dim=4, kernel_size=3, recurrent_index=5).
    N, C, H, W = 2, 4, 16, 16
    KSIZE, PAD, RECURRENT = 3, 1, 5

    key = jax.random.PRNGKey(0)
    kx, *kl = jax.random.split(key, 1 + 2 * RECURRENT)

    x = jax.random.normal(kx, (N, C, H, W), dtype=jnp.float32)

    # Deterministic parameter init (ConvTranspose2d weight shape: (Cin, Cout, k, k)).
    bound = 1.0 / jnp.sqrt(C * KSIZE * KSIZE)
    params = []
    for i in range(RECURRENT):
        w = jax.random.uniform(kl[2 * i], (C, C, KSIZE, KSIZE),
                               minval=-bound, maxval=bound, dtype=jnp.float32)
        b = jax.random.uniform(kl[2 * i + 1], (C,),
                               minval=-bound, maxval=bound, dtype=jnp.float32)
        params.append((w, b))

    fwd = jax.jit(functools.partial(mult_deconv_forward,
                                    kernel_size=KSIZE, padding=PAD))
    out = jax.block_until_ready(fwd(x, params))

    ref = jax.block_until_ready(
        _reference_forward(x, params, kernel_size=KSIZE, padding=PAD))

    assert out.shape == (N, C, H, W), out.shape
    err = float(jnp.max(jnp.abs(out - ref)))
    assert jnp.allclose(out, ref, atol=1e-4, rtol=1e-4), err

    print("KERNEL_OK")
</pallas_src>

<mosaic_0001>
module attributes {stable_mosaic.version = 11 : i64} {
  func.func @_mult_deconv_kernel(%arg0: i32, %arg1: memref<4x256xf32, #tpu.memory_space<vmem>>, %arg2: memref<5x9x4x4xf32, #tpu.memory_space<vmem>>, %arg3: memref<5x4x1xf32, #tpu.memory_space<vmem>>, %arg4: memref<9x4x256xf32, #tpu.memory_space<vmem>>, %arg5: memref<4x256xf32, #tpu.memory_space<vmem>>) attributes {dimension_semantics = [#tpu.dimension_semantics<parallel>], iteration_bounds = array<i64: 2>, scalar_prefetch = 0 : i64, scratch_operands = 0 : i64, tpu.core_type = #tpu.core_type<tc>, window_params = [{transform_indices = @transform_0, window_bounds = array<i64: 4, 256>}, {pipeline_mode = #tpu.pipeline_mode<synchronous>, transform_indices = @transform_1, window_bounds = array<i64: 5, 9, 4, 4>}, {pipeline_mode = #tpu.pipeline_mode<synchronous>, transform_indices = @transform_2, window_bounds = array<i64: 5, 4, 1>}, {pipeline_mode = #tpu.pipeline_mode<synchronous>, transform_indices = @transform_3, window_bounds = array<i64: 9, 4, 256>}, {transform_indices = @transform_4, window_bounds = array<i64: 4, 256>}]} {
    %c0 = arith.constant 0 : index
    %c0_0 = arith.constant 0 : index
    %0 = vector.load %arg1[%c0, %c0_0] : memref<4x256xf32, #tpu.memory_space<vmem>>, vector<4x256xf32>
    %c17_i32 = arith.constant 17 : i32
    %1 = tpu.dynamic_rotate %0 by %c17_i32 dim 1 : vector<4x256xf32>, i32 -> vector<4x256xf32>
    %c0_1 = arith.constant 0 : index
    %c0_2 = arith.constant 0 : index
    %c0_3 = arith.constant 0 : index
    %2 = vector.load %arg4[%c0_1, %c0_2, %c0_3] : memref<9x4x256xf32, #tpu.memory_space<vmem>>, vector<1x4x256xf32>
    %3 = vector.shape_cast %2 : vector<1x4x256xf32> to vector<4x256xf32>
    %4 = arith.mulf %1, %3 : vector<4x256xf32>
    %c0_4 = arith.constant 0 : index
    %c0_5 = arith.constant 0 : index
    %c0_6 = arith.constant 0 : index
    %c0_7 = arith.constant 0 : index
    %5 = vector.load %arg2[%c0_4, %c0_5, %c0_6, %c0_7] : memref<5x9x4x4xf32, #tpu.memory_space<vmem>>, vector<1x1x4x4xf32>
    %6 = vector.shape_cast %5 : vector<1x1x4x4xf32> to vector<4x4xf32>
    %cst = arith.constant dense<0.000000e+00> : vector<4x256xf32>
    %7 = tpu.matmul %6, %4, %cst {dimension_numbers = #tpu.dot_dimension_numbers<[1], [0], [0], [1], [0, 0, 1, 1], [], []>} : vector<4x4xf32>, vector<4x256xf32>, vector<4x256xf32> -> vector<4x256xf32>
    %c16_i32 = arith.constant 16 : i32
    %8 = tpu.dynamic_rotate %0 by %c16_i32 dim 1 : vector<4x256xf32>, i32 -> vector<4x256xf32>
    %c1 = arith.constant 1 : index
    %c0_8 = arith.constant 0 : index
    %c0_9 = arith.constant 0 : index
    %9 = vector.load %arg4[%c1, %c0_8, %c0_9] : memref<9x4x256xf32, #tpu.memory_space<vmem>>, vector<1x4x256xf32>
    %10 = vector.shape_cast %9 : vector<1x4x256xf32> to vector<4x256xf32>
    %11 = arith.mulf %8, %10 : vector<4x256xf32>
    %c0_10 = arith.constant 0 : index
    %c1_11 = arith.constant 1 : index
    %c0_12 = arith.constant 0 : index
    %c0_13 = arith.constant 0 : index
    %12 = vector.load %arg2[%c0_10, %c1_11, %c0_12, %c0_13] : memref<5x9x4x4xf32, #tpu.memory_space<vmem>>, vector<1x1x4x4xf32>
    %13 = vector.shape_cast %12 : vector<1x1x4x4xf32> to vector<4x4xf32>
    %cst_14 = arith.constant dense<0.000000e+00> : vector<4x256xf32>
    %14 = tpu.matmul %13, %11, %cst_14 {dimension_numbers = #tpu.dot_dimension_numbers<[1], [0], [0], [1], [0, 0, 1, 1], [], []>} : vector<4x4xf32>, vector<4x256xf32>, vector<4x256xf32> -> vector<4x256xf32>
    %15 = arith.addf %7, %14 : vector<4x256xf32>
    %c15_i32 = arith.constant 15 : i32
    %16 = tpu.dynamic_rotate %0 by %c15_i32 dim 1 : vector<4x256xf32>, i32 -> vector<4x256xf32>
    %c2 = arith.constant 2 : index
    %c0_15 = arith.constant 0 : index
    %c0_16 = arith.constant 0 : index
    %17 = vector.load %arg4[%c2, %c0_15, %c0_16] : memref<9x4x256xf32, #tpu.memory_space<vmem>>, vector<1x4x256xf32>
    %18 = vector.shape_cast %17 : vector<1x4x256xf32> to vector<4x256xf32>
    %19 = arith.mulf %16, %18 : vector<4x256xf32>
    %c0_17 = arith.constant 0 : index
    %c2_18 = arith.constant 2 : index
    %c0_19 = arith.constant 0 : index
    %c0_20 = arith.constant 0 : index
    %20 = vector.load %arg2[%c0_17, %c2_18, %c0_19, %c0_20] : memref<5x9x4x4xf32, #tpu.memory_space<vmem>>, vector<1x1x4x4xf32>
    %21 = vector.shape_cast %20 : vector<1x1x4x4xf32> to vector<4x4xf32>
    %cst_21 = arith.constant dense<0.000000e+00> : vector<4x256xf32>
    %22 = tpu.matmul %21, %19, %cst_21 {dimension_numbers = #tpu.dot_dimension_numbers<[1], [0], [0], [1], [0, 0, 1, 1], [], []>} : vector<4x4xf32>, vector<4x256xf32>, vector<4x256xf32> -> vector<4x256xf32>
    %23 = arith.addf %15, %22 : vector<4x256xf32>
    %c1_i32 = arith.constant 1 : i32
    %24 = tpu.dynamic_rotate %0 by %c1_i32 dim 1 : vector<4x256xf32>, i32 -> vector<4x256xf32>
    %c3 = arith.constant 3 : index
    %c0_22 = arith.constant 0 : index
    %c0_23 = arith.constant 0 : index
    %25 = vector.load %arg4[%c3, %c0_22, %c0_23] : memref<9x4x256xf32, #tpu.memory_space<vmem>>, vector<1x4x256xf32>
    %26 = vector.shape_cast %25 : vector<1x4x256xf32> to vector<4x256xf32>
    %27 = arith.mulf %24, %26 : vector<4x256xf32>
    %c0_24 = arith.constant 0 : index
    %c3_25 = arith.constant 3 : index
    %c0_26 = arith.constant 0 : index
    %c0_27 = arith.constant 0 : index
    %28 = vector.load %arg2[%c0_24, %c3_25, %c0_26, %c0_27] : memref<5x9x4x4xf32, #tpu.memory_space<vmem>>, vector<1x1x4x4xf32>
    %29 = vector.shape_cast %28 : vector<1x1x4x4xf32> to vector<4x4xf32>
    %cst_28 = arith.constant dense<0.000000e+00> : vector<4x256xf32>
    %30 = tpu.matmul %29, %27, %cst_28 {dimension_numbers = #tpu.dot_dimension_numbers<[1], [0], [0], [1], [0, 0, 1, 1], [], []>} : vector<4x4xf32>, vector<4x256xf32>, vector<4x256xf32> -> vector<4x256xf32>
    %31 = arith.addf %23, %30 : vector<4x256xf32>
    %c0_29 = arith.constant 0 : index
    %c4 = arith.constant 4 : index
    %c0_30 = arith.constant 0 : index
    %c0_31 = arith.constant 0 : index
    %32 = vector.load %arg2[%c0_29, %c4, %c0_30, %c0_31] : memref<5x9x4x4xf32, #tpu.memory_space<vmem>>, vector<1x1x4x4xf32>
    %33 = vector.shape_cast %32 : vector<1x1x4x4xf32> to vector<4x4xf32>
    %cst_32 = arith.constant dense<0.000000e+00> : vector<4x256xf32>
    %34 = tpu.matmul %33, %0, %cst_32 {dimension_numbers = #tpu.dot_dimension_numbers<[1], [0], [0], [1], [0, 0, 1, 1], [], []>} : vector<4x4xf32>, vector<4x256xf32>, vector<4x256xf32> -> vector<4x256xf32>
    %35 = arith.addf %31, %34 : vector<4x256xf32>
    %c255_i32 = arith.constant 255 : i32
    %36 = tpu.dynamic_rotate %0 by %c255_i32 dim 1 : vector<4x256xf32>, i32 -> vector<4x256xf32>
    %c5 = arith.constant 5 : index
    %c0_33 = arith.constant 0 : index
    %c0_34 = arith.constant 0 : index
    %37 = vector.load %arg4[%c5, %c0_33, %c0_34] : memref<9x4x256xf32, #tpu.memory_space<vmem>>, vector<1x4x256xf32>
    %38 = vector.shape_cast %37 : vector<1x4x256xf32> to vector<4x256xf32>
    %39 = arith.mulf %36, %38 : vector<4x256xf32>
    %c0_35 = arith.constant 0 : index
    %c5_36 = arith.constant 5 : index
    %c0_37 = arith.constant 0 : index
    %c0_38 = arith.constant 0 : index
    %40 = vector.load %arg2[%c0_35, %c5_36, %c0_37, %c0_38] : memref<5x9x4x4xf32, #tpu.memory_space<vmem>>, vector<1x1x4x4xf32>
    %41 = vector.shape_cast %40 : vector<1x1x4x4xf32> to vector<4x4xf32>
    %cst_39 = arith.constant dense<0.000000e+00> : vector<4x256xf32>
    %42 = tpu.matmul %41, %39, %cst_39 {dimension_numbers = #tpu.dot_dimension_numbers<[1], [0], [0], [1], [0, 0, 1, 1], [], []>} : vector<4x4xf32>, vector<4x256xf32>, vector<4x256xf32> -> vector<4x256xf32>
    %43 = arith.addf %35, %42 : vector<4x256xf32>
    %c241_i32 = arith.constant 241 : i32
    %44 = tpu.dynamic_rotate %0 by %c241_i32 dim 1 : vector<4x256xf32>, i32 -> vector<4x256xf32>
    %c6 = arith.constant 6 : index
    %c0_40 = arith.constant 0 : index
    %c0_41 = arith.constant 0 : index
    %45 = vector.load %arg4[%c6, %c0_40, %c0_41] : memref<9x4x256xf32, #tpu.memory_space<vmem>>, vector<1x4x256xf32>
    %46 = vector.shape_cast %45 : vector<1x4x256xf32> to vector<4x256xf32>
    %47 = arith.mulf %44, %46 : vector<4x256xf32>
    %c0_42 = arith.constant 0 : index
    %c6_43 = arith.constant 6 : index
    %c0_44 = arith.constant 0 : index
    %c0_45 = arith.constant 0 : index
    %48 = vector.load %arg2[%c0_42, %c6_43, %c0_44, %c0_45] : memref<5x9x4x4xf32, #tpu.memory_space<vmem>>, vector<1x1x4x4xf32>
    %49 = vector.shape_cast %48 : vector<1x1x4x4xf32> to vector<4x4xf32>
    %cst_46 = arith.constant dense<0.000000e+00> : vector<4x256xf32>
    %50 = tpu.matmul %49, %47, %cst_46 {dimension_numbers = #tpu.dot_dimension_numbers<[1], [0], [0], [1], [0, 0, 1, 1], [], []>} : vector<4x4xf32>, vector<4x256xf32>, vector<4x256xf32> -> vector<4x256xf32>
    %51 = arith.addf %43, %50 : vector<4x256xf32>
    %c240_i32 = arith.constant 240 : i32
    %52 = tpu.dynamic_rotate %0 by %c240_i32 dim 1 : vector<4x256xf32>, i32 -> vector<4x256xf32>
    %c7 = arith.constant 7 : index
    %c0_47 = arith.constant 0 : index
    %c0_48 = arith.constant 0 : index
    %53 = vector.load %arg4[%c7, %c0_47, %c0_48] : memref<9x4x256xf32, #tpu.memory_space<vmem>>, vector<1x4x256xf32>
    %54 = vector.shape_cast %53 : vector<1x4x256xf32> to vector<4x256xf32>
    %55 = arith.mulf %52, %54 : vector<4x256xf32>
    %c0_49 = arith.constant 0 : index
    %c7_50 = arith.constant 7 : index
    %c0_51 = arith.constant 0 : index
    %c0_52 = arith.constant 0 : index
    %56 = vector.load %arg2[%c0_49, %c7_50, %c0_51, %c0_52] : memref<5x9x4x4xf32, #tpu.memory_space<vmem>>, vector<1x1x4x4xf32>
    %57 = vector.shape_cast %56 : vector<1x1x4x4xf32> to vector<4x4xf32>
    %cst_53 = arith.constant dense<0.000000e+00> : vector<4x256xf32>
    %58 = tpu.matmul %57, %55, %cst_53 {dimension_numbers = #tpu.dot_dimension_numbers<[1], [0], [0], [1], [0, 0, 1, 1], [], []>} : vector<4x4xf32>, vector<4x256xf32>, vector<4x256xf32> -> vector<4x256xf32>
    %59 = arith.addf %51, %58 : vector<4x256xf32>
    %c239_i32 = arith.constant 239 : i32
    %60 = tpu.dynamic_rotate %0 by %c239_i32 dim 1 : vector<4x256xf32>, i32 -> vector<4x256xf32>
    %c8 = arith.constant 8 : index
    %c0_54 = arith.constant 0 : index
    %c0_55 = arith.constant 0 : index
    %61 = vector.load %arg4[%c8, %c0_54, %c0_55] : memref<9x4x256xf32, #tpu.memory_space<vmem>>, vector<1x4x256xf32>
    %62 = vector.shape_cast %61 : vector<1x4x256xf32> to vector<4x256xf32>
    %63 = arith.mulf %60, %62 : vector<4x256xf32>
    %c0_56 = arith.constant 0 : index
    %c8_57 = arith.constant 8 : index
    %c0_58 = arith.constant 0 : index
    %c0_59 = arith.constant 0 : index
    %64 = vector.load %arg2[%c0_56, %c8_57, %c0_58, %c0_59] : memref<5x9x4x4xf32, #tpu.memory_space<vmem>>, vector<1x1x4x4xf32>
    %65 = vector.shape_cast %64 : vector<1x1x4x4xf32> to vector<4x4xf32>
    %cst_60 = arith.constant dense<0.000000e+00> : vector<4x256xf32>
    %66 = tpu.matmul %65, %63, %cst_60 {dimension_numbers = #tpu.dot_dimension_numbers<[1], [0], [0], [1], [0, 0, 1, 1], [], []>} : vector<4x4xf32>, vector<4x256xf32>, vector<4x256xf32> -> vector<4x256xf32>
    %67 = arith.addf %59, %66 : vector<4x256xf32>
    %c0_61 = arith.constant 0 : index
    %c0_62 = arith.constant 0 : index
    %c0_63 = arith.constant 0 : index
    %68 = vector.load %arg3[%c0_61, %c0_62, %c0_63] : memref<5x4x1xf32, #tpu.memory_space<vmem>>, vector<1x4x1xf32>
    %69 = vector.shape_cast %68 : vector<1x4x1xf32> to vector<4x1xf32>
    %70 = vector.broadcast %69 : vector<4x1xf32> to vector<4x256xf32>
    %71 = arith.addf %67, %70 : vector<4x256xf32>
    %cst_64 = arith.constant 0.000000e+00 : f32
    %72 = vector.broadcast %cst_64 : f32 to vector<4x256xf32>
    %73 = arith.cmpf ogt, %71, %72 : vector<4x256xf32>
    %cst_65 = arith.constant 0.000000e+00 : f32
    %74 = vector.broadcast %cst_65 : f32 to vector<4x256xf32>
    %75 = arith.minimumf %71, %74 : vector<4x256xf32>
    %76 = math.exp %75 : vector<4x256xf32>
    %cst_66 = arith.constant 1.000000e+00 : f32
    %77 = vector.broadcast %cst_66 : f32 to vector<4x256xf32>
    %78 = arith.subf %76, %77 : vector<4x256xf32>
    %79 = arith.select %73, %71, %78 : vector<4x256xi1>, vector<4x256xf32>
    %c17_i32_67 = arith.constant 17 : i32
    %80 = tpu.dynamic_rotate %79 by %c17_i32_67 dim 1 : vector<4x256xf32>, i32 -> vector<4x256xf32>
    %c0_68 = arith.constant 0 : index
    %c0_69 = arith.constant 0 : index
    %c0_70 = arith.constant 0 : index
    %81 = vector.load %arg4[%c0_68, %c0_69, %c0_70] : memref<9x4x256xf32, #tpu.memory_space<vmem>>, vector<1x4x256xf32>
    %82 = vector.shape_cast %81 : vector<1x4x256xf32> to vector<4x256xf32>
    %83 = arith.mulf %80, %82 : vector<4x256xf32>
    %c1_71 = arith.constant 1 : index
    %c0_72 = arith.constant 0 : index
    %c0_73 = arith.constant 0 : index
    %c0_74 = arith.constant 0 : index
    %84 = vector.load %arg2[%c1_71, %c0_72, %c0_73, %c0_74] : memref<5x9x4x4xf32, #tpu.memory_space<vmem>>, vector<1x1x4x4xf32>
    %85 = vector.shape_cast %84 : vector<1x1x4x4xf32> to vector<4x4xf32>
    %cst_75 = arith.constant dense<0.000000e+00> : vector<4x256xf32>
    %86 = tpu.matmul %85, %83, %cst_75 {dimension_numbers = #tpu.dot_dimension_numbers<[1], [0], [0], [1], [0, 0, 1, 1], [], []>} : vector<4x4xf32>, vector<4x256xf32>, vector<4x256xf32> -> vector<4x256xf32>
    %c16_i32_76 = arith.constant 16 : i32
    %87 = tpu.dynamic_rotate %79 by %c16_i32_76 dim 1 : vector<4x256xf32>, i32 -> vector<4x256xf32>
    %c1_77 = arith.constant 1 : index
    %c0_78 = arith.constant 0 : index
    %c0_79 = arith.constant 0 : index
    %88 = vector.load %arg4[%c1_77, %c0_78, %c0_79] : memref<9x4x256xf32, #tpu.memory_space<vmem>>, vector<1x4x256xf32>
    %89 = vector.shape_cast %88 : vector<1x4x256xf32> to vector<4x256xf32>
    %90 = arith.mulf %87, %89 : vector<4x256xf32>
    %c1_80 = arith.constant 1 : index
    %c1_81 = arith.constant 1 : index
    %c0_82 = arith.constant 0 : index
    %c0_83 = arith.constant 0 : index
    %91 = vector.load %arg2[%c1_80, %c1_81, %c0_82, %c0_83] : memref<5x9x4x4xf32, #tpu.memory_space<vmem>>, vector<1x1x4x4xf32>
    %92 = vector.shape_cast %91 : vector<1x1x4x4xf32> to vector<4x4xf32>
    %cst_84 = arith.constant dense<0.000000e+00> : vector<4x256xf32>
    %93 = tpu.matmul %92, %90, %cst_84 {dimension_numbers = #tpu.dot_dimension_numbers<[1], [0], [0], [1], [0, 0, 1, 1], [], []>} : vector<4x4xf32>, vector<4x256xf32>, vector<4x256xf32> -> vector<4x256xf32>
    %94 = arith.addf %86, %93 : vector<4x256xf32>
    %c15_i32_85 = arith.constant 15 : i32
    %95 = tpu.dynamic_rotate %79 by %c15_i32_85 dim 1 : vector<4x256xf32>, i32 -> vector<4x256xf32>
    %c2_86 = arith.constant 2 : index
    %c0_87 = arith.constant 0 : index
    %c0_88 = arith.constant 0 : index
    %96 = vector.load %arg4[%c2_86, %c0_87, %c0_88] : memref<9x4x256xf32, #tpu.memory_space<vmem>>, vector<1x4x256xf32>
    %97 = vector.shape_cast %96 : vector<1x4x256xf32> to vector<4x256xf32>
    %98 = arith.mulf %95, %97 : vector<4x256xf32>
    %c1_89 = arith.constant 1 : index
    %c2_90 = arith.constant 2 : index
    %c0_91 = arith.constant 0 : index
    %c0_92 = arith.constant 0 : index
    %99 = vector.load %arg2[%c1_89, %c2_90, %c0_91, %c0_92] : memref<5x9x4x4xf32, #tpu.memory_space<vmem>>, vector<1x1x4x4xf32>
    %100 = vector.shape_cast %99 : vector<1x1x4x4xf32> to vector<4x4xf32>
    %cst_93 = arith.constant dense<0.000000e+00> : vector<4x256xf32>
    %101 = tpu.matmul %100, %98, %cst_93 {dimension_numbers = #tpu.dot_dimension_numbers<[1], [0], [0], [1], [0, 0, 1, 1], [], []>} : vector<4x4xf32>, vector<4x256xf32>, vector<4x256xf32> -> vector<4x256xf32>
    %102 = arith.addf %94, %101 : vector<4x256xf32>
    %c1_i32_94 = arith.constant 1 : i32
    %103 = tpu.dynamic_rotate %79 by %c1_i32_94 dim 1 : vector<4x256xf32>, i32 -> vector<4x256xf32>
    %c3_95 = arith.constant 3 : index
    %c0_96 = arith.constant 0 : index
    %c0_97 = arith.constant 0 : index
    %104 = vector.load %arg4[%c3_95, %c0_96, %c0_97] : memref<9x4x256xf32, #tpu.memory_space<vmem>>, vector<1x4x256xf32>
    %105 = vector.shape_cast %104 : vector<1x4x256xf32> to vector<4x256xf32>
    %106 = arith.mulf %103, %105 : vector<4x256xf32>
    %c1_98 = arith.constant 1 : index
    %c3_99 = arith.constant 3 : index
    %c0_100 = arith.constant 0 : index
    %c0_101 = arith.constant 0 : index
    %107 = vector.load %arg2[%c1_98, %c3_99, %c0_100, %c0_101] : memref<5x9x4x4xf32, #tpu.memory_space<vmem>>, vector<1x1x4x4xf32>
    %108 = vector.shape_cast %107 : vector<1x1x4x4xf32> to vector<4x4xf32>
    %cst_102 = arith.constant dense<0.000000e+00> : vector<4x256xf32>
    %109 = tpu.matmul %108, %106, %cst_102 {dimension_numbers = #tpu.dot_dimension_numbers<[1], [0], [0], [1], [0, 0, 1, 1], [], []>} : vector<4x4xf32>, vector<4x256xf32>, vector<4x256xf32> -> vector<4x256xf32>
    %110 = arith.addf %102, %109 : vector<4x256xf32>
    %c1_103 = arith.constant 1 : index
    %c4_104 = arith.constant 4 : index
    %c0_105 = arith.constant 0 : index
    %c0_106 = arith.constant 0 : index
    %111 = vector.load %arg2[%c1_103, %c4_104, %c0_105, %c0_106] : memref<5x9x4x4xf32, #tpu.memory_space<vmem>>, vector<1x1x4x4xf32>
    %112 = vector.shape_cast %111 : vector<1x1x4x4xf32> to vector<4x4xf32>
    %cst_107 = arith.constant dense<0.000000e+00> : vector<4x256xf32>
    %113 = tpu.matmul %112, %79, %cst_107 {dimension_numbers = #tpu.dot_dimension_numbers<[1], [0], [0], [1], [0, 0, 1, 1], [], []>} : vector<4x4xf32>, vector<4x256xf32>, vector<4x256xf32> -> vector<4x256xf32>
    %114 = arith.addf %110, %113 : vector<4x256xf32>
    %c255_i32_108 = arith.constant 255 : i32
    %115 = tpu.dynamic_rotate %79 by %c255_i32_108 dim 1 : vector<4x256xf32>, i32 -> vector<4x256xf32>
    %c5_109 = arith.constant 5 : index
    %c0_110 = arith.constant 0 : index
    %c0_111 = arith.constant 0 : index
    %116 = vector.load %arg4[%c5_109, %c0_110, %c0_111] : memref<9x4x256xf32, #tpu.memory_space<vmem>>, vector<1x4x256xf32>
    %117 = vector.shape_cast %116 : vector<1x4x256xf32> to vector<4x256xf32>
    %118 = arith.mulf %115, %117 : vector<4x256xf32>
    %c1_112 = arith.constant 1 : index
    %c5_113 = arith.constant 5 : index
    %c0_114 = arith.constant 0 : index
    %c0_115 = arith.constant 0 : index
    %119 = vector.load %arg2[%c1_112, %c5_113, %c0_114, %c0_115] : memref<5x9x4x4xf32, #tpu.memory_space<vmem>>, vector<1x1x4x4xf32>
    %120 = vector.shape_cast %119 : vector<1x1x4x4xf32> to vector<4x4xf32>
    %cst_116 = arith.constant dense<0.000000e+00> : vector<4x256xf32>
    %121 = tpu.matmul %120, %118, %cst_116 {dimension_numbers = #tpu.dot_dimension_numbers<[1], [0], [0], [1], [0, 0, 1, 1], [], []>} : vector<4x4xf32>, vector<4x256xf32>, vector<4x256xf32> -> vector<4x256xf32>
    %122 = arith.addf %114, %121 : vector<4x256xf32>
    %c241_i32_117 = arith.constant 241 : i32
    %123 = tpu.dynamic_rotate %79 by %c241_i32_117 dim 1 : vector<4x256xf32>, i32 -> vector<4x256xf32>
    %c6_118 = arith.constant 6 : index
    %c0_119 = arith.constant 0 : index
    %c0_120 = arith.constant 0 : index
    %124 = vector.load %arg4[%c6_118, %c0_119, %c0_120] : memref<9x4x256xf32, #tpu.memory_space<vmem>>, vector<1x4x256xf32>
    %125 = vector.shape_cast %124 : vector<1x4x256xf32> to vector<4x256xf32>
    %126 = arith.mulf %123, %125 : vector<4x256xf32>
    %c1_121 = arith.constant 1 : index
    %c6_122 = arith.constant 6 : index
    %c0_123 = arith.constant 0 : index
    %c0_124 = arith.constant 0 : index
    %127 = vector.load %arg2[%c1_121, %c6_122, %c0_123, %c0_124] : memref<5x9x4x4xf32, #tpu.memory_space<vmem>>, vector<1x1x4x4xf32>
    %128 = vector.shape_cast %127 : vector<1x1x4x4xf32> to vector<4x4xf32>
    %cst_125 = arith.constant dense<0.000000e+00> : vector<4x256xf32>
    %129 = tpu.matmul %128, %126, %cst_125 {dimension_numbers = #tpu.dot_dimension_numbers<[1], [0], [0], [1], [0, 0, 1, 1], [], []>} : vector<4x4xf32>, vector<4x256xf32>, vector<4x256xf32> -> vector<4x256xf32>
    %130 = arith.addf %122, %129 : vector<4x256xf32>
    %c240_i32_126 = arith.constant 240 : i32
    %131 = tpu.dynamic_rotate %79 by %c240_i32_126 dim 1 : vector<4x256xf32>, i32 -> vector<4x256xf32>
    %c7_127 = arith.constant 7 : index
    %c0_128 = arith.constant 0 : index
    %c0_129 = arith.constant 0 : index
    %132 = vector.load %arg4[%c7_127, %c0_128, %c0_129] : memref<9x4x256xf32, #tpu.memory_space<vmem>>, vector<1x4x256xf32>
    %133 = vector.shape_cast %132 : vector<1x4x256xf32> to vector<4x256xf32>
    %134 = arith.mulf %131, %133 : vector<4x256xf32>
    %c1_130 = arith.constant 1 : index
    %c7_131 = arith.constant 7 : index
    %c0_132 = arith.constant 0 : index
    %c0_133 = arith.constant 0 : index
    %135 = vector.load %arg2[%c1_130, %c7_131, %c0_132, %c0_133] : memref<5x9x4x4xf32, #tpu.memory_space<vmem>>, vector<1x1x4x4xf32>
    %136 = vector.shape_cast %135 : vector<1x1x4x4xf32> to vector<4x4xf32>
    %cst_134 = arith.constant dense<0.000000e+00> : vector<4x256xf32>
    %137 = tpu.matmul %136, %134, %cst_134 {dimension_numbers = #tpu.dot_dimension_numbers<[1], [0], [0], [1], [0, 0, 1, 1], [], []>} : vector<4x4xf32>, vector<4x256xf32>, vector<4x256xf32> -> vector<4x256xf32>
    %138 = arith.addf %130, %137 : vector<4x256xf32>
    %c239_i32_135 = arith.constant 239 : i32
    %139 = tpu.dynamic_rotate %79 by %c239_i32_135 dim 1 : vector<4x256xf32>, i32 -> vector<4x256xf32>
    %c8_136 = arith.constant 8 : index
    %c0_137 = arith.constant 0 : index
    %c0_138 = arith.constant 0 : index
    %140 = vector.load %arg4[%c8_136, %c0_137, %c0_138] : memref<9x4x256xf32, #tpu.memory_space<vmem>>, vector<1x4x256xf32>
    %141 = vector.shape_cast %140 : vector<1x4x256xf32> to vector<4x256xf32>
    %142 = arith.mulf %139, %141 : vector<4x256xf32>
    %c1_139 = arith.constant 1 : index
    %c8_140 = arith.constant 8 : index
    %c0_141 = arith.constant 0 : index
    %c0_142 = arith.constant 0 : index
    %143 = vector.load %arg2[%c1_139, %c8_140, %c0_141, %c0_142] : memref<5x9x4x4xf32, #tpu.memory_space<vmem>>, vector<1x1x4x4xf32>
    %144 = vector.shape_cast %143 : vector<1x1x4x4xf32> to vector<4x4xf32>
    %cst_143 = arith.constant dense<0.000000e+00> : vector<4x256xf32>
    %145 = tpu.matmul %144, %142, %cst_143 {dimension_numbers = #tpu.dot_dimension_numbers<[1], [0], [0], [1], [0, 0, 1, 1], [], []>} : vector<4x4xf32>, vector<4x256xf32>, vector<4x256xf32> -> vector<4x256xf32>
    %146 = arith.addf %138, %145 : vector<4x256xf32>
    %c1_144 = arith.constant 1 : index
    %c0_145 = arith.constant 0 : index
    %c0_146 = arith.constant 0 : index
    %147 = vector.load %arg3[%c1_144, %c0_145, %c0_146] : memref<5x4x1xf32, #tpu.memory_space<vmem>>, vector<1x4x1xf32>
    %148 = vector.shape_cast %147 : vector<1x4x1xf32> to vector<4x1xf32>
    %149 = vector.broadcast %148 : vector<4x1xf32> to vector<4x256xf32>
    %150 = arith.addf %146, %149 : vector<4x256xf32>
    %cst_147 = arith.constant 0.000000e+00 : f32
    %151 = vector.broadcast %cst_147 : f32 to vector<4x256xf32>
    %152 = arith.cmpf ogt, %150, %151 : vector<4x256xf32>
    %cst_148 = arith.constant 0.000000e+00 : f32
    %153 = vector.broadcast %cst_148 : f32 to vector<4x256xf32>
    %154 = arith.minimumf %150, %153 : vector<4x256xf32>
    %155 = math.exp %154 : vector<4x256xf32>
    %cst_149 = arith.constant 1.000000e+00 : f32
    %156 = vector.broadcast %cst_149 : f32 to vector<4x256xf32>
    %157 = arith.subf %155, %156 : vector<4x256xf32>
    %158 = arith.select %152, %150, %157 : vector<4x256xi1>, vector<4x256xf32>
    %c17_i32_150 = arith.constant 17 : i32
    %159 = tpu.dynamic_rotate %158 by %c17_i32_150 dim 1 : vector<4x256xf32>, i32 -> vector<4x256xf32>
    %c0_151 = arith.constant 0 : index
    %c0_152 = arith.constant 0 : index
    %c0_153 = arith.constant 0 : index
    %160 = vector.load %arg4[%c0_151, %c0_152, %c0_153] : memref<9x4x256xf32, #tpu.memory_space<vmem>>, vector<1x4x256xf32>
    %161 = vector.shape_cast %160 : vector<1x4x256xf32> to vector<4x256xf32>
    %162 = arith.mulf %159, %161 : vector<4x256xf32>
    %c2_154 = arith.constant 2 : index
    %c0_155 = arith.constant 0 : index
    %c0_156 = arith.constant 0 : index
    %c0_157 = arith.constant 0 : index
    %163 = vector.load %arg2[%c2_154, %c0_155, %c0_156, %c0_157] : memref<5x9x4x4xf32, #tpu.memory_space<vmem>>, vector<1x1x4x4xf32>
    %164 = vector.shape_cast %163 : vector<1x1x4x4xf32> to vector<4x4xf32>
    %cst_158 = arith.constant dense<0.000000e+00> : vector<4x256xf32>
    %165 = tpu.matmul %164, %162, %cst_158 {dimension_numbers = #tpu.dot_dimension_numbers<[1], [0], [0], [1], [0, 0, 1, 1], [], []>} : vector<4x4xf32>, vector<4x256xf32>, vector<4x256xf32> -> vector<4x256xf32>
    %c16_i32_159 = arith.constant 16 : i32
    %166 = tpu.dynamic_rotate %158 by %c16_i32_159 dim 1 : vector<4x256xf32>, i32 -> vector<4x256xf32>
    %c1_160 = arith.constant 1 : index
    %c0_161 = arith.constant 0 : index
    %c0_162 = arith.constant 0 : index
    %167 = vector.load %arg4[%c1_160, %c0_161, %c0_162] : memref<9x4x256xf32, #tpu.memory_space<vmem>>, vector<1x4x256xf32>
    %168 = vector.shape_cast %167 : vector<1x4x256xf32> to vector<4x256xf32>
    %169 = arith.mulf %166, %168 : vector<4x256xf32>
    %c2_163 = arith.constant 2 : index
    %c1_164 = arith.constant 1 : index
    %c0_165 = arith.constant 0 : index
    %c0_166 = arith.constant 0 : index
    %170 = vector.load %arg2[%c2_163, %c1_164, %c0_165, %c0_166] : memref<5x9x4x4xf32, #tpu.memory_space<vmem>>, vector<1x1x4x4xf32>
    %171 = vector.shape_cast %170 : vector<1x1x4x4xf32> to vector<4x4xf32>
    %cst_167 = arith.constant dense<0.000000e+00> : vector<4x256xf32>
    %172 = tpu.matmul %171, %169, %cst_167 {dimension_numbers = #tpu.dot_dimension_numbers<[1], [0], [0], [1], [0, 0, 1, 1], [], []>} : vector<4x4xf32>, vector<4x256xf32>, vector<4x256xf32> -> vector<4x256xf32>
    %173 = arith.addf %165, %172 : vector<4x256xf32>
    %c15_i32_168 = arith.constant 15 : i32
    %174 = tpu.dynamic_rotate %158 by %c15_i32_168 dim 1 : vector<4x256xf32>, i32 -> vector<4x256xf32>
    %c2_169 = arith.constant 2 : index
    %c0_170 = arith.constant 0 : index
    %c0_171 = arith.constant 0 : index
    %175 = vector.load %arg4[%c2_169, %c0_170, %c0_171] : memref<9x4x256xf32, #tpu.memory_space<vmem>>, vector<1x4x256xf32>
    %176 = vector.shape_cast %175 : vector<1x4x256xf32> to vector<4x256xf32>
    %177 = arith.mulf %174, %176 : vector<4x256xf32>
    %c2_172 = arith.constant 2 : index
    %c2_173 = arith.constant 2 : index
    %c0_174 = arith.constant 0 : index
    %c0_175 = arith.constant 0 : index
    %178 = vector.load %arg2[%c2_172, %c2_173, %c0_174, %c0_175] : memref<5x9x4x4xf32, #tpu.memory_space<vmem>>, vector<1x1x4x4xf32>
    %179 = vector.shape_cast %178 : vector<1x1x4x4xf32> to vector<4x4xf32>
    %cst_176 = arith.constant dense<0.000000e+00> : vector<4x256xf32>
    %180 = tpu.matmul %179, %177, %cst_176 {dimension_numbers = #tpu.dot_dimension_numbers<[1], [0], [0], [1], [0, 0, 1, 1], [], []>} : vector<4x4xf32>, vector<4x256xf32>, vector<4x256xf32> -> vector<4x256xf32>
    %181 = arith.addf %173, %180 : vector<4x256xf32>
    %c1_i32_177 = arith.constant 1 : i32
    %182 = tpu.dynamic_rotate %158 by %c1_i32_177 dim 1 : vector<4x256xf32>, i32 -> vector<4x256xf32>
    %c3_178 = arith.constant 3 : index
    %c0_179 = arith.constant 0 : index
    %c0_180 = arith.constant 0 : index
    %183 = vector.load %arg4[%c3_178, %c0_179, %c0_180] : memref<9x4x256xf32, #tpu.memory_space<vmem>>, vector<1x4x256xf32>
    %184 = vector.shape_cast %183 : vector<1x4x256xf32> to vector<4x256xf32>
    %185 = arith.mulf %182, %184 : vector<4x256xf32>
    %c2_181 = arith.constant 2 : index
    %c3_182 = arith.constant 3 : index
    %c0_183 = arith.constant 0 : index
    %c0_184 = arith.constant 0 : index
    %186 = vector.load %arg2[%c2_181, %c3_182, %c0_183, %c0_184] : memref<5x9x4x4xf32, #tpu.memory_space<vmem>>, vector<1x1x4x4xf32>
    %187 = vector.shape_cast %186 : vector<1x1x4x4xf32> to vector<4x4xf32>
    %cst_185 = arith.constant dense<0.000000e+00> : vector<4x256xf32>
    %188 = tpu.matmul %187, %185, %cst_185 {dimension_numbers = #tpu.dot_dimension_numbers<[1], [0], [0], [1], [0, 0, 1, 1], [], []>} : vector<4x4xf32>, vector<4x256xf32>, vector<4x256xf32> -> vector<4x256xf32>
    %189 = arith.addf %181, %188 : vector<4x256xf32>
    %c2_186 = arith.constant 2 : index
    %c4_187 = arith.constant 4 : index
    %c0_188 = arith.constant 0 : index
    %c0_189 = arith.constant 0 : index
    %190 = vector.load %arg2[%c2_186, %c4_187, %c0_188, %c0_189] : memref<5x9x4x4xf32, #tpu.memory_space<vmem>>, vector<1x1x4x4xf32>
    %191 = vector.shape_cast %190 : vector<1x1x4x4xf32> to vector<4x4xf32>
    %cst_190 = arith.constant dense<0.000000e+00> : vector<4x256xf32>
    %192 = tpu.matmul %191, %158, %cst_190 {dimension_numbers = #tpu.dot_dimension_numbers<[1], [0], [0], [1], [0, 0, 1, 1], [], []>} : vector<4x4xf32>, vector<4x256xf32>, vector<4x256xf32> -> vector<4x256xf32>
    %193 = arith.addf %189, %192 : vector<4x256xf32>
    %c255_i32_191 = arith.constant 255 : i32
    %194 = tpu.dynamic_rotate %158 by %c255_i32_191 dim 1 : vector<4x256xf32>, i32 -> vector<4x256xf32>
    %c5_192 = arith.constant 5 : index
    %c0_193 = arith.constant 0 : index
    %c0_194 = arith.constant 0 : index
    %195 = vector.load %arg4[%c5_192, %c0_193, %c0_194] : memref<9x4x256xf32, #tpu.memory_space<vmem>>, vector<1x4x256xf32>
    %196 = vector.shape_cast %195 : vector<1x4x256xf32> to vector<4x256xf32>
    %197 = arith.mulf %194, %196 : vector<4x256xf32>
    %c2_195 = arith.constant 2 : index
    %c5_196 = arith.constant 5 : index
    %c0_197 = arith.constant 0 : index
    %c0_198 = arith.constant 0 : index
    %198 = vector.load %arg2[%c2_195, %c5_196, %c0_197, %c0_198] : memref<5x9x4x4xf32, #tpu.memory_space<vmem>>, vector<1x1x4x4xf32>
    %199 = vector.shape_cast %198 : vector<1x1x4x4xf32> to vector<4x4xf32>
    %cst_199 = arith.constant dense<0.000000e+00> : vector<4x256xf32>
    %200 = tpu.matmul %199, %197, %cst_199 {dimension_numbers = #tpu.dot_dimension_numbers<[1], [0], [0], [1], [0, 0, 1, 1], [], []>} : vector<4x4xf32>, vector<4x256xf32>, vector<4x256xf32> -> vector<4x256xf32>
    %201 = arith.addf %193, %200 : vector<4x256xf32>
    %c241_i32_200 = arith.constant 241 : i32
    %202 = tpu.dynamic_rotate %158 by %c241_i32_200 dim 1 : vector<4x256xf32>, i32 -> vector<4x256xf32>
    %c6_201 = arith.constant 6 : index
    %c0_202 = arith.constant 0 : index
    %c0_203 = arith.constant 0 : index
    %203 = vector.load %arg4[%c6_201, %c0_202, %c0_203] : memref<9x4x256xf32, #tpu.memory_space<vmem>>, vector<1x4x256xf32>
    %204 = vector.shape_cast %203 : vector<1x4x256xf32> to vector<4x256xf32>
    %205 = arith.mulf %202, %204 : vector<4x256xf32>
    %c2_204 = arith.constant 2 : index
    %c6_205 = arith.constant 6 : index
    %c0_206 = arith.constant 0 : index
    %c0_207 = arith.constant 0 : index
    %206 = vector.load %arg2[%c2_204, %c6_205, %c0_206, %c0_207] : memref<5x9x4x4xf32, #tpu.memory_space<vmem>>, vector<1x1x4x4xf32>
    %207 = vector.shape_cast %206 : vector<1x1x4x4xf32> to vector<4x4xf32>
    %cst_208 = arith.constant dense<0.000000e+00> : vector<4x256xf32>
    %208 = tpu.matmul %207, %205, %cst_208 {dimension_numbers = #tpu.dot_dimension_numbers<[1], [0], [0], [1], [0, 0, 1, 1], [], []>} : vector<4x4xf32>, vector<4x256xf32>, vector<4x256xf32> -> vector<4x256xf32>
    %209 = arith.addf %201, %208 : vector<4x256xf32>
    %c240_i32_209 = arith.constant 240 : i32
    %210 = tpu.dynamic_rotate %158 by %c240_i32_209 dim 1 : vector<4x256xf32>, i32 -> vector<4x256xf32>
    %c7_210 = arith.constant 7 : index
    %c0_211 = arith.constant 0 : index
    %c0_212 = arith.constant 0 : index
    %211 = vector.load %arg4[%c7_210, %c0_211, %c0_212] : memref<9x4x256xf32, #tpu.memory_space<vmem>>, vector<1x4x256xf32>
    %212 = vector.shape_cast %211 : vector<1x4x256xf32> to vector<4x256xf32>
    %213 = arith.mulf %210, %212 : vector<4x256xf32>
    %c2_213 = arith.constant 2 : index
    %c7_214 = arith.constant 7 : index
    %c0_215 = arith.constant 0 : index
    %c0_216 = arith.constant 0 : index
    %214 = vector.load %arg2[%c2_213, %c7_214, %c0_215, %c0_216] : memref<5x9x4x4xf32, #tpu.memory_space<vmem>>, vector<1x1x4x4xf32>
    %215 = vector.shape_cast %214 : vector<1x1x4x4xf32> to vector<4x4xf32>
    %cst_217 = arith.constant dense<0.000000e+00> : vector<4x256xf32>
    %216 = tpu.matmul %215, %213, %cst_217 {dimension_numbers = #tpu.dot_dimension_numbers<[1], [0], [0], [1], [0, 0, 1, 1], [], []>} : vector<4x4xf32>, vector<4x256xf32>, vector<4x256xf32> -> vector<4x256xf32>
    %217 = arith.addf %209, %216 : vector<4x256xf32>
    %c239_i32_218 = arith.constant 239 : i32
    %218 = tpu.dynamic_rotate %158 by %c239_i32_218 dim 1 : vector<4x256xf32>, i32 -> vector<4x256xf32>
    %c8_219 = arith.constant 8 : index
    %c0_220 = arith.constant 0 : index
    %c0_221 = arith.constant 0 : index
    %219 = vector.load %arg4[%c8_219, %c0_220, %c0_221] : memref<9x4x256xf32, #tpu.memory_space<vmem>>, vector<1x4x256xf32>
    %220 = vector.shape_cast %219 : vector<1x4x256xf32> to vector<4x256xf32>
    %221 = arith.mulf %218, %220 : vector<4x256xf32>
    %c2_222 = arith.constant 2 : index
    %c8_223 = arith.constant 8 : index
    %c0_224 = arith.constant 0 : index
    %c0_225 = arith.constant 0 : index
    %222 = vector.load %arg2[%c2_222, %c8_223, %c0_224, %c0_225] : memref<5x9x4x4xf32, #tpu.memory_space<vmem>>, vector<1x1x4x4xf32>
    %223 = vector.shape_cast %222 : vector<1x1x4x4xf32> to vector<4x4xf32>
    %cst_226 = arith.constant dense<0.000000e+00> : vector<4x256xf32>
    %224 = tpu.matmul %223, %221, %cst_226 {dimension_numbers = #tpu.dot_dimension_numbers<[1], [0], [0], [1], [0, 0, 1, 1], [], []>} : vector<4x4xf32>, vector<4x256xf32>, vector<4x256xf32> -> vector<4x256xf32>
    %225 = arith.addf %217, %224 : vector<4x256xf32>
    %c2_227 = arith.constant 2 : index
    %c0_228 = arith.constant 0 : index
    %c0_229 = arith.constant 0 : index
    %226 = vector.load %arg3[%c2_227, %c0_228, %c0_229] : memref<5x4x1xf32, #tpu.memory_space<vmem>>, vector<1x4x1xf32>
    %227 = vector.shape_cast %226 : vector<1x4x1xf32> to vector<4x1xf32>
    %228 = vector.broadcast %227 : vector<4x1xf32> to vector<4x256xf32>
    %229 = arith.addf %225, %228 : vector<4x256xf32>
    %cst_230 = arith.constant 0.000000e+00 : f32
    %230 = vector.broadcast %cst_230 : f32 to vector<4x256xf32>
    %231 = arith.cmpf ogt, %229, %230 : vector<4x256xf32>
    %cst_231 = arith.constant 0.000000e+00 : f32
    %232 = vector.broadcast %cst_231 : f32 to vector<4x256xf32>
    %233 = arith.minimumf %229, %232 : vector<4x256xf32>
    %234 = math.exp %233 : vector<4x256xf32>
    %cst_232 = arith.constant 1.000000e+00 : f32
    %235 = vector.broadcast %cst_232 : f32 to vector<4x256xf32>
    %236 = arith.subf %234, %235 : vector<4x256xf32>
    %237 = arith.select %231, %229, %236 : vector<4x256xi1>, vector<4x256xf32>
    %c17_i32_233 = arith.constant 17 : i32
    %238 = tpu.dynamic_rotate %237 by %c17_i32_233 dim 1 : vector<4x256xf32>, i32 -> vector<4x256xf32>
    %c0_234 = arith.constant 0 : index
    %c0_235 = arith.constant 0 : index
    %c0_236 = arith.constant 0 : index
    %239 = vector.load %arg4[%c0_234, %c0_235, %c0_236] : memref<9x4x256xf32, #tpu.memory_space<vmem>>, vector<1x4x256xf32>
    %240 = vector.shape_cast %239 : vector<1x4x256xf32> to vector<4x256xf32>
    %241 = arith.mulf %238, %240 : vector<4x256xf32>
    %c3_237 = arith.constant 3 : index
    %c0_238 = arith.constant 0 : index
    %c0_239 = arith.constant 0 : index
    %c0_240 = arith.constant 0 : index
    %242 = vector.load %arg2[%c3_237, %c0_238, %c0_239, %c0_240] : memref<5x9x4x4xf32, #tpu.memory_space<vmem>>, vector<1x1x4x4xf32>
    %243 = vector.shape_cast %242 : vector<1x1x4x4xf32> to vector<4x4xf32>
    %cst_241 = arith.constant dense<0.000000e+00> : vector<4x256xf32>
    %244 = tpu.matmul %243, %241, %cst_241 {dimension_numbers = #tpu.dot_dimension_numbers<[1], [0], [0], [1], [0, 0, 1, 1], [], []>} : vector<4x4xf32>, vector<4x256xf32>, vector<4x256xf32> -> vector<4x256xf32>
    %c16_i32_242 = arith.constant 16 : i32
    %245 = tpu.dynamic_rotate %237 by %c16_i32_242 dim 1 : vector<4x256xf32>, i32 -> vector<4x256xf32>
    %c1_243 = arith.constant 1 : index
    %c0_244 = arith.constant 0 : index
    %c0_245 = arith.constant 0 : index
    %246 = vector.load %arg4[%c1_243, %c0_244, %c0_245] : memref<9x4x256xf32, #tpu.memory_space<vmem>>, vector<1x4x256xf32>
    %247 = vector.shape_cast %246 : vector<1x4x256xf32> to vector<4x256xf32>
    %248 = arith.mulf %245, %247 : vector<4x256xf32>
    %c3_246 = arith.constant 3 : index
    %c1_247 = arith.constant 1 : index
    %c0_248 = arith.constant 0 : index
    %c0_249 = arith.constant 0 : index
    %249 = vector.load %arg2[%c3_246, %c1_247, %c0_248, %c0_249] : memref<5x9x4x4xf32, #tpu.memory_space<vmem>>, vector<1x1x4x4xf32>
    %250 = vector.shape_cast %249 : vector<1x1x4x4xf32> to vector<4x4xf32>
    %cst_250 = arith.constant dense<0.000000e+00> : vector<4x256xf32>
    %251 = tpu.matmul %250, %248, %cst_250 {dimension_numbers = #tpu.dot_dimension_numbers<[1], [0], [0], [1], [0, 0, 1, 1], [], []>} : vector<4x4xf32>, vector<4x256xf32>, vector<4x256xf32> -> vector<4x256xf32>
    %252 = arith.addf %244, %251 : vector<4x256xf32>
    %c15_i32_251 = arith.constant 15 : i32
    %253 = tpu.dynamic_rotate %237 by %c15_i32_251 dim 1 : vector<4x256xf32>, i32 -> vector<4x256xf32>
    %c2_252 = arith.constant 2 : index
    %c0_253 = arith.constant 0 : index
    %c0_254 = arith.constant 0 : index
    %254 = vector.load %arg4[%c2_252, %c0_253, %c0_254] : memref<9x4x256xf32, #tpu.memory_space<vmem>>, vector<1x4x256xf32>
    %255 = vector.shape_cast %254 : vector<1x4x256xf32> to vector<4x256xf32>
    %256 = arith.mulf %253, %255 : vector<4x256xf32>
    %c3_255 = arith.constant 3 : index
    %c2_256 = arith.constant 2 : index
    %c0_257 = arith.constant 0 : index
    %c0_258 = arith.constant 0 : index
    %257 = vector.load %arg2[%c3_255, %c2_256, %c0_257, %c0_258] : memref<5x9x4x4xf32, #tpu.memory_space<vmem>>, vector<1x1x4x4xf32>
    %258 = vector.shape_cast %257 : vector<1x1x4x4xf32> to vector<4x4xf32>
    %cst_259 = arith.constant dense<0.000000e+00> : vector<4x256xf32>
    %259 = tpu.matmul %258, %256, %cst_259 {dimension_numbers = #tpu.dot_dimension_numbers<[1], [0], [0], [1], [0, 0, 1, 1], [], []>} : vector<4x4xf32>, vector<4x256xf32>, vector<4x256xf32> -> vector<4x256xf32>
    %260 = arith.addf %252, %259 : vector<4x256xf32>
    %c1_i32_260 = arith.constant 1 : i32
    %261 = tpu.dynamic_rotate %237 by %c1_i32_260 dim 1 : vector<4x256xf32>, i32 -> vector<4x256xf32>
    %c3_261 = arith.constant 3 : index
    %c0_262 = arith.constant 0 : index
    %c0_263 = arith.constant 0 : index
    %262 = vector.load %arg4[%c3_261, %c0_262, %c0_263] : memref<9x4x256xf32, #tpu.memory_space<vmem>>, vector<1x4x256xf32>
    %263 = vector.shape_cast %262 : vector<1x4x256xf32> to vector<4x256xf32>
    %264 = arith.mulf %261, %263 : vector<4x256xf32>
    %c3_264 = arith.constant 3 : index
    %c3_265 = arith.constant 3 : index
    %c0_266 = arith.constant 0 : index
    %c0_267 = arith.constant 0 : index
    %265 = vector.load %arg2[%c3_264, %c3_265, %c0_266, %c0_267] : memref<5x9x4x4xf32, #tpu.memory_space<vmem>>, vector<1x1x4x4xf32>
    %266 = vector.shape_cast %265 : vector<1x1x4x4xf32> to vector<4x4xf32>
    %cst_268 = arith.constant dense<0.000000e+00> : vector<4x256xf32>
    %267 = tpu.matmul %266, %264, %cst_268 {dimension_numbers = #tpu.dot_dimension_numbers<[1], [0], [0], [1], [0, 0, 1, 1], [], []>} : vector<4x4xf32>, vector<4x256xf32>, vector<4x256xf32> -> vector<4x256xf32>
    %268 = arith.addf %260, %267 : vector<4x256xf32>
    %c3_269 = arith.constant 3 : index
    %c4_270 = arith.constant 4 : index
    %c0_271 = arith.constant 0 : index
    %c0_272 = arith.constant 0 : index
    %269 = vector.load %arg2[%c3_269, %c4_270, %c0_271, %c0_272] : memref<5x9x4x4xf32, #tpu.memory_space<vmem>>, vector<1x1x4x4xf32>
    %270 = vector.shape_cast %269 : vector<1x1x4x4xf32> to vector<4x4xf32>
    %cst_273 = arith.constant dense<0.000000e+00> : vector<4x256xf32>
    %271 = tpu.matmul %270, %237, %cst_273 {dimension_numbers = #tpu.dot_dimension_numbers<[1], [0], [0], [1], [0, 0, 1, 1], [], []>} : vector<4x4xf32>, vector<4x256xf32>, vector<4x256xf32> -> vector<4x256xf32>
    %272 = arith.addf %268, %271 : vector<4x256xf32>
    %c255_i32_274 = arith.constant 255 : i32
    %273 = tpu.dynamic_rotate %237 by %c255_i32_274 dim 1 : vector<4x256xf32>, i32 -> vector<4x256xf32>
    %c5_275 = arith.constant 5 : index
    %c0_276 = arith.constant 0 : index
    %c0_277 = arith.constant 0 : index
    %274 = vector.load %arg4[%c5_275, %c0_276, %c0_277] : memref<9x4x256xf32, #tpu.memory_space<vmem>>, vector<1x4x256xf32>
    %275 = vector.shape_cast %274 : vector<1x4x256xf32> to vector<4x256xf32>
    %276 = arith.mulf %273, %275 : vector<4x256xf32>
    %c3_278 = arith.constant 3 : index
    %c5_279 = arith.constant 5 : index
    %c0_280 = arith.constant 0 : index
    %c0_281 = arith.constant 0 : index
    %277 = vector.load %arg2[%c3_278, %c5_279, %c0_280, %c0_281] : memref<5x9x4x4xf32, #tpu.memory_space<vmem>>, vector<1x1x4x4xf32>
    %278 = vector.shape_cast %277 : vector<1x1x4x4xf32> to vector<4x4xf32>
    %cst_282 = arith.constant dense<0.000000e+00> : vector<4x256xf32>
    %279 = tpu.matmul %278, %276, %cst_282 {dimension_numbers = #tpu.dot_dimension_numbers<[1], [0], [0], [1], [0, 0, 1, 1], [], []>} : vector<4x4xf32>, vector<4x256xf32>, vector<4x256xf32> -> vector<4x256xf32>
    %280 = arith.addf %272, %279 : vector<4x256xf32>
    %c241_i32_283 = arith.constant 241 : i32
    %281 = tpu.dynamic_rotate %237 by %c241_i32_283 dim 1 : vector<4x256xf32>, i32 -> vector<4x256xf32>
    %c6_284 = arith.constant 6 : index
    %c0_285 = arith.constant 0 : index
    %c0_286 = arith.constant 0 : index
    %282 = vector.load %arg4[%c6_284, %c0_285, %c0_286] : memref<9x4x256xf32, #tpu.memory_space<vmem>>, vector<1x4x256xf32>
    %283 = vector.shape_cast %282 : vector<1x4x256xf32> to vector<4x256xf32>
    %284 = arith.mulf %281, %283 : vector<4x256xf32>
    %c3_287 = arith.constant 3 : index
    %c6_288 = arith.constant 6 : index
    %c0_289 = arith.constant 0 : index
    %c0_290 = arith.constant 0 : index
    %285 = vector.load %arg2[%c3_287, %c6_288, %c0_289, %c0_290] : memref<5x9x4x4xf32, #tpu.memory_space<vmem>>, vector<1x1x4x4xf32>
    %286 = vector.shape_cast %285 : vector<1x1x4x4xf32> to vector<4x4xf32>
    %cst_291 = arith.constant dense<0.000000e+00> : vector<4x256xf32>
    %287 = tpu.matmul %286, %284, %cst_291 {dimension_numbers = #tpu.dot_dimension_numbers<[1], [0], [0], [1], [0, 0, 1, 1], [], []>} : vector<4x4xf32>, vector<4x256xf32>, vector<4x256xf32> -> vector<4x256xf32>
    %288 = arith.addf %280, %287 : vector<4x256xf32>
    %c240_i32_292 = arith.constant 240 : i32
    %289 = tpu.dynamic_rotate %237 by %c240_i32_292 dim 1 : vector<4x256xf32>, i32 -> vector<4x256xf32>
    %c7_293 = arith.constant 7 : index
    %c0_294 = arith.constant 0 : index
    %c0_295 = arith.constant 0 : index
    %290 = vector.load %arg4[%c7_293, %c0_294, %c0_295] : memref<9x4x256xf32, #tpu.memory_space<vmem>>, vector<1x4x256xf32>
    %291 = vector.shape_cast %290 : vector<1x4x256xf32> to vector<4x256xf32>
    %292 = arith.mulf %289, %291 : vector<4x256xf32>
    %c3_296 = arith.constant 3 : index
    %c7_297 = arith.constant 7 : index
    %c0_298 = arith.constant 0 : index
    %c0_299 = arith.constant 0 : index
    %293 = vector.load %arg2[%c3_296, %c7_297, %c0_298, %c0_299] : memref<5x9x4x4xf32, #tpu.memory_space<vmem>>, vector<1x1x4x4xf32>
    %294 = vector.shape_cast %293 : vector<1x1x4x4xf32> to vector<4x4xf32>
    %cst_300 = arith.constant dense<0.000000e+00> : vector<4x256xf32>
    %295 = tpu.matmul %294, %292, %cst_300 {dimension_numbers = #tpu.dot_dimension_numbers<[1], [0], [0], [1], [0, 0, 1, 1], [], []>} : vector<4x4xf32>, vector<4x256xf32>, vector<4x256xf32> -> vector<4x256xf32>
    %296 = arith.addf %288, %295 : vector<4x256xf32>
    %c239_i32_301 = arith.constant 239 : i32
    %297 = tpu.dynamic_rotate %237 by %c239_i32_301 dim 1 : vector<4x256xf32>, i32 -> vector<4x256xf32>
    %c8_302 = arith.constant 8 : index
    %c0_303 = arith.constant 0 : index
    %c0_304 = arith.constant 0 : index
    %298 = vector.load %arg4[%c8_302, %c0_303, %c0_304] : memref<9x4x256xf32, #tpu.memory_space<vmem>>, vector<1x4x256xf32>
    %299 = vector.shape_cast %298 : vector<1x4x256xf32> to vector<4x256xf32>
    %300 = arith.mulf %297, %299 : vector<4x256xf32>
    %c3_305 = arith.constant 3 : index
    %c8_306 = arith.constant 8 : index
    %c0_307 = arith.constant 0 : index
    %c0_308 = arith.constant 0 : index
    %301 = vector.load %arg2[%c3_305, %c8_306, %c0_307, %c0_308] : memref<5x9x4x4xf32, #tpu.memory_space<vmem>>, vector<1x1x4x4xf32>
    %302 = vector.shape_cast %301 : vector<1x1x4x4xf32> to vector<4x4xf32>
    %cst_309 = arith.constant dense<0.000000e+00> : vector<4x256xf32>
    %303 = tpu.matmul %302, %300, %cst_309 {dimension_numbers = #tpu.dot_dimension_numbers<[1], [0], [0], [1], [0, 0, 1, 1], [], []>} : vector<4x4xf32>, vector<4x256xf32>, vector<4x256xf32> -> vector<4x256xf32>
    %304 = arith.addf %296, %303 : vector<4x256xf32>
    %c3_310 = arith.constant 3 : index
    %c0_311 = arith.constant 0 : index
    %c0_312 = arith.constant 0 : index
    %305 = vector.load %arg3[%c3_310, %c0_311, %c0_312] : memref<5x4x1xf32, #tpu.memory_space<vmem>>, vector<1x4x1xf32>
    %306 = vector.shape_cast %305 : vector<1x4x1xf32> to vector<4x1xf32>
    %307 = vector.broadcast %306 : vector<4x1xf32> to vector<4x256xf32>
    %308 = arith.addf %304, %307 : vector<4x256xf32>
    %cst_313 = arith.constant 0.000000e+00 : f32
    %309 = vector.broadcast %cst_313 : f32 to vector<4x256xf32>
    %310 = arith.cmpf ogt, %308, %309 : vector<4x256xf32>
    %cst_314 = arith.constant 0.000000e+00 : f32
    %311 = vector.broadcast %cst_314 : f32 to vector<4x256xf32>
    %312 = arith.minimumf %308, %311 : vector<4x256xf32>
    %313 = math.exp %312 : vector<4x256xf32>
    %cst_315 = arith.constant 1.000000e+00 : f32
    %314 = vector.broadcast %cst_315 : f32 to vector<4x256xf32>
    %315 = arith.subf %313, %314 : vector<4x256xf32>
    %316 = arith.select %310, %308, %315 : vector<4x256xi1>, vector<4x256xf32>
    %c17_i32_316 = arith.constant 17 : i32
    %317 = tpu.dynamic_rotate %316 by %c17_i32_316 dim 1 : vector<4x256xf32>, i32 -> vector<4x256xf32>
    %c0_317 = arith.constant 0 : index
    %c0_318 = arith.constant 0 : index
    %c0_319 = arith.constant 0 : index
    %318 = vector.load %arg4[%c0_317, %c0_318, %c0_319] : memref<9x4x256xf32, #tpu.memory_space<vmem>>, vector<1x4x256xf32>
    %319 = vector.shape_cast %318 : vector<1x4x256xf32> to vector<4x256xf32>
    %320 = arith.mulf %317, %319 : vector<4x256xf32>
    %c4_320 = arith.constant 4 : index
    %c0_321 = arith.constant 0 : index
    %c0_322 = arith.constant 0 : index
    %c0_323 = arith.constant 0 : index
    %321 = vector.load %arg2[%c4_320, %c0_321, %c0_322, %c0_323] : memref<5x9x4x4xf32, #tpu.memory_space<vmem>>, vector<1x1x4x4xf32>
    %322 = vector.shape_cast %321 : vector<1x1x4x4xf32> to vector<4x4xf32>
    %cst_324 = arith.constant dense<0.000000e+00> : vector<4x256xf32>
    %323 = tpu.matmul %322, %320, %cst_324 {dimension_numbers = #tpu.dot_dimension_numbers<[1], [0], [0], [1], [0, 0, 1, 1], [], []>} : vector<4x4xf32>, vector<4x256xf32>, vector<4x256xf32> -> vector<4x256xf32>
    %c16_i32_325 = arith.constant 16 : i32
    %324 = tpu.dynamic_rotate %316 by %c16_i32_325 dim 1 : vector<4x256xf32>, i32 -> vector<4x256xf32>
    %c1_326 = arith.constant 1 : index
    %c0_327 = arith.constant 0 : index
    %c0_328 = arith.constant 0 : index
    %325 = vector.load %arg4[%c1_326, %c0_327, %c0_328] : memref<9x4x256xf32, #tpu.memory_space<vmem>>, vector<1x4x256xf32>
    %326 = vector.shape_cast %325 : vector<1x4x256xf32> to vector<4x256xf32>
    %327 = arith.mulf %324, %326 : vector<4x256xf32>
    %c4_329 = arith.constant 4 : index
    %c1_330 = arith.constant 1 : index
    %c0_331 = arith.constant 0 : index
    %c0_332 = arith.constant 0 : index
    %328 = vector.load %arg2[%c4_329, %c1_330, %c0_331, %c0_332] : memref<5x9x4x4xf32, #tpu.memory_space<vmem>>, vector<1x1x4x4xf32>
    %329 = vector.shape_cast %328 : vector<1x1x4x4xf32> to vector<4x4xf32>
    %cst_333 = arith.constant dense<0.000000e+00> : vector<4x256xf32>
    %330 = tpu.matmul %329, %327, %cst_333 {dimension_numbers = #tpu.dot_dimension_numbers<[1], [0], [0], [1], [0, 0, 1, 1], [], []>} : vector<4x4xf32>, vector<4x256xf32>, vector<4x256xf32> -> vector<4x256xf32>
    %331 = arith.addf %323, %330 : vector<4x256xf32>
    %c15_i32_334 = arith.constant 15 : i32
    %332 = tpu.dynamic_rotate %316 by %c15_i32_334 dim 1 : vector<4x256xf32>, i32 -> vector<4x256xf32>
    %c2_335 = arith.constant 2 : index
    %c0_336 = arith.constant 0 : index
    %c0_337 = arith.constant 0 : index
    %333 = vector.load %arg4[%c2_335, %c0_336, %c0_337] : memref<9x4x256xf32, #tpu.memory_space<vmem>>, vector<1x4x256xf32>
    %334 = vector.shape_cast %333 : vector<1x4x256xf32> to vector<4x256xf32>
    %335 = arith.mulf %332, %334 : vector<4x256xf32>
    %c4_338 = arith.constant 4 : index
    %c2_339 = arith.constant 2 : index
    %c0_340 = arith.constant 0 : index
    %c0_341 = arith.constant 0 : index
    %336 = vector.load %arg2[%c4_338, %c2_339, %c0_340, %c0_341] : memref<5x9x4x4xf32, #tpu.memory_space<vmem>>, vector<1x1x4x4xf32>
    %337 = vector.shape_cast %336 : vector<1x1x4x4xf32> to vector<4x4xf32>
    %cst_342 = arith.constant dense<0.000000e+00> : vector<4x256xf32>
    %338 = tpu.matmul %337, %335, %cst_342 {dimension_numbers = #tpu.dot_dimension_numbers<[1], [0], [0], [1], [0, 0, 1, 1], [], []>} : vector<4x4xf32>, vector<4x256xf32>, vector<4x256xf32> -> vector<4x256xf32>
    %339 = arith.addf %331, %338 : vector<4x256xf32>
    %c1_i32_343 = arith.constant 1 : i32
    %340 = tpu.dynamic_rotate %316 by %c1_i32_343 dim 1 : vector<4x256xf32>, i32 -> vector<4x256xf32>
    %c3_344 = arith.constant 3 : index
    %c0_345 = arith.constant 0 : index
    %c0_346 = arith.constant 0 : index
    %341 = vector.load %arg4[%c3_344, %c0_345, %c0_346] : memref<9x4x256xf32, #tpu.memory_space<vmem>>, vector<1x4x256xf32>
    %342 = vector.shape_cast %341 : vector<1x4x256xf32> to vector<4x256xf32>
    %343 = arith.mulf %340, %342 : vector<4x256xf32>
    %c4_347 = arith.constant 4 : index
    %c3_348 = arith.constant 3 : index
    %c0_349 = arith.constant 0 : index
    %c0_350 = arith.constant 0 : index
    %344 = vector.load %arg2[%c4_347, %c3_348, %c0_349, %c0_350] : memref<5x9x4x4xf32, #tpu.memory_space<vmem>>, vector<1x1x4x4xf32>
    %345 = vector.shape_cast %344 : vector<1x1x4x4xf32> to vector<4x4xf32>
    %cst_351 = arith.constant dense<0.000000e+00> : vector<4x256xf32>
    %346 = tpu.matmul %345, %343, %cst_351 {dimension_numbers = #tpu.dot_dimension_numbers<[1], [0], [0], [1], [0, 0, 1, 1], [], []>} : vector<4x4xf32>, vector<4x256xf32>, vector<4x256xf32> -> vector<4x256xf32>
    %347 = arith.addf %339, %346 : vector<4x256xf32>
    %c4_352 = arith.constant 4 : index
    %c4_353 = arith.constant 4 : index
    %c0_354 = arith.constant 0 : index
    %c0_355 = arith.constant 0 : index
    %348 = vector.load %arg2[%c4_352, %c4_353, %c0_354, %c0_355] : memref<5x9x4x4xf32, #tpu.memory_space<vmem>>, vector<1x1x4x4xf32>
    %349 = vector.shape_cast %348 : vector<1x1x4x4xf32> to vector<4x4xf32>
    %cst_356 = arith.constant dense<0.000000e+00> : vector<4x256xf32>
    %350 = tpu.matmul %349, %316, %cst_356 {dimension_numbers = #tpu.dot_dimension_numbers<[1], [0], [0], [1], [0, 0, 1, 1], [], []>} : vector<4x4xf32>, vector<4x256xf32>, vector<4x256xf32> -> vector<4x256xf32>
    %351 = arith.addf %347, %350 : vector<4x256xf32>
    %c255_i32_357 = arith.constant 255 : i32
    %352 = tpu.dynamic_rotate %316 by %c255_i32_357 dim 1 : vector<4x256xf32>, i32 -> vector<4x256xf32>
    %c5_358 = arith.constant 5 : index
    %c0_359 = arith.constant 0 : index
    %c0_360 = arith.constant 0 : index
    %353 = vector.load %arg4[%c5_358, %c0_359, %c0_360] : memref<9x4x256xf32, #tpu.memory_space<vmem>>, vector<1x4x256xf32>
    %354 = vector.shape_cast %353 : vector<1x4x256xf32> to vector<4x256xf32>
    %355 = arith.mulf %352, %354 : vector<4x256xf32>
    %c4_361 = arith.constant 4 : index
    %c5_362 = arith.constant 5 : index
    %c0_363 = arith.constant 0 : index
    %c0_364 = arith.constant 0 : index
    %356 = vector.load %arg2[%c4_361, %c5_362, %c0_363, %c0_364] : memref<5x9x4x4xf32, #tpu.memory_space<vmem>>, vector<1x1x4x4xf32>
    %357 = vector.shape_cast %356 : vector<1x1x4x4xf32> to vector<4x4xf32>
    %cst_365 = arith.constant dense<0.000000e+00> : vector<4x256xf32>
    %358 = tpu.matmul %357, %355, %cst_365 {dimension_numbers = #tpu.dot_dimension_numbers<[1], [0], [0], [1], [0, 0, 1, 1], [], []>} : vector<4x4xf32>, vector<4x256xf32>, vector<4x256xf32> -> vector<4x256xf32>
    %359 = arith.addf %351, %358 : vector<4x256xf32>
    %c241_i32_366 = arith.constant 241 : i32
    %360 = tpu.dynamic_rotate %316 by %c241_i32_366 dim 1 : vector<4x256xf32>, i32 -> vector<4x256xf32>
    %c6_367 = arith.constant 6 : index
    %c0_368 = arith.constant 0 : index
    %c0_369 = arith.constant 0 : index
    %361 = vector.load %arg4[%c6_367, %c0_368, %c0_369] : memref<9x4x256xf32, #tpu.memory_space<vmem>>, vector<1x4x256xf32>
    %362 = vector.shape_cast %361 : vector<1x4x256xf32> to vector<4x256xf32>
    %363 = arith.mulf %360, %362 : vector<4x256xf32>
    %c4_370 = arith.constant 4 : index
    %c6_371 = arith.constant 6 : index
    %c0_372 = arith.constant 0 : index
    %c0_373 = arith.constant 0 : index
    %364 = vector.load %arg2[%c4_370, %c6_371, %c0_372, %c0_373] : memref<5x9x4x4xf32, #tpu.memory_space<vmem>>, vector<1x1x4x4xf32>
    %365 = vector.shape_cast %364 : vector<1x1x4x4xf32> to vector<4x4xf32>
    %cst_374 = arith.constant dense<0.000000e+00> : vector<4x256xf32>
    %366 = tpu.matmul %365, %363, %cst_374 {dimension_numbers = #tpu.dot_dimension_numbers<[1], [0], [0], [1], [0, 0, 1, 1], [], []>} : vector<4x4xf32>, vector<4x256xf32>, vector<4x256xf32> -> vector<4x256xf32>
    %367 = arith.addf %359, %366 : vector<4x256xf32>
    %c240_i32_375 = arith.constant 240 : i32
    %368 = tpu.dynamic_rotate %316 by %c240_i32_375 dim 1 : vector<4x256xf32>, i32 -> vector<4x256xf32>
    %c7_376 = arith.constant 7 : index
    %c0_377 = arith.constant 0 : index
    %c0_378 = arith.constant 0 : index
    %369 = vector.load %arg4[%c7_376, %c0_377, %c0_378] : memref<9x4x256xf32, #tpu.memory_space<vmem>>, vector<1x4x256xf32>
    %370 = vector.shape_cast %369 : vector<1x4x256xf32> to vector<4x256xf32>
    %371 = arith.mulf %368, %370 : vector<4x256xf32>
    %c4_379 = arith.constant 4 : index
    %c7_380 = arith.constant 7 : index
    %c0_381 = arith.constant 0 : index
    %c0_382 = arith.constant 0 : index
    %372 = vector.load %arg2[%c4_379, %c7_380, %c0_381, %c0_382] : memref<5x9x4x4xf32, #tpu.memory_space<vmem>>, vector<1x1x4x4xf32>
    %373 = vector.shape_cast %372 : vector<1x1x4x4xf32> to vector<4x4xf32>
    %cst_383 = arith.constant dense<0.000000e+00> : vector<4x256xf32>
    %374 = tpu.matmul %373, %371, %cst_383 {dimension_numbers = #tpu.dot_dimension_numbers<[1], [0], [0], [1], [0, 0, 1, 1], [], []>} : vector<4x4xf32>, vector<4x256xf32>, vector<4x256xf32> -> vector<4x256xf32>
    %375 = arith.addf %367, %374 : vector<4x256xf32>
    %c239_i32_384 = arith.constant 239 : i32
    %376 = tpu.dynamic_rotate %316 by %c239_i32_384 dim 1 : vector<4x256xf32>, i32 -> vector<4x256xf32>
    %c8_385 = arith.constant 8 : index
    %c0_386 = arith.constant 0 : index
    %c0_387 = arith.constant 0 : index
    %377 = vector.load %arg4[%c8_385, %c0_386, %c0_387] : memref<9x4x256xf32, #tpu.memory_space<vmem>>, vector<1x4x256xf32>
    %378 = vector.shape_cast %377 : vector<1x4x256xf32> to vector<4x256xf32>
    %379 = arith.mulf %376, %378 : vector<4x256xf32>
    %c4_388 = arith.constant 4 : index
    %c8_389 = arith.constant 8 : index
    %c0_390 = arith.constant 0 : index
    %c0_391 = arith.constant 0 : index
    %380 = vector.load %arg2[%c4_388, %c8_389, %c0_390, %c0_391] : memref<5x9x4x4xf32, #tpu.memory_space<vmem>>, vector<1x1x4x4xf32>
    %381 = vector.shape_cast %380 : vector<1x1x4x4xf32> to vector<4x4xf32>
    %cst_392 = arith.constant dense<0.000000e+00> : vector<4x256xf32>
    %382 = tpu.matmul %381, %379, %cst_392 {dimension_numbers = #tpu.dot_dimension_numbers<[1], [0], [0], [1], [0, 0, 1, 1], [], []>} : vector<4x4xf32>, vector<4x256xf32>, vector<4x256xf32> -> vector<4x256xf32>
    %383 = arith.addf %375, %382 : vector<4x256xf32>
    %c4_393 = arith.constant 4 : index
    %c0_394 = arith.constant 0 : index
    %c0_395 = arith.constant 0 : index
    %384 = vector.load %arg3[%c4_393, %c0_394, %c0_395] : memref<5x4x1xf32, #tpu.memory_space<vmem>>, vector<1x4x1xf32>
    %385 = vector.shape_cast %384 : vector<1x4x1xf32> to vector<4x1xf32>
    %386 = vector.broadcast %385 : vector<4x1xf32> to vector<4x256xf32>
    %387 = arith.addf %383, %386 : vector<4x256xf32>
    %cst_396 = arith.constant 0.000000e+00 : f32
    %388 = vector.broadcast %cst_396 : f32 to vector<4x256xf32>
    %389 = arith.cmpf ogt, %387, %388 : vector<4x256xf32>
    %cst_397 = arith.constant 0.000000e+00 : f32
    %390 = vector.broadcast %cst_397 : f32 to vector<4x256xf32>
    %391 = arith.minimumf %387, %390 : vector<4x256xf32>
    %392 = math.exp %391 : vector<4x256xf32>
    %cst_398 = arith.constant 1.000000e+00 : f32
    %393 = vector.broadcast %cst_398 : f32 to vector<4x256xf32>
    %394 = arith.subf %392, %393 : vector<4x256xf32>
    %395 = arith.select %389, %387, %394 : vector<4x256xi1>, vector<4x256xf32>
    %c0_399 = arith.constant 0 : index
    %c0_400 = arith.constant 0 : index
    %396 = vector.load %arg5[%c0_399, %c0_400] : memref<4x256xf32, #tpu.memory_space<vmem>>, vector<4x256xf32>
    tpu.vector_store %arg5[%c0_399, %c0_400], %395 {strides = array<i32>} : memref<4x256xf32, #tpu.memory_space<vmem>>, vector<4x256xf32>,
    return
  }
  func.func @transform_0(%arg0: i32) -> (i32, i32) {
    %c0_i32 = arith.constant 0 : i32
    %c0_i32_0 = arith.constant 0 : i32
    return %c0_i32, %arg0 : i32, i32
  }
  func.func @transform_1(%arg0: i32) -> (i32, i32, i32, i32) {
    %c0_i32 = arith.constant 0 : i32
    %c0_i32_0 = arith.constant 0 : i32
    %c0_i32_1 = arith.constant 0 : i32
    %c0_i32_2 = arith.constant 0 : i32
    %c0_i32_3 = arith.constant 0 : i32
    return %c0_i32, %c0_i32_0, %c0_i32_1, %c0_i32_2 : i32, i32, i32, i32
  }
  func.func @transform_2(%arg0: i32) -> (i32, i32, i32) {
    %c0_i32 = arith.constant 0 : i32
    %c0_i32_0 = arith.constant 0 : i32
    %c0_i32_1 = arith.constant 0 : i32
    %c0_i32_2 = arith.constant 0 : i32
    return %c0_i32, %c0_i32_0, %c0_i32_1 : i32, i32, i32
  }
  func.func @transform_3(%arg0: i32) -> (i32, i32, i32) {
    %c0_i32 = arith.constant 0 : i32
    %c0_i32_0 = arith.constant 0 : i32
    %c0_i32_1 = arith.constant 0 : i32
    %c0_i32_2 = arith.constant 0 : i32
    return %c0_i32, %c0_i32_0, %c0_i32_1 : i32, i32, i32
  }
  func.func @transform_4(%arg0: i32) -> (i32, i32) {
    %c0_i32 = arith.constant 0 : i32
    %c0_i32_0 = arith.constant 0 : i32
    return %c0_i32, %arg0 : i32, i32
  }
}

</mosaic_0001>

<llo_original>
// kernel: mult_deconv_forward.1
$region0: #{mult_deconv_forward.1}
  #allocation0 [shape = 'u32[]', space=smem, size = 0x4, offset = 0x4, fixed_abs, tag = 'smem constant byte address 0x4 - core index']
  #allocation1 [shape = 'u32[72,128]{1,0:T(1,128)}', space=vmem, size = 0x9000, scoped, tag = 'internal scratch']
  %s0 = inlined_call_operand.vmem [shape: f32[4,512], index: 0, kind: input, shape index: {}]
  %s1 = inlined_call_operand.vmem [shape: f32[5,9,4,4], index: 1, kind: input, shape index: {}]
  %s2 = inlined_call_operand.vmem [shape: f32[5,4,1], index: 2, kind: input, shape index: {}]
  %s3 = inlined_call_operand.vmem [shape: f32[9,4,256], index: 3, kind: input, shape index: {}]
  %s4 = inlined_call_operand.vmem [shape: f32[4,512], index: 4, kind: output, shape index: {}]
  %s5 = sld [smem:[#allocation0]]
  $region49: #{mult_deconv_forward.1} parent=0
    _
  %s7 = ssub.s32 1, %s5
  %s8 = scalar_select 0, %s7, %s5
  loop: start=0, step=1, limit=4
  $region2: #{mult_deconv_forward.1} parent=0 // loop_pre_header
    _
  $region3: #{mult_deconv_forward.1} parent=0 // loop_header
    %s10 = sphi 0, %s14
    %p11 = scmp.ge.s32.totalorder %s10, 4
    %s20 = sphi 0, %s22
    %s23 = sphi 0, %s20
    %s24 = sphi 0, %s23
    %s40 = sphi 0, %s24
    %s44 = sphi 0, %s44
    %s46 = sphi 0, %s44
    %s47 = sphi 0, %s46
    %s61 = sphi 0, %s47
    %s65 = sphi 0, %s65
    %s67 = sphi 0, %s65
    %s68 = sphi 0, %s67
    %s82 = sphi 0, %s68
    %s86 = sphi 0, %s86
    %s88 = sphi 0, %s86
    %s89 = sphi 0, %s88
    %s103 = sphi 0, %s89
    %s109 = sphi 0, %s111
    %s112 = sphi 0, %s109
    %s113 = sphi 0, %s112
    %s129 = sphi 0, %s113
  $region4: #{mult_deconv_forward.1} parent=0 // loop_header_branch
    %13 = sbr.rel (%p11) target = $region8
  $region5: #{mult_deconv_forward.1} parent=0 // loop_body
    %s15 = ssub.s32 %s10, 1
    %s16 = ssub.s32 %s10, 2
    %s17 = sadd.s32 %s10, 1
    %s18 = ssub.s32 %s10, %s17
    %p19 = scmp.eq.s32.totalorder %s18, 0
    %s21 = sadd.s32 %s20, 1
    %s22 = scalar_select %p19, %s20, %s21
    %p25 = pneg %p19
    %p26 = scmp.eq.s32.totalorder %s10, 1
    %p27 = por %p25, %p26
    %p28 = scmp.ne.s32.totalorder %s20, %s23
    %p29 = scmp.eq.s32.totalorder %s10, 0
    %p30 = por %p28, %p29
    %p31 = scmp.ne.s32.totalorder %s20, %s23
    %p32 = scmp.eq.s32.totalorder %s15, 1
    %p33 = por %p31, %p32
    %p34 = scmp.ne.s32.totalorder %s23, %s24
    %p35 = scmp.eq.s32.totalorder %s15, 0
    %p36 = por %p34, %p35
    %p37 = scmp.ne.s32.totalorder %s23, %s24
    %p38 = scmp.eq.s32.totalorder %s16, 1
    %p39 = por %p37, %p38
    %p41 = scmp.ne.s32.totalorder %s24, %s40
    %p42 = scmp.eq.s32.totalorder %s16, 0
    %p43 = por %p41, %p42
    %s45 = sadd.s32 %s44, 1
    %p48 = scmp.eq.s32.totalorder %s10, 1
    %p49 = scmp.ne.s32.totalorder %s44, %s46
    %p50 = scmp.eq.s32.totalorder %s10, 0
    %p51 = por %p49, %p50
    %p52 = scmp.ne.s32.totalorder %s44, %s46
    %p53 = scmp.eq.s32.totalorder %s15, 1
    %p54 = por %p52, %p53
    %p55 = scmp.ne.s32.totalorder %s46, %s47
    %p56 = scmp.eq.s32.totalorder %s15, 0
    %p57 = por %p55, %p56
    %p58 = scmp.ne.s32.totalorder %s46, %s47
    %p59 = scmp.eq.s32.totalorder %s16, 1
    %p60 = por %p58, %p59
    %p62 = scmp.ne.s32.totalorder %s47, %s61
    %p63 = scmp.eq.s32.totalorder %s16, 0
    %p64 = por %p62, %p63
    %s66 = sadd.s32 %s65, 1
    %p69 = scmp.eq.s32.totalorder %s10, 1
    %p70 = scmp.ne.s32.totalorder %s65, %s67
    %p71 = scmp.eq.s32.totalorder %s10, 0
    %p72 = por %p70, %p71
    %p73 = scmp.ne.s32.totalorder %s65, %s67
    %p74 = scmp.eq.s32.totalorder %s15, 1
    %p75 = por %p73, %p74
    %p76 = scmp.ne.s32.totalorder %s67, %s68
    %p77 = scmp.eq.s32.totalorder %s15, 0
    %p78 = por %p76, %p77
    %p79 = scmp.ne.s32.totalorder %s67, %s68
    %p80 = scmp.eq.s32.totalorder %s16, 1
    %p81 = por %p79, %p80
    %p83 = scmp.ne.s32.totalorder %s68, %s82
    %p84 = scmp.eq.s32.totalorder %s16, 0
    %p85 = por %p83, %p84
    %s87 = sadd.s32 %s86, 1
    %p90 = scmp.eq.s32.totalorder %s10, 1
    %p91 = scmp.ne.s32.totalorder %s86, %s88
    %p92 = scmp.eq.s32.totalorder %s10, 0
    %p93 = por %p91, %p92
    %p94 = scmp.ne.s32.totalorder %s86, %s88
    %p95 = scmp.eq.s32.totalorder %s15, 1
    %p96 = por %p94, %p95
    %p97 = scmp.ne.s32.totalorder %s88, %s89
    %p98 = scmp.eq.s32.totalorder %s15, 0
    %p99 = por %p97, %p98
    %p100 = scmp.ne.s32.totalorder %s88, %s89
    %p101 = scmp.eq.s32.totalorder %s16, 1
    %p102 = por %p100, %p101
    %p104 = scmp.ne.s32.totalorder %s89, %s103
    %p105 = scmp.eq.s32.totalorder %s16, 0
    %p106 = por %p104, %p105
    %s107 = ssub.s32 %s10, %s17
    %p108 = scmp.eq.s32.totalorder %s107, 0
    %s110 = sadd.s32 %s109, 1
    %s111 = scalar_select %p108, %s109, %s110
    %p114 = pneg %p108
    %p115 = scmp.eq.s32.totalorder %s10, 1
    %p116 = por %p114, %p115
    %p117 = scmp.ne.s32.totalorder %s109, %s112
    %p118 = scmp.eq.s32.totalorder %s10, 0
    %p119 = por %p117, %p118
    %p120 = scmp.ne.s32.totalorder %s109, %s112
    %p121 = scmp.eq.s32.totalorder %s15, 1
    %p122 = por %p120, %p121
    %p123 = scmp.ne.s32.totalorder %s112, %s113
    %p124 = scmp.eq.s32.totalorder %s15, 0
    %p125 = por %p123, %p124
    %p126 = scmp.ne.s32.totalorder %s112, %s113
    %p127 = scmp.eq.s32.totalorder %s16, 1
    %p128 = por %p126, %p127
    %p130 = scmp.ne.s32.totalorder %s113, %s129
    %p131 = scmp.eq.s32.totalorder %s16, 0
    %p132 = por %p130, %p131
    %p133 = scmp.le.s32.totalorder 1, %s10
    %p134 = scmp.lt.s32.totalorder %s10, 3
    %p135 = pnand %p133, %p134
    %p136 = pneg %p135
    // Predicated region
    $region9: #{mult_deconv_forward.1} parent=5 // pred_check
      _
    $region10: #{mult_deconv_forward.1} parent=5 // pred_check_branch
      %138 = sbr.rel (%p135) target = $region12
    $region11: #{mult_deconv_forward.1} parent=5 // pred_region
      %s139 = ssub.s32 %s10, 1
      // Predicated region
      $region13: #{mult_deconv_forward.1} parent=11 // pred_check
        %p140 = pneg %p57
      $region14: #{mult_deconv_forward.1} parent=11 // pred_check_branch
        %142 = sbr.rel (%p140) target = $region16
      $region15: #{mult_deconv_forward.1} parent=11 // pred_region
        _
      $region16: #{mult_deconv_forward.1} parent=11 // pred_fallthru
        _
      // Predicated region
      $region17: #{mult_deconv_forward.1} parent=11 // pred_check
        %p143 = pneg %p78
      $region18: #{mult_deconv_forward.1} parent=11 // pred_check_branch
        %145 = sbr.rel (%p143) target = $region20
      $region19: #{mult_deconv_forward.1} parent=11 // pred_region
        _
      $region20: #{mult_deconv_forward.1} parent=11 // pred_fallthru
        _
      // Predicated region
      $region21: #{mult_deconv_forward.1} parent=11 // pred_check
        %p146 = pneg %p99
      $region22: #{mult_deconv_forward.1} parent=11 // pred_check_branch
        %148 = sbr.rel (%p146) target = $region24
      $region23: #{mult_deconv_forward.1} parent=11 // pred_region
        _
      $region24: #{mult_deconv_forward.1} parent=11 // pred_fallthru
        _
    $region12: #{mult_deconv_forward.1} parent=5 // pred_fallthru
      _
    %p149 = scmp.lt.s32.totalorder %s10, 2
    // Predicated region
    $region25: #{mult_deconv_forward.1} parent=5 // pred_check
      %p150 = pneg %p149
    $region26: #{mult_deconv_forward.1} parent=5 // pred_check_branch
      %152 = sbr.rel (%p150) target = $region28
    $region27: #{mult_deconv_forward.1} parent=5 // pred_region
      // Predicated region
      $region29: #{mult_deconv_forward.1} parent=27 // pred_check
        %p153 = pneg %p30
      $region30: #{mult_deconv_forward.1} parent=27 // pred_check_branch
        %155 = sbr.rel (%p153) target = $region32
      $region31: #{mult_deconv_forward.1} parent=27 // pred_region
        %s156 = smul.u32 2, %s10
        %p157 = scmp.lt.s32.totalorder %s156, 3
        %s158 = scalar_select %p157, %s156, 3
        %s159 = smul.addr %s158, 4
        %s160 = scalar_lea.vmem %s0, %s159
        %s161 = smul.u32 2, %s10
      $region32: #{mult_deconv_forward.1} parent=27 // pred_fallthru
        _
    $region28: #{mult_deconv_forward.1} parent=5 // pred_fallthru
      _
    %p162 = scmp.le.s32.totalorder 1, %s10
    %p163 = scmp.lt.s32.totalorder %s10, 3
    %p164 = pnand %p162, %p163
    %p165 = pneg %p164
    // Predicated region
    $region33: #{mult_deconv_forward.1} parent=5 // pred_check
      _
    $region34: #{mult_deconv_forward.1} parent=5 // pred_check_branch
      %167 = sbr.rel (%p164) target = $region36
    $region35: #{mult_deconv_forward.1} parent=5 // pred_region
      %s168 = ssub.s32 %s10, 1
      %s169 = smul.u32 2, %s15
      %p170 = scmp.lt.s32.totalorder %s169, 3
      %s171 = scalar_select %p170, %s169, 3
      %s172 = smul.addr %s171, 4
      %s173 = scalar_lea.vmem %s0, %s172
      %p174 = pneg %p36
      %p175 = pneg %p33
      %p176 = pneg %p57
      %p177 = pneg %p54
      %p178 = pneg %p78
      %p179 = pneg %p75
      %p180 = pneg %p99
      %p181 = pneg %p96
      %p182 = pneg %p125
      %p183 = pneg %p122
      %s184 = smul.u32 2, %s15
      %p185 = scmp.lt.s32.totalorder %s184, 3
      %s186 = scalar_select %p185, %s184, 3
      %s187 = smul.addr %s186, 4
      %s188 = scalar_lea.vmem %s4, %s187
      %s189 = smul.u32 2, %s15
      %p190 = scmp.lt.s32.totalorder %s189, 3
      %s191 = scalar_select %p190, %s189, 3
      %s192 = smul.addr %s191, 4
      %s193 = scalar_lea.vmem %s0, %s192
      %s194 = smul.u32 2, %s15
      %s195 = smul.u32 2, %s15
      %p196 = scmp.lt.s32.totalorder %s195, 3
      %s197 = scalar_select %p196, %s195, 3
      %s198 = smul.addr %s197, 4
      %s199 = scalar_lea.vmem %s4, %s198
      %s200 = smul.u32 2, %s15
      %v201 = vld [vmem:[%s193] sm:$0xff]
      %203 = vst [vmem:[#allocation1] ss:$2 sm:$0xff] %v201
      %v204 = vld.sshfl [vmem:[#allocation1] sm:$0xff pattern:$0x75316420]
      %v205 = vld.sshfl [vmem:[#allocation1 + $0x8] sm:$0xff pattern:$0x75316420]
      %208 = vrot.lane.b32.xlu0 %v204, 17
      %v209 = vpop.permute.xlu0 %208
      %210 = vrot.lane.b32.xlu0 %v205, 17
      %v211 = vpop.permute.xlu0 %210
      %v212 = vlaneseq
      %v213 = vand.u32 %v212, 127
      %vm214 = vcmp.lt.s32.totalorder %v213, 17
      %v215 = vsel %vm214, %v209, %v211
      %v216 = vsel %vm214, %v211, %v209
      %v217 = vld [vmem:[%s3] sm:$0xff]
      %219 = vst [vmem:[#allocation1] ss:$2 sm:$0xff] %v217
      %v220 = vld.sshfl [vmem:[#allocation1] sm:$0xff pattern:$0x75316420]
      %v221 = vld.sshfl [vmem:[#allocation1 + $0x8] sm:$0xff pattern:$0x75316420]
      %v224 = vmul.f32 %v216, %v220
      %v225 = vmul.f32 %v215, %v221
      %v226 = vld [vmem:[%s1] sm:$0xf]
      %227 = vst [vmem:[#allocation1] ss:$2 sm:$0xff] %v201
      %v228 = vld.sshfl [vmem:[#allocation1] sm:$0xff pattern:$0x75316420]
      %v229 = vld.sshfl [vmem:[#allocation1 + $0x8] sm:$0xff pattern:$0x75316420]
      %232 = vrot.lane.b32.xlu0 %v228, 16
      %v233 = vpop.permute.xlu0 %232
      %234 = vrot.lane.b32.xlu0 %v229, 16
      %v235 = vpop.permute.xlu0 %234
      %vm236 = vcmp.lt.s32.totalorder %v213, 16
      %v237 = vsel %vm236, %v233, %v235
      %v238 = vsel %vm236, %v235, %v233
      %s239 = scalar_lea.vmem %s3, 8
      %v240 = vld [vmem:[%s239] sm:$0xff]
      %242 = vst [vmem:[#allocation1] ss:$2 sm:$0xff] %v240
      %v243 = vld.sshfl [vmem:[#allocation1] sm:$0xff pattern:$0x75316420]
      %v244 = vld.sshfl [vmem:[#allocation1 + $0x8] sm:$0xff pattern:$0x75316420]
      %v247 = vmul.f32 %v238, %v243
      %v248 = vmul.f32 %v237, %v244
      %s249 = scalar_lea.vmem %s1, 4
      %v250 = vld [vmem:[%s249] sm:$0xf]
      %vm251 = vcmask 31744
      %v253 = vsel %vm251, %v250, 0
      %vm255 = vcmask 1043456
      %v257 = vsel %vm255, %v247, 0
      %v260 = vsel %vm255, %v248, 0
      %262 = vmatpush.msra.mxu0 0.0
      %263 = vmatpush.msra.mxu0 0.0
      %264 = vmatpush.msra.mxu0 0.0
      %265 = vmatpush.msra.mxu0 0.0
      %266 = vmatpush.msra.mxu0 0.0
      %267 = vmatpush.msra.mxu0 0.0
      %268 = vmatpush.msra.mxu0 0.0
      %269 = vmatpush.msra.mxu0 0.0
      %270 = vmatpush.msra.mxu0 0.0
      %271 = vmatpush.msra.mxu0 0.0
      %272 = vmatpush.msra.mxu0 0.0
      %273 = vmatpush.msra.mxu0 0.0
      %274 = vmatpush.msra.mxu0 0.0
      %275 = vmatpush.msra.mxu0 0.0
      %276 = vmatpush.msra.mxu0 0.0
      %277 = vmatpush.msra.mxu0 %v257
      %278 = vmatmul.f32.gmra.mxu0 %v253
      %v279 = vpop.f32.mrf.mxu0
      %v280 = vadd.f32 0.0, %v279
      %281 = vdwg.mxu0
      %282 = vmatpush.msra.mxu0 0.0
      %283 = vmatpush.msra.mxu0 0.0
      %284 = vmatpush.msra.mxu0 0.0
      %285 = vmatpush.msra.mxu0 0.0
      %286 = vmatpush.msra.mxu0 0.0
      %287 = vmatpush.msra.mxu0 0.0
      %288 = vmatpush.msra.mxu0 0.0
      %289 = vmatpush.msra.mxu0 0.0
      %290 = vmatpush.msra.mxu0 0.0
      %291 = vmatpush.msra.mxu0 0.0
      %292 = vmatpush.msra.mxu0 0.0
      %293 = vmatpush.msra.mxu0 0.0
      %294 = vmatpush.msra.mxu0 0.0
      %295 = vmatpush.msra.mxu0 0.0
      %296 = vmatpush.msra.mxu0 0.0
      %297 = vmatpush.msra.mxu0 %v260
      %298 = vmatmul.f32.gmra.mxu0 %v253
      %v299 = vpop.f32.mrf.mxu0
      %v300 = vadd.f32 0.0, %v299
      %301 = vdwg.mxu0
      %v303 = vsel %vm251, %v226, 0
      %v306 = vsel %vm255, %v224, 0
      %v309 = vsel %vm255, %v225, 0
      %311 = vmatpush.msra.mxu0 0.0
      %312 = vmatpush.msra.mxu0 0.0
      %313 = vmatpush.msra.mxu0 0.0
      %314 = vmatpush.msra.mxu0 0.0
      %315 = vmatpush.msra.mxu0 0.0
      %316 = vmatpush.msra.mxu0 0.0
      %317 = vmatpush.msra.mxu0 0.0
      %318 = vmatpush.msra.mxu0 0.0
      %319 = vmatpush.msra.mxu0 0.0
      %320 = vmatpush.msra.mxu0 0.0
      %321 = vmatpush.msra.mxu0 0.0
      %322 = vmatpush.msra.mxu0 0.0
      %323 = vmatpush.msra.mxu0 0.0
      %324 = vmatpush.msra.mxu0 0.0
      %325 = vmatpush.msra.mxu0 0.0
      %326 = vmatpush.msra.mxu0 %v306
      %327 = vmatmul.f32.gmra.mxu0 %v303
      %v328 = vpop.f32.mrf.mxu0
      %v329 = vadd.f32 %v280, %v328
      %330 = vdwg.mxu0
      %331 = vmatpush.msra.mxu0 0.0
      %332 = vmatpush.msra.mxu0 0.0
      %333 = vmatpush.msra.mxu0 0.0
      %334 = vmatpush.msra.mxu0 0.0
      %335 = vmatpush.msra.mxu0 0.0
      %336 = vmatpush.msra.mxu0 0.0
      %337 = vmatpush.msra.mxu0 0.0
      %338 = vmatpush.msra.mxu0 0.0
      %339 = vmatpush.msra.mxu0 0.0
      %340 = vmatpush.msra.mxu0 0.0
      %341 = vmatpush.msra.mxu0 0.0
      %342 = vmatpush.msra.mxu0 0.0
      %343 = vmatpush.msra.mxu0 0.0
      %344 = vmatpush.msra.mxu0 0.0
      %345 = vmatpush.msra.mxu0 0.0
      %346 = vmatpush.msra.mxu0 %v309
      %347 = vmatmul.f32.gmra.mxu0 %v303
      %v348 = vpop.f32.mrf.mxu0
      %v349 = vadd.f32 %v300, %v348
      %350 = vdwg.mxu0
      %351 = vst [vmem:[#allocation1] ss:$2 sm:$0xff] %v201
      %v352 = vld.sshfl [vmem:[#allocation1] sm:$0xff pattern:$0x75316420]
      %v353 = vld.sshfl [vmem:[#allocation1 + $0x8] sm:$0xff pattern:$0x75316420]
      %356 = vrot.lane.b32.xlu0 %v352, 15
      %v357 = vpop.permute.xlu0 %356
      %358 = vrot.lane.b32.xlu0 %v353, 15
      %v359 = vpop.permute.xlu0 %358
      %vm360 = vcmp.lt.s32.totalorder %v213, 15
      %v361 = vsel %vm360, %v357, %v359
      %v362 = vsel %vm360, %v359, %v357
      %s363 = scalar_lea.vmem %s3, 16
      %v364 = vld [vmem:[%s363] sm:$0xff]
      %366 = vst [vmem:[#allocation1] ss:$2 sm:$0xff] %v364
      %v367 = vld.sshfl [vmem:[#allocation1] sm:$0xff pattern:$0x75316420]
      %v368 = vld.sshfl [vmem:[#allocation1 + $0x8] sm:$0xff pattern:$0x75316420]
      %v371 = vmul.f32 %v362, %v367
      %v372 = vmul.f32 %v361, %v368
      %s373 = scalar_lea.vmem %s1, 8
      %v374 = vld [vmem:[%s373] sm:$0xf]
      %v376 = vsel %vm251, %v374, 0
      %v379 = vsel %vm255, %v371, 0
      %v382 = vsel %vm255, %v372, 0
      %384 = vmatpush.msra.mxu0 0.0
      %385 = vmatpush.msra.mxu0 0.0
      %386 = vmatpush.msra.mxu0 0.0
      %387 = vmatpush.msra.mxu0 0.0
      %388 = vmatpush.msra.mxu0 0.0
      %389 = vmatpush.msra.mxu0 0.0
      %390 = vmatpush.msra.mxu0 0.0
      %391 = vmatpush.msra.mxu0 0.0
      %392 = vmatpush.msra.mxu0 0.0
      %393 = vmatpush.msra.mxu0 0.0
      %394 = vmatpush.msra.mxu0 0.0
      %395 = vmatpush.msra.mxu0 0.0
      %396 = vmatpush.msra.mxu0 0.0
      %397 = vmatpush.msra.mxu0 0.0
      %398 = vmatpush.msra.mxu0 0.0
      %399 = vmatpush.msra.mxu0 %v379
      %400 = vmatmul.f32.gmra.mxu0 %v376
      %v401 = vpop.f32.mrf.mxu0
      %v402 = vadd.f32 0.0, %v401
      %403 = vdwg.mxu0
      %404 = vmatpush.msra.mxu0 0.0
      %405 = vmatpush.msra.mxu0 0.0
      %406 = vmatpush.msra.mxu0 0.0
      %407 = vmatpush.msra.mxu0 0.0
      %408 = vmatpush.msra.mxu0 0.0
      %409 = vmatpush.msra.mxu0 0.0
      %410 = vmatpush.msra.mxu0 0.0
      %411 = vmatpush.msra.mxu0 0.0
      %412 = vmatpush.msra.mxu0 0.0
      %413 = vmatpush.msra.mxu0 0.0
      %414 = vmatpush.msra.mxu0 0.0
      %415 = vmatpush.msra.mxu0 0.0
      %416 = vmatpush.msra.mxu0 0.0
      %417 = vmatpush.msra.mxu0 0.0
      %418 = vmatpush.msra.mxu0 0.0
      %419 = vmatpush.msra.mxu0 %v382
      %420 = vmatmul.f32.gmra.mxu0 %v376
      %v421 = vpop.f32.mrf.mxu0
      %v422 = vadd.f32 0.0, %v421
      %423 = vdwg.mxu0
      %v424 = vadd.f32 %v329, %v402
      %v425 = vadd.f32 %v349, %v422
      %426 = vst [vmem:[#allocation1] ss:$2 sm:$0xff] %v201
      %v427 = vld.sshfl [vmem:[#allocation1] sm:$0xff pattern:$0x75316420]
      %v428 = vld.sshfl [vmem:[#allocation1 + $0x8] sm:$0xff pattern:$0x75316420]
      %431 = vrot.lane.b32.xlu0 %v427, 1
      %v432 = vpop.permute.xlu0 %431
      %433 = vrot.lane.b32.xlu0 %v428, 1
      %v434 = vpop.permute.xlu0 %433
      %vm435 = vcmp.lt.s32.totalorder %v213, 1
      %v436 = vsel %vm435, %v432, %v434
      %v437 = vsel %vm435, %v434, %v432
      %s438 = scalar_lea.vmem %s3, 24
      %v439 = vld [vmem:[%s438] sm:$0xff]
      %441 = vst [vmem:[#allocation1] ss:$2 sm:$0xff] %v439
      %v442 = vld.sshfl [vmem:[#allocation1] sm:$0xff pattern:$0x75316420]
      %v443 = vld.sshfl [vmem:[#allocation1 + $0x8] sm:$0xff pattern:$0x75316420]
      %v446 = vmul.f32 %v437, %v442
      %v447 = vmul.f32 %v436, %v443
      %s448 = scalar_lea.vmem %s1, 12
      %v449 = vld [vmem:[%s448] sm:$0xf]
      %v451 = vsel %vm251, %v449, 0
      %v454 = vsel %vm255, %v446, 0
      %v457 = vsel %vm255, %v447, 0
      %459 = vmatpush.msra.mxu0 0.0
      %460 = vmatpush.msra.mxu0 0.0
      %461 = vmatpush.msra.mxu0 0.0
      %462 = vmatpush.msra.mxu0 0.0
      %463 = vmatpush.msra.mxu0 0.0
      %464 = vmatpush.msra.mxu0 0.0
      %465 = vmatpush.msra.mxu0 0.0
      %466 = vmatpush.msra.mxu0 0.0
      %467 = vmatpush.msra.mxu0 0.0
      %468 = vmatpush.msra.mxu0 0.0
      %469 = vmatpush.msra.mxu0 0.0
      %470 = vmatpush.msra.mxu0 0.0
      %471 = vmatpush.msra.mxu0 0.0
      %472 = vmatpush.msra.mxu0 0.0
      %473 = vmatpush.msra.mxu0 0.0
      %474 = vmatpush.msra.mxu0 %v454
      %475 = vmatmul.f32.gmra.mxu0 %v451
      %v476 = vpop.f32.mrf.mxu0
      %v477 = vadd.f32 0.0, %v476
      %478 = vdwg.mxu0
      %479 = vmatpush.msra.mxu0 0.0
      %480 = vmatpush.msra.mxu0 0.0
      %481 = vmatpush.msra.mxu0 0.0
      %482 = vmatpush.msra.mxu0 0.0
      %483 = vmatpush.msra.mxu0 0.0
      %484 = vmatpush.msra.mxu0 0.0
      %485 = vmatpush.msra.mxu0 0.0
      %486 = vmatpush.msra.mxu0 0.0
      %487 = vmatpush.msra.mxu0 0.0
      %488 = vmatpush.msra.mxu0 0.0
      %489 = vmatpush.msra.mxu0 0.0
      %490 = vmatpush.msra.mxu0 0.0
      %491 = vmatpush.msra.mxu0 0.0
      %492 = vmatpush.msra.mxu0 0.0
      %493 = vmatpush.msra.mxu0 0.0
      %494 = vmatpush.msra.mxu0 %v457
      %495 = vmatmul.f32.gmra.mxu0 %v451
      %v496 = vpop.f32.mrf.mxu0
      %v497 = vadd.f32 0.0, %v496
      %498 = vdwg.mxu0
      %v499 = vadd.f32 %v424, %v477
      %v500 = vadd.f32 %v425, %v497
      %s501 = scalar_lea.vmem %s1, 16
      %v502 = vld [vmem:[%s501] sm:$0xf]
      %503 = vst [vmem:[#allocation1] ss:$2 sm:$0xff] %v201
      %v504 = vld.sshfl [vmem:[#allocation1] sm:$0xff pattern:$0x75316420]
      %v505 = vld.sshfl [vmem:[#allocation1 + $0x8] sm:$0xff pattern:$0x75316420]
      %v507 = vsel %vm251, %v502, 0
      %v509 = vsel %vm255, %v504, 0
      %v511 = vsel %vm255, %v505, 0
      %513 = vmatpush.msra.mxu0 0.0
      %514 = vmatpush.msra.mxu0 0.0
      %515 = vmatpush.msra.mxu0 0.0
      %516 = vmatpush.msra.mxu0 0.0
      %517 = vmatpush.msra.mxu0 0.0
      %518 = vmatpush.msra.mxu0 0.0
      %519 = vmatpush.msra.mxu0 0.0
      %520 = vmatpush.msra.mxu0 0.0
      %521 = vmatpush.msra.mxu0 0.0
      %522 = vmatpush.msra.mxu0 0.0
      %523 = vmatpush.msra.mxu0 0.0
      %524 = vmatpush.msra.mxu0 0.0
      %525 = vmatpush.msra.mxu0 0.0
      %526 = vmatpush.msra.mxu0 0.0
      %527 = vmatpush.msra.mxu0 0.0
      %528 = vmatpush.msra.mxu0 %v509
      %529 = vmatmul.f32.gmra.mxu0 %v507
      %v530 = vpop.f32.mrf.mxu0
      %v531 = vadd.f32 0.0, %v530
      %532 = vdwg.mxu0
      %533 = vmatpush.msra.mxu0 0.0
      %534 = vmatpush.msra.mxu0 0.0
      %535 = vmatpush.msra.mxu0 0.0
      %536 = vmatpush.msra.mxu0 0.0
      %537 = vmatpush.msra.mxu0 0.0
      %538 = vmatpush.msra.mxu0 0.0
      %539 = vmatpush.msra.mxu0 0.0
      %540 = vmatpush.msra.mxu0 0.0
      %541 = vmatpush.msra.mxu0 0.0
      %542 = vmatpush.msra.mxu0 0.0
      %543 = vmatpush.msra.mxu0 0.0
      %544 = vmatpush.msra.mxu0 0.0
      %545 = vmatpush.msra.mxu0 0.0
      %546 = vmatpush.msra.mxu0 0.0
      %547 = vmatpush.msra.mxu0 0.0
      %548 = vmatpush.msra.mxu0 %v511
      %549 = vmatmul.f32.gmra.mxu0 %v507
      %v550 = vpop.f32.mrf.mxu0
      %v551 = vadd.f32 0.0, %v550
      %552 = vdwg.mxu0
      %v553 = vadd.f32 %v499, %v531
      %v554 = vadd.f32 %v500, %v551
      %555 = vst [vmem:[#allocation1] ss:$2 sm:$0xff] %v201
      %v556 = vld.sshfl [vmem:[#allocation1] sm:$0xff pattern:$0x75316420]
      %v557 = vld.sshfl [vmem:[#allocation1 + $0x8] sm:$0xff pattern:$0x75316420]
      %560 = vrot.lane.b32.xlu0 %v556, 127
      %v561 = vpop.permute.xlu0 %560
      %562 = vrot.lane.b32.xlu0 %v557, 127
      %v563 = vpop.permute.xlu0 %562
      %vm564 = vcmp.lt.s32.totalorder %v213, 127
      %v565 = vsel %vm564, %v561, %v563
      %v566 = vsel %vm564, %v563, %v561
      %s567 = scalar_lea.vmem %s3, 40
      %v568 = vld [vmem:[%s567] sm:$0xff]
      %570 = vst [vmem:[#allocation1] ss:$2 sm:$0xff] %v568
      %v571 = vld.sshfl [vmem:[#allocation1] sm:$0xff pattern:$0x75316420]
      %v572 = vld.sshfl [vmem:[#allocation1 + $0x8] sm:$0xff pattern:$0x75316420]
      %v575 = vmul.f32 %v565, %v571
      %v576 = vmul.f32 %v566, %v572
      %s577 = scalar_lea.vmem %s1, 20
      %v578 = vld [vmem:[%s577] sm:$0xf]
      %v580 = vsel %vm251, %v578, 0
      %v583 = vsel %vm255, %v575, 0
      %v586 = vsel %vm255, %v576, 0
      %588 = vmatpush.msra.mxu0 0.0
      %589 = vmatpush.msra.mxu0 0.0
      %590 = vmatpush.msra.mxu0 0.0
      %591 = vmatpush.msra.mxu0 0.0
      %592 = vmatpush.msra.mxu0 0.0
      %593 = vmatpush.msra.mxu0 0.0
      %594 = vmatpush.msra.mxu0 0.0
      %595 = vmatpush.msra.mxu0 0.0
      %596 = vmatpush.msra.mxu0 0.0
      %597 = vmatpush.msra.mxu0 0.0
      %598 = vmatpush.msra.mxu0 0.0
      %599 = vmatpush.msra.mxu0 0.0
      %600 = vmatpush.msra.mxu0 0.0
      %601 = vmatpush.msra.mxu0 0.0
      %602 = vmatpush.msra.mxu0 0.0
      %603 = vmatpush.msra.mxu0 %v583
      %604 = vmatmul.f32.gmra.mxu0 %v580
      %v605 = vpop.f32.mrf.mxu0
      %v606 = vadd.f32 0.0, %v605
      %607 = vdwg.mxu0
      %608 = vmatpush.msra.mxu0 0.0
      %609 = vmatpush.msra.mxu0 0.0
      %610 = vmatpush.msra.mxu0 0.0
      %611 = vmatpush.msra.mxu0 0.0
      %612 = vmatpush.msra.mxu0 0.0
      %613 = vmatpush.msra.mxu0 0.0
      %614 = vmatpush.msra.mxu0 0.0
      %615 = vmatpush.msra.mxu0 0.0
      %616 = vmatpush.msra.mxu0 0.0
      %617 = vmatpush.msra.mxu0 0.0
      %618 = vmatpush.msra.mxu0 0.0
      %619 = vmatpush.msra.mxu0 0.0
      %620 = vmatpush.msra.mxu0 0.0
      %621 = vmatpush.msra.mxu0 0.0
      %622 = vmatpush.msra.mxu0 0.0
      %623 = vmatpush.msra.mxu0 %v586
      %624 = vmatmul.f32.gmra.mxu0 %v580
      %v625 = vpop.f32.mrf.mxu0
      %v626 = vadd.f32 0.0, %v625
      %627 = vdwg.mxu0
      %v628 = vadd.f32 %v553, %v606
      %v629 = vadd.f32 %v554, %v626
      %630 = vst [vmem:[#allocation1] ss:$2 sm:$0xff] %v201
      %v631 = vld.sshfl [vmem:[#allocation1] sm:$0xff pattern:$0x75316420]
      %v632 = vld.sshfl [vmem:[#allocation1 + $0x8] sm:$0xff pattern:$0x75316420]
      %635 = vrot.lane.b32.xlu0 %v631, 113
      %v636 = vpop.permute.xlu0 %635
      %637 = vrot.lane.b32.xlu0 %v632, 113
      %v638 = vpop.permute.xlu0 %637
      %vm639 = vcmp.lt.s32.totalorder %v213, 113
      %v640 = vsel %vm639, %v636, %v638
      %v641 = vsel %vm639, %v638, %v636
      %s642 = scalar_lea.vmem %s3, 48
      %v643 = vld [vmem:[%s642] sm:$0xff]
      %645 = vst [vmem:[#allocation1] ss:$2 sm:$0xff] %v643
      %v646 = vld.sshfl [vmem:[#allocation1] sm:$0xff pattern:$0x75316420]
      %v647 = vld.sshfl [vmem:[#allocation1 + $0x8] sm:$0xff pattern:$0x75316420]
      %v650 = vmul.f32 %v640, %v646
      %v651 = vmul.f32 %v641, %v647
      %s652 = scalar_lea.vmem %s1, 24
      %v653 = vld [vmem:[%s652] sm:$0xf]
      %v655 = vsel %vm251, %v653, 0
      %v658 = vsel %vm255, %v650, 0
      %v661 = vsel %vm255, %v651, 0
      %663 = vmatpush.msra.mxu0 0.0
      %664 = vmatpush.msra.mxu0 0.0
      %665 = vmatpush.msra.mxu0 0.0
      %666 = vmatpush.msra.mxu0 0.0
      %667 = vmatpush.msra.mxu0 0.0
      %668 = vmatpush.msra.mxu0 0.0
      %669 = vmatpush.msra.mxu0 0.0
      %670 = vmatpush.msra.mxu0 0.0
      %671 = vmatpush.msra.mxu0 0.0
      %672 = vmatpush.msra.mxu0 0.0
      %673 = vmatpush.msra.mxu0 0.0
      %674 = vmatpush.msra.mxu0 0.0
      %675 = vmatpush.msra.mxu0 0.0
      %676 = vmatpush.msra.mxu0 0.0
      %677 = vmatpush.msra.mxu0 0.0
      %678 = vmatpush.msra.mxu0 %v658
      %679 = vmatmul.f32.gmra.mxu0 %v655
      %v680 = vpop.f32.mrf.mxu0
      %v681 = vadd.f32 0.0, %v680
      %682 = vdwg.mxu0
      %683 = vmatpush.msra.mxu0 0.0
      %684 = vmatpush.msra.mxu0 0.0
      %685 = vmatpush.msra.mxu0 0.0
      %686 = vmatpush.msra.mxu0 0.0
      %687 = vmatpush.msra.mxu0 0.0
      %688 = vmatpush.msra.mxu0 0.0
      %689 = vmatpush.msra.mxu0 0.0
      %690 = vmatpush.msra.mxu0 0.0
      %691 = vmatpush.msra.mxu0 0.0
      %692 = vmatpush.msra.mxu0 0.0
      %693 = vmatpush.msra.mxu0 0.0
      %694 = vmatpush.msra.mxu0 0.0
      %695 = vmatpush.msra.mxu0 0.0
      %696 = vmatpush.msra.mxu0 0.0
      %697 = vmatpush.msra.mxu0 0.0
      %698 = vmatpush.msra.mxu0 %v661
      %699 = vmatmul.f32.gmra.mxu0 %v655
      %v700 = vpop.f32.mrf.mxu0
      %v701 = vadd.f32 0.0, %v700
      %702 = vdwg.mxu0
      %v703 = vadd.f32 %v628, %v681
      %v704 = vadd.f32 %v629, %v701
      %705 = vst [vmem:[#allocation1] ss:$2 sm:$0xff] %v201
      %v706 = vld.sshfl [vmem:[#allocation1] sm:$0xff pattern:$0x75316420]
      %v707 = vld.sshfl [vmem:[#allocation1 + $0x8] sm:$0xff pattern:$0x75316420]
      %710 = vrot.lane.b32.xlu0 %v706, 112
      %v711 = vpop.permute.xlu0 %710
      %712 = vrot.lane.b32.xlu0 %v707, 112
      %v713 = vpop.permute.xlu0 %712
      %vm714 = vcmp.lt.s32.totalorder %v213, 112
      %v715 = vsel %vm714, %v711, %v713
      %v716 = vsel %vm714, %v713, %v711
      %s717 = scalar_lea.vmem %s3, 56
      %v718 = vld [vmem:[%s717] sm:$0xff]
      %720 = vst [vmem:[#allocation1] ss:$2 sm:$0xff] %v718
      %v721 = vld.sshfl [vmem:[#allocation1] sm:$0xff pattern:$0x75316420]
      %v722 = vld.sshfl [vmem:[#allocation1 + $0x8] sm:$0xff pattern:$0x75316420]
      %v725 = vmul.f32 %v715, %v721
      %v726 = vmul.f32 %v716, %v722
      %s727 = scalar_lea.vmem %s1, 28
      %v728 = vld [vmem:[%s727] sm:$0xf]
      %v730 = vsel %vm251, %v728, 0
      %v733 = vsel %vm255, %v725, 0
      %v736 = vsel %vm255, %v726, 0
      %738 = vmatpush.msra.mxu0 0.0
      %739 = vmatpush.msra.mxu0 0.0
      %740 = vmatpush.msra.mxu0 0.0
      %741 = vmatpush.msra.mxu0 0.0
      %742 = vmatpush.msra.mxu0 0.0
      %743 = vmatpush.msra.mxu0 0.0
      %744 = vmatpush.msra.mxu0 0.0
      %745 = vmatpush.msra.mxu0 0.0
      %746 = vmatpush.msra.mxu0 0.0
      %747 = vmatpush.msra.mxu0 0.0
      %748 = vmatpush.msra.mxu0 0.0
      %749 = vmatpush.msra.mxu0 0.0
      %750 = vmatpush.msra.mxu0 0.0
      %751 = vmatpush.msra.mxu0 0.0
      %752 = vmatpush.msra.mxu0 0.0
      %753 = vmatpush.msra.mxu0 %v733
      %754 = vmatmul.f32.gmra.mxu0 %v730
      %v755 = vpop.f32.mrf.mxu0
      %v756 = vadd.f32 0.0, %v755
      %757 = vdwg.mxu0
      %758 = vmatpush.msra.mxu0 0.0
      %759 = vmatpush.msra.mxu0 0.0
      %760 = vmatpush.msra.mxu0 0.0
      %761 = vmatpush.msra.mxu0 0.0
      %762 = vmatpush.msra.mxu0 0.0
      %763 = vmatpush.msra.mxu0 0.0
      %764 = vmatpush.msra.mxu0 0.0
      %765 = vmatpush.msra.mxu0 0.0
      %766 = vmatpush.msra.mxu0 0.0
      %767 = vmatpush.msra.mxu0 0.0
      %768 = vmatpush.msra.mxu0 0.0
      %769 = vmatpush.msra.mxu0 0.0
      %770 = vmatpush.msra.mxu0 0.0
      %771 = vmatpush.msra.mxu0 0.0
      %772 = vmatpush.msra.mxu0 0.0
      %773 = vmatpush.msra.mxu0 %v736
      %774 = vmatmul.f32.gmra.mxu0 %v730
      %v775 = vpop.f32.mrf.mxu0
      %v776 = vadd.f32 0.0, %v775
      %777 = vdwg.mxu0
      %v778 = vadd.f32 %v703, %v756
      %v779 = vadd.f32 %v704, %v776
      %780 = vst [vmem:[#allocation1] ss:$2 sm:$0xff] %v201
      %v781 = vld.sshfl [vmem:[#allocation1] sm:$0xff pattern:$0x75316420]
      %v782 = vld.sshfl [vmem:[#allocation1 + $0x8] sm:$0xff pattern:$0x75316420]
      %785 = vrot.lane.b32.xlu0 %v781, 111
      %v786 = vpop.permute.xlu0 %785
      %787 = vrot.lane.b32.xlu0 %v782, 111
      %v788 = vpop.permute.xlu0 %787
      %vm789 = vcmp.lt.s32.totalorder %v213, 111
      %v790 = vsel %vm789, %v786, %v788
      %v791 = vsel %vm789, %v788, %v786
      %s792 = scalar_lea.vmem %s3, 64
      %v793 = vld [vmem:[%s792] sm:$0xff]
      %795 = vst [vmem:[#allocation1] ss:$2 sm:$0xff] %v793
      %v796 = vld.sshfl [vmem:[#allocation1] sm:$0xff pattern:$0x75316420]
      %v797 = vld.sshfl [vmem:[#allocation1 + $0x8] sm:$0xff pattern:$0x75316420]
      %v800 = vmul.f32 %v790, %v796
      %v801 = vmul.f32 %v791, %v797
      %s802 = scalar_lea.vmem %s1, 32
      %v803 = vld [vmem:[%s802] sm:$0xf]
      %v805 = vsel %vm251, %v803, 0
      %v808 = vsel %vm255, %v800, 0
      %v811 = vsel %vm255, %v801, 0
      %813 = vmatpush.msra.mxu0 0.0
      %814 = vmatpush.msra.mxu0 0.0
      %815 = vmatpush.msra.mxu0 0.0
      %816 = vmatpush.msra.mxu0 0.0
      %817 = vmatpush.msra.mxu0 0.0
      %818 = vmatpush.msra.mxu0 0.0
      %819 = vmatpush.msra.mxu0 0.0
      %820 = vmatpush.msra.mxu0 0.0
      %821 = vmatpush.msra.mxu0 0.0
      %822 = vmatpush.msra.mxu0 0.0
      %823 = vmatpush.msra.mxu0 0.0
      %824 = vmatpush.msra.mxu0 0.0
      %825 = vmatpush.msra.mxu0 0.0
      %826 = vmatpush.msra.mxu0 0.0
      %827 = vmatpush.msra.mxu0 0.0
      %828 = vmatpush.msra.mxu0 %v808
      %829 = vmatmul.f32.gmra.mxu0 %v805
      %v830 = vpop.f32.mrf.mxu0
      %v831 = vadd.f32 0.0, %v830
      %832 = vdwg.mxu0
      %833 = vmatpush.msra.mxu0 0.0
      %834 = vmatpush.msra.mxu0 0.0
      %835 = vmatpush.msra.mxu0 0.0
      %836 = vmatpush.msra.mxu0 0.0
      %837 = vmatpush.msra.mxu0 0.0
      %838 = vmatpush.msra.mxu0 0.0
      %839 = vmatpush.msra.mxu0 0.0
      %840 = vmatpush.msra.mxu0 0.0
      %841 = vmatpush.msra.mxu0 0.0
      %842 = vmatpush.msra.mxu0 0.0
      %843 = vmatpush.msra.mxu0 0.0
      %844 = vmatpush.msra.mxu0 0.0
      %845 = vmatpush.msra.mxu0 0.0
      %846 = vmatpush.msra.mxu0 0.0
      %847 = vmatpush.msra.mxu0 0.0
      %848 = vmatpush.msra.mxu0 %v811
      %849 = vmatmul.f32.gmra.mxu0 %v805
      %v850 = vpop.f32.mrf.mxu0
      %v851 = vadd.f32 0.0, %v850
      %852 = vdwg.mxu0
      %v853 = vadd.f32 %v778, %v831
      %v854 = vadd.f32 %v779, %v851
      %v855 = vld [vmem:[%s2] sm:$0xf]
      %857 = vset.pattern.permute.xlu0 0
      %858 = vperm.xlu0 %857, %v855
      %v859 = vpop.permute.xlu0 %858
      %v861 = vadd.f32 %v853, %v859
      %v862 = vadd.f32 %v854, %v859
      %vm863 = vcmp.gt.f32.partialorder %v861, 0.0
      %vm864 = vcmp.gt.f32.partialorder %v862, 0.0
      %v865 = vmin.f32 %v861, 0.0
      %v866 = vmin.f32 %v862, 0.0
      %v867 = vmul.f32 %v865, 1.442695
      %v868 = vpow.pop %v867
      %v869 = vmul.f32 %v866, 1.442695
      %v870 = vpow.pop %v869
      %v871 = vsub.f32 %v868, 1.0
      %v872 = vsub.f32 %v870, 1.0
      %v873 = vsel %vm863, %v861, %v871
      %v874 = vsel %vm864, %v862, %v872
      %875 = vrot.lane.b32.xlu0 %v873, 17
      %v876 = vpop.permute.xlu0 %875
      %877 = vrot.lane.b32.xlu0 %v874, 17
      %v878 = vpop.permute.xlu0 %877
      %v879 = vsel %vm214, %v876, %v878
      %v880 = vsel %vm214, %v878, %v876
      %881 = vst [vmem:[#allocation1] ss:$2 sm:$0xff] %v217
      %v882 = vld.sshfl [vmem:[#allocation1] sm:$0xff pattern:$0x75316420]
      %v883 = vld.sshfl [vmem:[#allocation1 + $0x8] sm:$0xff pattern:$0x75316420]
      %v886 = vmul.f32 %v880, %v882
      %v887 = vmul.f32 %v879, %v883
      %s888 = scalar_lea.vmem %s1, 36
      %v889 = vld [vmem:[%s888] sm:$0xf]
      %890 = vrot.lane.b32.xlu0 %v873, 16
      %v891 = vpop.permute.xlu0 %890
      %892 = vrot.lane.b32.xlu0 %v874, 16
      %v893 = vpop.permute.xlu0 %892
      %v894 = vsel %vm236, %v891, %v893
      %v895 = vsel %vm236, %v893, %v891
      %896 = vst [vmem:[#allocation1] ss:$2 sm:$0xff] %v240
      %v897 = vld.sshfl [vmem:[#allocation1] sm:$0xff pattern:$0x75316420]
      %v898 = vld.sshfl [vmem:[#allocation1 + $0x8] sm:$0xff pattern:$0x75316420]
      %v901 = vmul.f32 %v895, %v897
      %v902 = vmul.f32 %v894, %v898
      %s903 = scalar_lea.vmem %s1, 40
      %v904 = vld [vmem:[%s903] sm:$0xf]
      %v906 = vsel %vm251, %v904, 0
      %v909 = vsel %vm255, %v901, 0
      %v912 = vsel %vm255, %v902, 0
      %914 = vmatpush.msra.mxu0 0.0
      %915 = vmatpush.msra.mxu0 0.0
      %916 = vmatpush.msra.mxu0 0.0
      %917 = vmatpush.msra.mxu0 0.0
      %918 = vmatpush.msra.mxu0 0.0
      %919 = vmatpush.msra.mxu0 0.0
      %920 = vmatpush.msra.mxu0 0.0
      %921 = vmatpush.msra.mxu0 0.0
      %922 = vmatpush.msra.mxu0 0.0
      %923 = vmatpush.msra.mxu0 0.0
      %924 = vmatpush.msra.mxu0 0.0
      %925 = vmatpush.msra.mxu0 0.0
      %926 = vmatpush.msra.mxu0 0.0
      %927 = vmatpush.msra.mxu0 0.0
      %928 = vmatpush.msra.mxu0 0.0
      %929 = vmatpush.msra.mxu0 %v909
      %930 = vmatmul.f32.gmra.mxu0 %v906
      %v931 = vpop.f32.mrf.mxu0
      %v932 = vadd.f32 0.0, %v931
      %933 = vdwg.mxu0
      %934 = vmatpush.msra.mxu0 0.0
      %935 = vmatpush.msra.mxu0 0.0
      %936 = vmatpush.msra.mxu0 0.0
      %937 = vmatpush.msra.mxu0 0.0
      %938 = vmatpush.msra.mxu0 0.0
      %939 = vmatpush.msra.mxu0 0.0
      %940 = vmatpush.msra.mxu0 0.0
      %941 = vmatpush.msra.mxu0 0.0
      %942 = vmatpush.msra.mxu0 0.0
      %943 = vmatpush.msra.mxu0 0.0
      %944 = vmatpush.msra.mxu0 0.0
      %945 = vmatpush.msra.mxu0 0.0
      %946 = vmatpush.msra.mxu0 0.0
      %947 = vmatpush.msra.mxu0 0.0
      %948 = vmatpush.msra.mxu0 0.0
      %949 = vmatpush.msra.mxu0 %v912
      %950 = vmatmul.f32.gmra.mxu0 %v906
      %v951 = vpop.f32.mrf.mxu0
      %v952 = vadd.f32 0.0, %v951
      %953 = vdwg.mxu0
      %v955 = vsel %vm251, %v889, 0
      %v958 = vsel %vm255, %v886, 0
      %v961 = vsel %vm255, %v887, 0
      %963 = vmatpush.msra.mxu0 0.0
      %964 = vmatpush.msra.mxu0 0.0
      %965 = vmatpush.msra.mxu0 0.0
      %966 = vmatpush.msra.mxu0 0.0
      %967 = vmatpush.msra.mxu0 0.0
      %968 = vmatpush.msra.mxu0 0.0
      %969 = vmatpush.msra.mxu0 0.0
      %970 = vmatpush.msra.mxu0 0.0
      %971 = vmatpush.msra.mxu0 0.0
      %972 = vmatpush.msra.mxu0 0.0
      %973 = vmatpush.msra.mxu0 0.0
      %974 = vmatpush.msra.mxu0 0.0
      %975 = vmatpush.msra.mxu0 0.0
      %976 = vmatpush.msra.mxu0 0.0
      %977 = vmatpush.msra.mxu0 0.0
      %978 = vmatpush.msra.mxu0 %v958
      %979 = vmatmul.f32.gmra.mxu0 %v955
      %v980 = vpop.f32.mrf.mxu0
      %v981 = vadd.f32 %v932, %v980
      %982 = vdwg.mxu0
      %983 = vmatpush.msra.mxu0 0.0
      %984 = vmatpush.msra.mxu0 0.0
      %985 = vmatpush.msra.mxu0 0.0
      %986 = vmatpush.msra.mxu0 0.0
      %987 = vmatpush.msra.mxu0 0.0
      %988 = vmatpush.msra.mxu0 0.0
      %989 = vmatpush.msra.mxu0 0.0
      %990 = vmatpush.msra.mxu0 0.0
      %991 = vmatpush.msra.mxu0 0.0
      %992 = vmatpush.msra.mxu0 0.0
      %993 = vmatpush.msra.mxu0 0.0
      %994 = vmatpush.msra.mxu0 0.0
      %995 = vmatpush.msra.mxu0 0.0
      %996 = vmatpush.msra.mxu0 0.0
      %997 = vmatpush.msra.mxu0 0.0
      %998 = vmatpush.msra.mxu0 %v961
      %999 = vmatmul.f32.gmra.mxu0 %v955
      %v1000 = vpop.f32.mrf.mxu0
      %v1001 = vadd.f32 %v952, %v1000
      %1002 = vdwg.mxu0
      %1003 = vrot.lane.b32.xlu0 %v873, 15
      %v1004 = vpop.permute.xlu0 %1003
      %1005 = vrot.lane.b32.xlu0 %v874, 15
      %v1006 = vpop.permute.xlu0 %1005
      %v1007 = vsel %vm360, %v1004, %v1006
      %v1008 = vsel %vm360, %v1006, %v1004
      %1009 = vst [vmem:[#allocation1] ss:$2 sm:$0xff] %v364
      %v1010 = vld.sshfl [vmem:[#allocation1] sm:$0xff pattern:$0x75316420]
      %v1011 = vld.sshfl [vmem:[#allocation1 + $0x8] sm:$0xff pattern:$0x75316420]
      %v1014 = vmul.f32 %v1008, %v1010
      %v1015 = vmul.f32 %v1007, %v1011
      %s1016 = scalar_lea.vmem %s1, 44
      %v1017 = vld [vmem:[%s1016] sm:$0xf]
      %v1019 = vsel %vm251, %v1017, 0
      %v1022 = vsel %vm255, %v1014, 0
      %v1025 = vsel %vm255, %v1015, 0
      %1027 = vmatpush.msra.mxu0 0.0
      %1028 = vmatpush.msra.mxu0 0.0
      %1029 = vmatpush.msra.mxu0 0.0
      %1030 = vmatpush.msra.mxu0 0.0
      %1031 = vmatpush.msra.mxu0 0.0
      %1032 = vmatpush.msra.mxu0 0.0
      %1033 = vmatpush.msra.mxu0 0.0
      %1034 = vmatpush.msra.mxu0 0.0
      %1035 = vmatpush.msra.mxu0 0.0
      %1036 = vmatpush.msra.mxu0 0.0
      %1037 = vmatpush.msra.mxu0 0.0
      %1038 = vmatpush.msra.mxu0 0.0
      %1039 = vmatpush.msra.mxu0 0.0
      %1040 = vmatpush.msra.mxu0 0.0
      %1041 = vmatpush.msra.mxu0 0.0
      %1042 = vmatpush.msra.mxu0 %v1022
      %1043 = vmatmul.f32.gmra.mxu0 %v1019
      %v1044 = vpop.f32.mrf.mxu0
      %v1045 = vadd.f32 0.0, %v1044
      %1046 = vdwg.mxu0
      %1047 = vmatpush.msra.mxu0 0.0
      %1048 = vmatpush.msra.mxu0 0.0
      %1049 = vmatpush.msra.mxu0 0.0
      %1050 = vmatpush.msra.mxu0 0.0
      %1051 = vmatpush.msra.mxu0 0.0
      %1052 = vmatpush.msra.mxu0 0.0
      %1053 = vmatpush.msra.mxu0 0.0
      %1054 = vmatpush.msra.mxu0 0.0
      %1055 = vmatpush.msra.mxu0 0.0
      %1056 = vmatpush.msra.mxu0 0.0
      %1057 = vmatpush.msra.mxu0 0.0
      %1058 = vmatpush.msra.mxu0 0.0
      %1059 = vmatpush.msra.mxu0 0.0
      %1060 = vmatpush.msra.mxu0 0.0
      %1061 = vmatpush.msra.mxu0 0.0
      %1062 = vmatpush.msra.mxu0 %v1025
      %1063 = vmatmul.f32.gmra.mxu0 %v1019
      %v1064 = vpop.f32.mrf.mxu0
      %v1065 = vadd.f32 0.0, %v1064
      %1066 = vdwg.mxu0
      %v1067 = vadd.f32 %v981, %v1045
      %v1068 = vadd.f32 %v1001, %v1065
      %1069 = vrot.lane.b32.xlu0 %v873, 1
      %v1070 = vpop.permute.xlu0 %1069
      %1071 = vrot.lane.b32.xlu0 %v874, 1
      %v1072 = vpop.permute.xlu0 %1071
      %v1073 = vsel %vm435, %v1070, %v1072
      %v1074 = vsel %vm435, %v1072, %v1070
      %1075 = vst [vmem:[#allocation1] ss:$2 sm:$0xff] %v439
      %v1076 = vld.sshfl [vmem:[#allocation1] sm:$0xff pattern:$0x75316420]
      %v1077 = vld.sshfl [vmem:[#allocation1 + $0x8] sm:$0xff pattern:$0x75316420]
      %v1080 = vmul.f32 %v1074, %v1076
      %v1081 = vmul.f32 %v1073, %v1077
      %s1082 = scalar_lea.vmem %s1, 48
      %v1083 = vld [vmem:[%s1082] sm:$0xf]
      %v1085 = vsel %vm251, %v1083, 0
      %v1088 = vsel %vm255, %v1080, 0
      %v1091 = vsel %vm255, %v1081, 0
      %1093 = vmatpush.msra.mxu0 0.0
      %1094 = vmatpush.msra.mxu0 0.0
      %1095 = vmatpush.msra.mxu0 0.0
      %1096 = vmatpush.msra.mxu0 0.0
      %1097 = vmatpush.msra.mxu0 0.0
      %1098 = vmatpush.msra.mxu0 0.0
      %1099 = vmatpush.msra.mxu0 0.0
      %1100 = vmatpush.msra.mxu0 0.0
      %1101 = vmatpush.msra.mxu0 0.0
      %1102 = vmatpush.msra.mxu0 0.0
      %1103 = vmatpush.msra.mxu0 0.0
      %1104 = vmatpush.msra.mxu0 0.0
      %1105 = vmatpush.msra.mxu0 0.0
      %1106 = vmatpush.msra.mxu0 0.0
      %1107 = vmatpush.msra.mxu0 0.0
      %1108 = vmatpush.msra.mxu0 %v1088
      %1109 = vmatmul.f32.gmra.mxu0 %v1085
      %v1110 = vpop.f32.mrf.mxu0
      %v1111 = vadd.f32 0.0, %v1110
      %1112 = vdwg.mxu0
      %1113 = vmatpush.msra.mxu0 0.0
      %1114 = vmatpush.msra.mxu0 0.0
      %1115 = vmatpush.msra.mxu0 0.0
      %1116 = vmatpush.msra.mxu0 0.0
      %1117 = vmatpush.msra.mxu0 0.0
      %1118 = vmatpush.msra.mxu0 0.0
      %1119 = vmatpush.msra.mxu0 0.0
      %1120 = vmatpush.msra.mxu0 0.0
      %1121 = vmatpush.msra.mxu0 0.0
      %1122 = vmatpush.msra.mxu0 0.0
      %1123 = vmatpush.msra.mxu0 0.0
      %1124 = vmatpush.msra.mxu0 0.0
      %1125 = vmatpush.msra.mxu0 0.0
      %1126 = vmatpush.msra.mxu0 0.0
      %1127 = vmatpush.msra.mxu0 0.0
      %1128 = vmatpush.msra.mxu0 %v1091
      %1129 = vmatmul.f32.gmra.mxu0 %v1085
      %v1130 = vpop.f32.mrf.mxu0
      %v1131 = vadd.f32 0.0, %v1130
      %1132 = vdwg.mxu0
      %v1133 = vadd.f32 %v1067, %v1111
      %v1134 = vadd.f32 %v1068, %v1131
      %s1135 = scalar_lea.vmem %s1, 52
      %v1136 = vld [vmem:[%s1135] sm:$0xf]
      %v1138 = vsel %vm251, %v1136, 0
      %v1141 = vsel %vm255, %v873, 0
      %v1144 = vsel %vm255, %v874, 0
      %1146 = vmatpush.msra.mxu0 0.0
      %1147 = vmatpush.msra.mxu0 0.0
      %1148 = vmatpush.msra.mxu0 0.0
      %1149 = vmatpush.msra.mxu0 0.0
      %1150 = vmatpush.msra.mxu0 0.0
      %1151 = vmatpush.msra.mxu0 0.0
      %1152 = vmatpush.msra.mxu0 0.0
      %1153 = vmatpush.msra.mxu0 0.0
      %1154 = vmatpush.msra.mxu0 0.0
      %1155 = vmatpush.msra.mxu0 0.0
      %1156 = vmatpush.msra.mxu0 0.0
      %1157 = vmatpush.msra.mxu0 0.0
      %1158 = vmatpush.msra.mxu0 0.0
      %1159 = vmatpush.msra.mxu0 0.0
      %1160 = vmatpush.msra.mxu0 0.0
      %1161 = vmatpush.msra.mxu0 %v1141
      %1162 = vmatmul.f32.gmra.mxu0 %v1138
      %v1163 = vpop.f32.mrf.mxu0
      %v1164 = vadd.f32 0.0, %v1163
      %1165 = vdwg.mxu0
      %1166 = vmatpush.msra.mxu0 0.0
      %1167 = vmatpush.msra.mxu0 0.0
      %1168 = vmatpush.msra.mxu0 0.0
      %1169 = vmatpush.msra.mxu0 0.0
      %1170 = vmatpush.msra.mxu0 0.0
      %1171 = vmatpush.msra.mxu0 0.0
      %1172 = vmatpush.msra.mxu0 0.0
      %1173 = vmatpush.msra.mxu0 0.0
      %1174 = vmatpush.msra.mxu0 0.0
      %1175 = vmatpush.msra.mxu0 0.0
      %1176 = vmatpush.msra.mxu0 0.0
      %1177 = vmatpush.msra.mxu0 0.0
      %1178 = vmatpush.msra.mxu0 0.0
      %1179 = vmatpush.msra.mxu0 0.0
      %1180 = vmatpush.msra.mxu0 0.0
      %1181 = vmatpush.msra.mxu0 %v1144
      %1182 = vmatmul.f32.gmra.mxu0 %v1138
      %v1183 = vpop.f32.mrf.mxu0
      %v1184 = vadd.f32 0.0, %v1183
      %1185 = vdwg.mxu0
      %v1186 = vadd.f32 %v1133, %v1164
      %v1187 = vadd.f32 %v1134, %v1184
      %1188 = vrot.lane.b32.xlu0 %v873, 127
      %v1189 = vpop.permute.xlu0 %1188
      %1190 = vrot.lane.b32.xlu0 %v874, 127
      %v1191 = vpop.permute.xlu0 %1190
      %v1192 = vsel %vm564, %v1189, %v1191
      %v1193 = vsel %vm564, %v1191, %v1189
      %1194 = vst [vmem:[#allocation1] ss:$2 sm:$0xff] %v568
      %v1195 = vld.sshfl [vmem:[#allocation1] sm:$0xff pattern:$0x75316420]
      %v1196 = vld.sshfl [vmem:[#allocation1 + $0x8] sm:$0xff pattern:$0x75316420]
      %v1199 = vmul.f32 %v1192, %v1195
      %v1200 = vmul.f32 %v1193, %v1196
      %s1201 = scalar_lea.vmem %s1, 56
      %v1202 = vld [vmem:[%s1201] sm:$0xf]
      %v1204 = vsel %vm251, %v1202, 0
      %v1207 = vsel %vm255, %v1199, 0
      %v1210 = vsel %vm255, %v1200, 0
      %1212 = vmatpush.msra.mxu0 0.0
      %1213 = vmatpush.msra.mxu0 0.0
      %1214 = vmatpush.msra.mxu0 0.0
      %1215 = vmatpush.msra.mxu0 0.0
      %1216 = vmatpush.msra.mxu0 0.0
      %1217 = vmatpush.msra.mxu0 0.0
      %1218 = vmatpush.msra.mxu0 0.0
      %1219 = vmatpush.msra.mxu0 0.0
      %1220 = vmatpush.msra.mxu0 0.0
      %1221 = vmatpush.msra.mxu0 0.0
      %1222 = vmatpush.msra.mxu0 0.0
      %1223 = vmatpush.msra.mxu0 0.0
      %1224 = vmatpush.msra.mxu0 0.0
      %1225 = vmatpush.msra.mxu0 0.0
      %1226 = vmatpush.msra.mxu0 0.0
      %1227 = vmatpush.msra.mxu0 %v1207
      %1228 = vmatmul.f32.gmra.mxu0 %v1204
      %v1229 = vpop.f32.mrf.mxu0
      %v1230 = vadd.f32 0.0, %v1229
      %1231 = vdwg.mxu0
      %1232 = vmatpush.msra.mxu0 0.0
      %1233 = vmatpush.msra.mxu0 0.0
      %1234 = vmatpush.msra.mxu0 0.0
      %1235 = vmatpush.msra.mxu0 0.0
      %1236 = vmatpush.msra.mxu0 0.0
      %1237 = vmatpush.msra.mxu0 0.0
      %1238 = vmatpush.msra.mxu0 0.0
      %1239 = vmatpush.msra.mxu0 0.0
      %1240 = vmatpush.msra.mxu0 0.0
      %1241 = vmatpush.msra.mxu0 0.0
      %1242 = vmatpush.msra.mxu0 0.0
      %1243 = vmatpush.msra.mxu0 0.0
      %1244 = vmatpush.msra.mxu0 0.0
      %1245 = vmatpush.msra.mxu0 0.0
      %1246 = vmatpush.msra.mxu0 0.0
      %1247 = vmatpush.msra.mxu0 %v1210
      %1248 = vmatmul.f32.gmra.mxu0 %v1204
      %v1249 = vpop.f32.mrf.mxu0
      %v1250 = vadd.f32 0.0, %v1249
      %1251 = vdwg.mxu0
      %v1252 = vadd.f32 %v1186, %v1230
      %v1253 = vadd.f32 %v1187, %v1250
      %1254 = vrot.lane.b32.xlu0 %v873, 113
      %v1255 = vpop.permute.xlu0 %1254
      %1256 = vrot.lane.b32.xlu0 %v874, 113
      %v1257 = vpop.permute.xlu0 %1256
      %v1258 = vsel %vm639, %v1255, %v1257
      %v1259 = vsel %vm639, %v1257, %v1255
      %1260 = vst [vmem:[#allocation1] ss:$2 sm:$0xff] %v643
      %v1261 = vld.sshfl [vmem:[#allocation1] sm:$0xff pattern:$0x75316420]
      %v1262 = vld.sshfl [vmem:[#allocation1 + $0x8] sm:$0xff pattern:$0x75316420]
      %v1265 = vmul.f32 %v1258, %v1261
      %v1266 = vmul.f32 %v1259, %v1262
      %s1267 = scalar_lea.vmem %s1, 60
      %v1268 = vld [vmem:[%s1267] sm:$0xf]
      %v1270 = vsel %vm251, %v1268, 0
      %v1273 = vsel %vm255, %v1265, 0
      %v1276 = vsel %vm255, %v1266, 0
      %1278 = vmatpush.msra.mxu0 0.0
      %1279 = vmatpush.msra.mxu0 0.0
      %1280 = vmatpush.msra.mxu0 0.0
      %1281 = vmatpush.msra.mxu0 0.0
      %1282 = vmatpush.msra.mxu0 0.0
      %1283 = vmatpush.msra.mxu0 0.0
      %1284 = vmatpush.msra.mxu0 0.0
      %1285 = vmatpush.msra.mxu0 0.0
      %1286 = vmatpush.msra.mxu0 0.0
      %1287 = vmatpush.msra.mxu0 0.0
      %1288 = vmatpush.msra.mxu0 0.0
      %1289 = vmatpush.msra.mxu0 0.0
      %1290 = vmatpush.msra.mxu0 0.0
      %1291 = vmatpush.msra.mxu0 0.0
      %1292 = vmatpush.msra.mxu0 0.0
      %1293 = vmatpush.msra.mxu0 %v1273
      %1294 = vmatmul.f32.gmra.mxu0 %v1270
      %v1295 = vpop.f32.mrf.mxu0
      %v1296 = vadd.f32 0.0, %v1295
      %1297 = vdwg.mxu0
      %1298 = vmatpush.msra.mxu0 0.0
      %1299 = vmatpush.msra.mxu0 0.0
      %1300 = vmatpush.msra.mxu0 0.0
      %1301 = vmatpush.msra.mxu0 0.0
      %1302 = vmatpush.msra.mxu0 0.0
      %1303 = vmatpush.msra.mxu0 0.0
      %1304 = vmatpush.msra.mxu0 0.0
      %1305 = vmatpush.msra.mxu0 0.0
      %1306 = vmatpush.msra.mxu0 0.0
      %1307 = vmatpush.msra.mxu0 0.0
      %1308 = vmatpush.msra.mxu0 0.0
      %1309 = vmatpush.msra.mxu0 0.0
      %1310 = vmatpush.msra.mxu0 0.0
      %1311 = vmatpush.msra.mxu0 0.0
      %1312 = vmatpush.msra.mxu0 0.0
      %1313 = vmatpush.msra.mxu0 %v1276
      %1314 = vmatmul.f32.gmra.mxu0 %v1270
      %v1315 = vpop.f32.mrf.mxu0
      %v1316 = vadd.f32 0.0, %v1315
      %1317 = vdwg.mxu0
      %v1318 = vadd.f32 %v1252, %v1296
      %v1319 = vadd.f32 %v1253, %v1316
      %1320 = vrot.lane.b32.xlu0 %v873, 112
      %v1321 = vpop.permute.xlu0 %1320
      %1322 = vrot.lane.b32.xlu0 %v874, 112
      %v1323 = vpop.permute.xlu0 %1322
      %v1324 = vsel %vm714, %v1321, %v1323
      %v1325 = vsel %vm714, %v1323, %v1321
      %1326 = vst [vmem:[#allocation1] ss:$2 sm:$0xff] %v718
      %v1327 = vld.sshfl [vmem:[#allocation1] sm:$0xff pattern:$0x75316420]
      %v1328 = vld.sshfl [vmem:[#allocation1 + $0x8] sm:$0xff pattern:$0x75316420]
      %v1331 = vmul.f32 %v1324, %v1327
      %v1332 = vmul.f32 %v1325, %v1328
      %s1333 = scalar_lea.vmem %s1, 64
      %v1334 = vld [vmem:[%s1333] sm:$0xf]
      %v1336 = vsel %vm251, %v1334, 0
      %v1339 = vsel %vm255, %v1331, 0
      %v1342 = vsel %vm255, %v1332, 0
      %1344 = vmatpush.msra.mxu0 0.0
      %1345 = vmatpush.msra.mxu0 0.0
      %1346 = vmatpush.msra.mxu0 0.0
      %1347 = vmatpush.msra.mxu0 0.0
      %1348 = vmatpush.msra.mxu0 0.0
      %1349 = vmatpush.msra.mxu0 0.0
      %1350 = vmatpush.msra.mxu0 0.0
      %1351 = vmatpush.msra.mxu0 0.0
      %1352 = vmatpush.msra.mxu0 0.0
      %1353 = vmatpush.msra.mxu0 0.0
      %1354 = vmatpush.msra.mxu0 0.0
      %1355 = vmatpush.msra.mxu0 0.0
      %1356 = vmatpush.msra.mxu0 0.0
      %1357 = vmatpush.msra.mxu0 0.0
      %1358 = vmatpush.msra.mxu0 0.0
      %1359 = vmatpush.msra.mxu0 %v1339
      %1360 = vmatmul.f32.gmra.mxu0 %v1336
      %v1361 = vpop.f32.mrf.mxu0
      %v1362 = vadd.f32 0.0, %v1361
      %1363 = vdwg.mxu0
      %1364 = vmatpush.msra.mxu0 0.0
      %1365 = vmatpush.msra.mxu0 0.0
      %1366 = vmatpush.msra.mxu0 0.0
      %1367 = vmatpush.msra.mxu0 0.0
      %1368 = vmatpush.msra.mxu0 0.0
      %1369 = vmatpush.msra.mxu0 0.0
      %1370 = vmatpush.msra.mxu0 0.0
      %1371 = vmatpush.msra.mxu0 0.0
      %1372 = vmatpush.msra.mxu0 0.0
      %1373 = vmatpush.msra.mxu0 0.0
      %1374 = vmatpush.msra.mxu0 0.0
      %1375 = vmatpush.msra.mxu0 0.0
      %1376 = vmatpush.msra.mxu0 0.0
      %1377 = vmatpush.msra.mxu0 0.0
      %1378 = vmatpush.msra.mxu0 0.0
      %1379 = vmatpush.msra.mxu0 %v1342
      %1380 = vmatmul.f32.gmra.mxu0 %v1336
      %v1381 = vpop.f32.mrf.mxu0
      %v1382 = vadd.f32 0.0, %v1381
      %1383 = vdwg.mxu0
      %v1384 = vadd.f32 %v1318, %v1362
      %v1385 = vadd.f32 %v1319, %v1382
      %1386 = vrot.lane.b32.xlu0 %v873, 111
      %v1387 = vpop.permute.xlu0 %1386
      %1388 = vrot.lane.b32.xlu0 %v874, 111
      %v1389 = vpop.permute.xlu0 %1388
      %v1390 = vsel %vm789, %v1387, %v1389
      %v1391 = vsel %vm789, %v1389, %v1387
      %1392 = vst [vmem:[#allocation1] ss:$2 sm:$0xff] %v793
      %v1393 = vld.sshfl [vmem:[#allocation1] sm:$0xff pattern:$0x75316420]
      %v1394 = vld.sshfl [vmem:[#allocation1 + $0x8] sm:$0xff pattern:$0x75316420]
      %v1397 = vmul.f32 %v1390, %v1393
      %v1398 = vmul.f32 %v1391, %v1394
      %s1399 = scalar_lea.vmem %s1, 68
      %v1400 = vld [vmem:[%s1399] sm:$0xf]
      %v1402 = vsel %vm251, %v1400, 0
      %v1405 = vsel %vm255, %v1397, 0
      %v1408 = vsel %vm255, %v1398, 0
      %1410 = vmatpush.msra.mxu0 0.0
      %1411 = vmatpush.msra.mxu0 0.0
      %1412 = vmatpush.msra.mxu0 0.0
      %1413 = vmatpush.msra.mxu0 0.0
      %1414 = vmatpush.msra.mxu0 0.0
      %1415 = vmatpush.msra.mxu0 0.0
      %1416 = vmatpush.msra.mxu0 0.0
      %1417 = vmatpush.msra.mxu0 0.0
      %1418 = vmatpush.msra.mxu0 0.0
      %1419 = vmatpush.msra.mxu0 0.0
      %1420 = vmatpush.msra.mxu0 0.0
      %1421 = vmatpush.msra.mxu0 0.0
      %1422 = vmatpush.msra.mxu0 0.0
      %1423 = vmatpush.msra.mxu0 0.0
      %1424 = vmatpush.msra.mxu0 0.0
      %1425 = vmatpush.msra.mxu0 %v1405
      %1426 = vmatmul.f32.gmra.mxu0 %v1402
      %v1427 = vpop.f32.mrf.mxu0
      %v1428 = vadd.f32 0.0, %v1427
      %1429 = vdwg.mxu0
      %1430 = vmatpush.msra.mxu0 0.0
      %1431 = vmatpush.msra.mxu0 0.0
      %1432 = vmatpush.msra.mxu0 0.0
      %1433 = vmatpush.msra.mxu0 0.0
      %1434 = vmatpush.msra.mxu0 0.0
      %1435 = vmatpush.msra.mxu0 0.0
      %1436 = vmatpush.msra.mxu0 0.0
      %1437 = vmatpush.msra.mxu0 0.0
      %1438 = vmatpush.msra.mxu0 0.0
      %1439 = vmatpush.msra.mxu0 0.0
      %1440 = vmatpush.msra.mxu0 0.0
      %1441 = vmatpush.msra.mxu0 0.0
      %1442 = vmatpush.msra.mxu0 0.0
      %1443 = vmatpush.msra.mxu0 0.0
      %1444 = vmatpush.msra.mxu0 0.0
      %1445 = vmatpush.msra.mxu0 %v1408
      %1446 = vmatmul.f32.gmra.mxu0 %v1402
      %v1447 = vpop.f32.mrf.mxu0
      %v1448 = vadd.f32 0.0, %v1447
      %1449 = vdwg.mxu0
      %v1450 = vadd.f32 %v1384, %v1428
      %v1451 = vadd.f32 %v1385, %v1448
      %s1452 = scalar_lea.vmem %s2, 4
      %v1453 = vld [vmem:[%s1452] sm:$0xf]
      %1455 = vset.pattern.permute.xlu0 0
      %1456 = vperm.xlu0 %1455, %v1453
      %v1457 = vpop.permute.xlu0 %1456
      %v1459 = vadd.f32 %v1450, %v1457
      %v1460 = vadd.f32 %v1451, %v1457
      %vm1461 = vcmp.gt.f32.partialorder %v1459, 0.0
      %vm1462 = vcmp.gt.f32.partialorder %v1460, 0.0
      %v1463 = vmin.f32 %v1459, 0.0
      %v1464 = vmin.f32 %v1460, 0.0
      %v1465 = vmul.f32 %v1463, 1.442695
      %v1466 = vpow.pop %v1465
      %v1467 = vmul.f32 %v1464, 1.442695
      %v1468 = vpow.pop %v1467
      %v1469 = vsub.f32 %v1466, 1.0
      %v1470 = vsub.f32 %v1468, 1.0
      %v1471 = vsel %vm1461, %v1459, %v1469
      %v1472 = vsel %vm1462, %v1460, %v1470
      %1473 = vrot.lane.b32.xlu0 %v1471, 17
      %v1474 = vpop.permute.xlu0 %1473
      %1475 = vrot.lane.b32.xlu0 %v1472, 17
      %v1476 = vpop.permute.xlu0 %1475
      %v1477 = vsel %vm214, %v1474, %v1476
      %v1478 = vsel %vm214, %v1476, %v1474
      %1479 = vst [vmem:[#allocation1] ss:$2 sm:$0xff] %v217
      %v1480 = vld.sshfl [vmem:[#allocation1] sm:$0xff pattern:$0x75316420]
      %v1481 = vld.sshfl [vmem:[#allocation1 + $0x8] sm:$0xff pattern:$0x75316420]
      %v1484 = vmul.f32 %v1478, %v1480
      %v1485 = vmul.f32 %v1477, %v1481
      %s1486 = scalar_lea.vmem %s1, 72
      %v1487 = vld [vmem:[%s1486] sm:$0xf]
      %1488 = vrot.lane.b32.xlu0 %v1471, 16
      %v1489 = vpop.permute.xlu0 %1488
      %1490 = vrot.lane.b32.xlu0 %v1472, 16
      %v1491 = vpop.permute.xlu0 %1490
      %v1492 = vsel %vm236, %v1489, %v1491
      %v1493 = vsel %vm236, %v1491, %v1489
      %1494 = vst [vmem:[#allocation1] ss:$2 sm:$0xff] %v240
      %v1495 = vld.sshfl [vmem:[#allocation1] sm:$0xff pattern:$0x75316420]
      %v1496 = vld.sshfl [vmem:[#allocation1 + $0x8] sm:$0xff pattern:$0x75316420]
      %v1499 = vmul.f32 %v1493, %v1495
      %v1500 = vmul.f32 %v1492, %v1496
      %s1501 = scalar_lea.vmem %s1, 76
      %v1502 = vld [vmem:[%s1501] sm:$0xf]
      %v1504 = vsel %vm251, %v1502, 0
      %v1507 = vsel %vm255, %v1499, 0
      %v1510 = vsel %vm255, %v1500, 0
      %1512 = vmatpush.msra.mxu0 0.0
      %1513 = vmatpush.msra.mxu0 0.0
      %1514 = vmatpush.msra.mxu0 0.0
      %1515 = vmatpush.msra.mxu0 0.0
      %1516 = vmatpush.msra.mxu0 0.0
      %1517 = vmatpush.msra.mxu0 0.0
      %1518 = vmatpush.msra.mxu0 0.0
      %1519 = vmatpush.msra.mxu0 0.0
      %1520 = vmatpush.msra.mxu0 0.0
      %1521 = vmatpush.msra.mxu0 0.0
      %1522 = vmatpush.msra.mxu0 0.0
      %1523 = vmatpush.msra.mxu0 0.0
      %1524 = vmatpush.msra.mxu0 0.0
      %1525 = vmatpush.msra.mxu0 0.0
      %1526 = vmatpush.msra.mxu0 0.0
      %1527 = vmatpush.msra.mxu0 %v1507
      %1528 = vmatmul.f32.gmra.mxu0 %v1504
      %v1529 = vpop.f32.mrf.mxu0
      %v1530 = vadd.f32 0.0, %v1529
      %1531 = vdwg.mxu0
      %1532 = vmatpush.msra.mxu0 0.0
      %1533 = vmatpush.msra.mxu0 0.0
      %1534 = vmatpush.msra.mxu0 0.0
      %1535 = vmatpush.msra.mxu0 0.0
      %1536 = vmatpush.msra.mxu0 0.0
      %1537 = vmatpush.msra.mxu0 0.0
      %1538 = vmatpush.msra.mxu0 0.0
      %1539 = vmatpush.msra.mxu0 0.0
      %1540 = vmatpush.msra.mxu0 0.0
      %1541 = vmatpush.msra.mxu0 0.0
      %1542 = vmatpush.msra.mxu0 0.0
      %1543 = vmatpush.msra.mxu0 0.0
      %1544 = vmatpush.msra.mxu0 0.0
      %1545 = vmatpush.msra.mxu0 0.0
      %1546 = vmatpush.msra.mxu0 0.0
      %1547 = vmatpush.msra.mxu0 %v1510
      %1548 = vmatmul.f32.gmra.mxu0 %v1504
      %v1549 = vpop.f32.mrf.mxu0
      %v1550 = vadd.f32 0.0, %v1549
      %1551 = vdwg.mxu0
      %v1553 = vsel %vm251, %v1487, 0
      %v1556 = vsel %vm255, %v1484, 0
      %v1559 = vsel %vm255, %v1485, 0
      %1561 = vmatpush.msra.mxu0 0.0
      %1562 = vmatpush.msra.mxu0 0.0
      %1563 = vmatpush.msra.mxu0 0.0
      %1564 = vmatpush.msra.mxu0 0.0
      %1565 = vmatpush.msra.mxu0 0.0
      %1566 = vmatpush.msra.mxu0 0.0
      %1567 = vmatpush.msra.mxu0 0.0
      %1568 = vmatpush.msra.mxu0 0.0
      %1569 = vmatpush.msra.mxu0 0.0
      %1570 = vmatpush.msra.mxu0 0.0
      %1571 = vmatpush.msra.mxu0 0.0
      %1572 = vmatpush.msra.mxu0 0.0
      %1573 = vmatpush.msra.mxu0 0.0
      %1574 = vmatpush.msra.mxu0 0.0
      %1575 = vmatpush.msra.mxu0 0.0
      %1576 = vmatpush.msra.mxu0 %v1556
      %1577 = vmatmul.f32.gmra.mxu0 %v1553
      %v1578 = vpop.f32.mrf.mxu0
      %v1579 = vadd.f32 %v1530, %v1578
      %1580 = vdwg.mxu0
      %1581 = vmatpush.msra.mxu0 0.0
      %1582 = vmatpush.msra.mxu0 0.0
      %1583 = vmatpush.msra.mxu0 0.0
      %1584 = vmatpush.msra.mxu0 0.0
      %1585 = vmatpush.msra.mxu0 0.0
      %1586 = vmatpush.msra.mxu0 0.0
      %1587 = vmatpush.msra.mxu0 0.0
      %1588 = vmatpush.msra.mxu0 0.0
      %1589 = vmatpush.msra.mxu0 0.0
      %1590 = vmatpush.msra.mxu0 0.0
      %1591 = vmatpush.msra.mxu0 0.0
      %1592 = vmatpush.msra.mxu0 0.0
      %1593 = vmatpush.msra.mxu0 0.0
      %1594 = vmatpush.msra.mxu0 0.0
      %1595 = vmatpush.msra.mxu0 0.0
      %1596 = vmatpush.msra.mxu0 %v1559
      %1597 = vmatmul.f32.gmra.mxu0 %v1553
      %v1598 = vpop.f32.mrf.mxu0
      %v1599 = vadd.f32 %v1550, %v1598
      %1600 = vdwg.mxu0
      %1601 = vrot.lane.b32.xlu0 %v1471, 15
      %v1602 = vpop.permute.xlu0 %1601
      %1603 = vrot.lane.b32.xlu0 %v1472, 15
      %v1604 = vpop.permute.xlu0 %1603
      %v1605 = vsel %vm360, %v1602, %v1604
      %v1606 = vsel %vm360, %v1604, %v1602
      %1607 = vst [vmem:[#allocation1] ss:$2 sm:$0xff] %v364
      %v1608 = vld.sshfl [vmem:[#allocation1] sm:$0xff pattern:$0x75316420]
      %v1609 = vld.sshfl [vmem:[#allocation1 + $0x8] sm:$0xff pattern:$0x75316420]
      %v1612 = vmul.f32 %v1606, %v1608
      %v1613 = vmul.f32 %v1605, %v1609
      %s1614 = scalar_lea.vmem %s1, 80
      %v1615 = vld [vmem:[%s1614] sm:$0xf]
      %v1617 = vsel %vm251, %v1615, 0
      %v1620 = vsel %vm255, %v1612, 0
      %v1623 = vsel %vm255, %v1613, 0
      %1625 = vmatpush.msra.mxu0 0.0
      %1626 = vmatpush.msra.mxu0 0.0
      %1627 = vmatpush.msra.mxu0 0.0
      %1628 = vmatpush.msra.mxu0 0.0
      %1629 = vmatpush.msra.mxu0 0.0
      %1630 = vmatpush.msra.mxu0 0.0
      %1631 = vmatpush.msra.mxu0 0.0
      %1632 = vmatpush.msra.mxu0 0.0
      %1633 = vmatpush.msra.mxu0 0.0
      %1634 = vmatpush.msra.mxu0 0.0
      %1635 = vmatpush.msra.mxu0 0.0
      %1636 = vmatpush.msra.mxu0 0.0
      %1637 = vmatpush.msra.mxu0 0.0
      %1638 = vmatpush.msra.mxu0 0.0
      %1639 = vmatpush.msra.mxu0 0.0
      %1640 = vmatpush.msra.mxu0 %v1620
      %1641 = vmatmul.f32.gmra.mxu0 %v1617
      %v1642 = vpop.f32.mrf.mxu0
      %v1643 = vadd.f32 0.0, %v1642
      %1644 = vdwg.mxu0
      %1645 = vmatpush.msra.mxu0 0.0
      %1646 = vmatpush.msra.mxu0 0.0
      %1647 = vmatpush.msra.mxu0 0.0
      %1648 = vmatpush.msra.mxu0 0.0
      %1649 = vmatpush.msra.mxu0 0.0
      %1650 = vmatpush.msra.mxu0 0.0
      %1651 = vmatpush.msra.mxu0 0.0
      %1652 = vmatpush.msra.mxu0 0.0
      %1653 = vmatpush.msra.mxu0 0.0
      %1654 = vmatpush.msra.mxu0 0.0
      %1655 = vmatpush.msra.mxu0 0.0
      %1656 = vmatpush.msra.mxu0 0.0
      %1657 = vmatpush.msra.mxu0 0.0
      %1658 = vmatpush.msra.mxu0 0.0
      %1659 = vmatpush.msra.mxu0 0.0
      %1660 = vmatpush.msra.mxu0 %v1623
      %1661 = vmatmul.f32.gmra.mxu0 %v1617
      %v1662 = vpop.f32.mrf.mxu0
      %v1663 = vadd.f32 0.0, %v1662
      %1664 = vdwg.mxu0
      %v1665 = vadd.f32 %v1579, %v1643
      %v1666 = vadd.f32 %v1599, %v1663
      %1667 = vrot.lane.b32.xlu0 %v1471, 1
      %v1668 = vpop.permute.xlu0 %1667
      %1669 = vrot.lane.b32.xlu0 %v1472, 1
      %v1670 = vpop.permute.xlu0 %1669
      %v1671 = vsel %vm435, %v1668, %v1670
      %v1672 = vsel %vm435, %v1670, %v1668
      %1673 = vst [vmem:[#allocation1] ss:$2 sm:$0xff] %v439
      %v1674 = vld.sshfl [vmem:[#allocation1] sm:$0xff pattern:$0x75316420]
      %v1675 = vld.sshfl [vmem:[#allocation1 + $0x8] sm:$0xff pattern:$0x75316420]
      %v1678 = vmul.f32 %v1672, %v1674
      %v1679 = vmul.f32 %v1671, %v1675
      %s1680 = scalar_lea.vmem %s1, 84
      %v1681 = vld [vmem:[%s1680] sm:$0xf]
      %v1683 = vsel %vm251, %v1681, 0
      %v1686 = vsel %vm255, %v1678, 0
      %v1689 = vsel %vm255, %v1679, 0
      %1691 = vmatpush.msra.mxu0 0.0
      %1692 = vmatpush.msra.mxu0 0.0
      %1693 = vmatpush.msra.mxu0 0.0
      %1694 = vmatpush.msra.mxu0 0.0
      %1695 = vmatpush.msra.mxu0 0.0
      %1696 = vmatpush.msra.mxu0 0.0
      %1697 = vmatpush.msra.mxu0 0.0
      %1698 = vmatpush.msra.mxu0 0.0
      %1699 = vmatpush.msra.mxu0 0.0
      %1700 = vmatpush.msra.mxu0 0.0
      %1701 = vmatpush.msra.mxu0 0.0
      %1702 = vmatpush.msra.mxu0 0.0
      %1703 = vmatpush.msra.mxu0 0.0
      %1704 = vmatpush.msra.mxu0 0.0
      %1705 = vmatpush.msra.mxu0 0.0
      %1706 = vmatpush.msra.mxu0 %v1686
      %1707 = vmatmul.f32.gmra.mxu0 %v1683
      %v1708 = vpop.f32.mrf.mxu0
      %v1709 = vadd.f32 0.0, %v1708
      %1710 = vdwg.mxu0
      %1711 = vmatpush.msra.mxu0 0.0
      %1712 = vmatpush.msra.mxu0 0.0
      %1713 = vmatpush.msra.mxu0 0.0
      %1714 = vmatpush.msra.mxu0 0.0
      %1715 = vmatpush.msra.mxu0 0.0
      %1716 = vmatpush.msra.mxu0 0.0
      %1717 = vmatpush.msra.mxu0 0.0
      %1718 = vmatpush.msra.mxu0 0.0
      %1719 = vmatpush.msra.mxu0 0.0
      %1720 = vmatpush.msra.mxu0 0.0
      %1721 = vmatpush.msra.mxu0 0.0
      %1722 = vmatpush.msra.mxu0 0.0
      %1723 = vmatpush.msra.mxu0 0.0
      %1724 = vmatpush.msra.mxu0 0.0
      %1725 = vmatpush.msra.mxu0 0.0
      %1726 = vmatpush.msra.mxu0 %v1689
      %1727 = vmatmul.f32.gmra.mxu0 %v1683
      %v1728 = vpop.f32.mrf.mxu0
      %v1729 = vadd.f32 0.0, %v1728
      %1730 = vdwg.mxu0
      %v1731 = vadd.f32 %v1665, %v1709
      %v1732 = vadd.f32 %v1666, %v1729
      %s1733 = scalar_lea.vmem %s1, 88
      %v1734 = vld [vmem:[%s1733] sm:$0xf]
      %v1736 = vsel %vm251, %v1734, 0
      %v1739 = vsel %vm255, %v1471, 0
      %v1742 = vsel %vm255, %v1472, 0
      %1744 = vmatpush.msra.mxu0 0.0
      %1745 = vmatpush.msra.mxu0 0.0
      %1746 = vmatpush.msra.mxu0 0.0
      %1747 = vmatpush.msra.mxu0 0.0
      %1748 = vmatpush.msra.mxu0 0.0
      %1749 = vmatpush.msra.mxu0 0.0
      %1750 = vmatpush.msra.mxu0 0.0
      %1751 = vmatpush.msra.mxu0 0.0
      %1752 = vmatpush.msra.mxu0 0.0
      %1753 = vmatpush.msra.mxu0 0.0
      %1754 = vmatpush.msra.mxu0 0.0
      %1755 = vmatpush.msra.mxu0 0.0
      %1756 = vmatpush.msra.mxu0 0.0
      %1757 = vmatpush.msra.mxu0 0.0
      %1758 = vmatpush.msra.mxu0 0.0
      %1759 = vmatpush.msra.mxu0 %v1739
      %1760 = vmatmul.f32.gmra.mxu0 %v1736
      %v1761 = vpop.f32.mrf.mxu0
      %v1762 = vadd.f32 0.0, %v1761
      %1763 = vdwg.mxu0
      %1764 = vmatpush.msra.mxu0 0.0
      %1765 = vmatpush.msra.mxu0 0.0
      %1766 = vmatpush.msra.mxu0 0.0
      %1767 = vmatpush.msra.mxu0 0.0
      %1768 = vmatpush.msra.mxu0 0.0
      %1769 = vmatpush.msra.mxu0 0.0
      %1770 = vmatpush.msra.mxu0 0.0
      %1771 = vmatpush.msra.mxu0 0.0
      %1772 = vmatpush.msra.mxu0 0.0
      %1773 = vmatpush.msra.mxu0 0.0
      %1774 = vmatpush.msra.mxu0 0.0
      %1775 = vmatpush.msra.mxu0 0.0
      %1776 = vmatpush.msra.mxu0 0.0
      %1777 = vmatpush.msra.mxu0 0.0
      %1778 = vmatpush.msra.mxu0 0.0
      %1779 = vmatpush.msra.mxu0 %v1742
      %1780 = vmatmul.f32.gmra.mxu0 %v1736
      %v1781 = vpop.f32.mrf.mxu0
      %v1782 = vadd.f32 0.0, %v1781
      %1783 = vdwg.mxu0
      %v1784 = vadd.f32 %v1731, %v1762
      %v1785 = vadd.f32 %v1732, %v1782
      %1786 = vrot.lane.b32.xlu0 %v1471, 127
      %v1787 = vpop.permute.xlu0 %1786
      %1788 = vrot.lane.b32.xlu0 %v1472, 127
      %v1789 = vpop.permute.xlu0 %1788
      %v1790 = vsel %vm564, %v1787, %v1789
      %v1791 = vsel %vm564, %v1789, %v1787
      %1792 = vst [vmem:[#allocation1] ss:$2 sm:$0xff] %v568
      %v1793 = vld.sshfl [vmem:[#allocation1] sm:$0xff pattern:$0x75316420]
      %v1794 = vld.sshfl [vmem:[#allocation1 + $0x8] sm:$0xff pattern:$0x75316420]
      %v1797 = vmul.f32 %v1790, %v1793
      %v1798 = vmul.f32 %v1791, %v1794
      %s1799 = scalar_lea.vmem %s1, 92
      %v1800 = vld [vmem:[%s1799] sm:$0xf]
      %v1802 = vsel %vm251, %v1800, 0
      %v1805 = vsel %vm255, %v1797, 0
      %v1808 = vsel %vm255, %v1798, 0
      %1810 = vmatpush.msra.mxu0 0.0
      %1811 = vmatpush.msra.mxu0 0.0
      %1812 = vmatpush.msra.mxu0 0.0
      %1813 = vmatpush.msra.mxu0 0.0
      %1814 = vmatpush.msra.mxu0 0.0
      %1815 = vmatpush.msra.mxu0 0.0
      %1816 = vmatpush.msra.mxu0 0.0
      %1817 = vmatpush.msra.mxu0 0.0
      %1818 = vmatpush.msra.mxu0 0.0
      %1819 = vmatpush.msra.mxu0 0.0
      %1820 = vmatpush.msra.mxu0 0.0
      %1821 = vmatpush.msra.mxu0 0.0
      %1822 = vmatpush.msra.mxu0 0.0
      %1823 = vmatpush.msra.mxu0 0.0
      %1824 = vmatpush.msra.mxu0 0.0
      %1825 = vmatpush.msra.mxu0 %v1805
      %1826 = vmatmul.f32.gmra.mxu0 %v1802
      %v1827 = vpop.f32.mrf.mxu0
      %v1828 = vadd.f32 0.0, %v1827
      %1829 = vdwg.mxu0
      %1830 = vmatpush.msra.mxu0 0.0
      %1831 = vmatpush.msra.mxu0 0.0
      %1832 = vmatpush.msra.mxu0 0.0
      %1833 = vmatpush.msra.mxu0 0.0
      %1834 = vmatpush.msra.mxu0 0.0
      %1835 = vmatpush.msra.mxu0 0.0
      %1836 = vmatpush.msra.mxu0 0.0
      %1837 = vmatpush.msra.mxu0 0.0
      %1838 = vmatpush.msra.mxu0 0.0
      %1839 = vmatpush.msra.mxu0 0.0
      %1840 = vmatpush.msra.mxu0 0.0
      %1841 = vmatpush.msra.mxu0 0.0
      %1842 = vmatpush.msra.mxu0 0.0
      %1843 = vmatpush.msra.mxu0 0.0
      %1844 = vmatpush.msra.mxu0 0.0
      %1845 = vmatpush.msra.mxu0 %v1808
      %1846 = vmatmul.f32.gmra.mxu0 %v1802
      %v1847 = vpop.f32.mrf.mxu0
      %v1848 = vadd.f32 0.0, %v1847
      %1849 = vdwg.mxu0
      %v1850 = vadd.f32 %v1784, %v1828
      %v1851 = vadd.f32 %v1785, %v1848
      %1852 = vrot.lane.b32.xlu0 %v1471, 113
      %v1853 = vpop.permute.xlu0 %1852
      %1854 = vrot.lane.b32.xlu0 %v1472, 113
      %v1855 = vpop.permute.xlu0 %1854
      %v1856 = vsel %vm639, %v1853, %v1855
      %v1857 = vsel %vm639, %v1855, %v1853
      %1858 = vst [vmem:[#allocation1] ss:$2 sm:$0xff] %v643
      %v1859 = vld.sshfl [vmem:[#allocation1] sm:$0xff pattern:$0x75316420]
      %v1860 = vld.sshfl [vmem:[#allocation1 + $0x8] sm:$0xff pattern:$0x75316420]
      %v1863 = vmul.f32 %v1856, %v1859
      %v1864 = vmul.f32 %v1857, %v1860
      %s1865 = scalar_lea.vmem %s1, 96
      %v1866 = vld [vmem:[%s1865] sm:$0xf]
      %v1868 = vsel %vm251, %v1866, 0
      %v1871 = vsel %vm255, %v1863, 0
      %v1874 = vsel %vm255, %v1864, 0
      %1876 = vmatpush.msra.mxu0 0.0
      %1877 = vmatpush.msra.mxu0 0.0
      %1878 = vmatpush.msra.mxu0 0.0
      %1879 = vmatpush.msra.mxu0 0.0
      %1880 = vmatpush.msra.mxu0 0.0
      %1881 = vmatpush.msra.mxu0 0.0
      %1882 = vmatpush.msra.mxu0 0.0
      %1883 = vmatpush.msra.mxu0 0.0
      %1884 = vmatpush.msra.mxu0 0.0
      %1885 = vmatpush.msra.mxu0 0.0
      %1886 = vmatpush.msra.mxu0 0.0
      %1887 = vmatpush.msra.mxu0 0.0
      %1888 = vmatpush.msra.mxu0 0.0
      %1889 = vmatpush.msra.mxu0 0.0
      %1890 = vmatpush.msra.mxu0 0.0
      %1891 = vmatpush.msra.mxu0 %v1871
      %1892 = vmatmul.f32.gmra.mxu0 %v1868
      %v1893 = vpop.f32.mrf.mxu0
      %v1894 = vadd.f32 0.0, %v1893
      %1895 = vdwg.mxu0
      %1896 = vmatpush.msra.mxu0 0.0
      %1897 = vmatpush.msra.mxu0 0.0
      %1898 = vmatpush.msra.mxu0 0.0
      %1899 = vmatpush.msra.mxu0 0.0
      %1900 = vmatpush.msra.mxu0 0.0
      %1901 = vmatpush.msra.mxu0 0.0
      %1902 = vmatpush.msra.mxu0 0.0
      %1903 = vmatpush.msra.mxu0 0.0
      %1904 = vmatpush.msra.mxu0 0.0
      %1905 = vmatpush.msra.mxu0 0.0
      %1906 = vmatpush.msra.mxu0 0.0
      %1907 = vmatpush.msra.mxu0 0.0
      %1908 = vmatpush.msra.mxu0 0.0
      %1909 = vmatpush.msra.mxu0 0.0
      %1910 = vmatpush.msra.mxu0 0.0
      %1911 = vmatpush.msra.mxu0 %v1874
      %1912 = vmatmul.f32.gmra.mxu0 %v1868
      %v1913 = vpop.f32.mrf.mxu0
      %v1914 = vadd.f32 0.0, %v1913
      %1915 = vdwg.mxu0
      %v1916 = vadd.f32 %v1850, %v1894
      %v1917 = vadd.f32 %v1851, %v1914
      %1918 = vrot.lane.b32.xlu0 %v1471, 112
      %v1919 = vpop.permute.xlu0 %1918
      %1920 = vrot.lane.b32.xlu0 %v1472, 112
      %v1921 = vpop.permute.xlu0 %1920
      %v1922 = vsel %vm714, %v1919, %v1921
      %v1923 = vsel %vm714, %v1921, %v1919
      %1924 = vst [vmem:[#allocation1] ss:$2 sm:$0xff] %v718
      %v1925 = vld.sshfl [vmem:[#allocation1] sm:$0xff pattern:$0x75316420]
      %v1926 = vld.sshfl [vmem:[#allocation1 + $0x8] sm:$0xff pattern:$0x75316420]
      %v1929 = vmul.f32 %v1922, %v1925
      %v1930 = vmul.f32 %v1923, %v1926
      %s1931 = scalar_lea.vmem %s1, 100
      %v1932 = vld [vmem:[%s1931] sm:$0xf]
      %v1934 = vsel %vm251, %v1932, 0
      %v1937 = vsel %vm255, %v1929, 0
      %v1940 = vsel %vm255, %v1930, 0
      %1942 = vmatpush.msra.mxu0 0.0
      %1943 = vmatpush.msra.mxu0 0.0
      %1944 = vmatpush.msra.mxu0 0.0
      %1945 = vmatpush.msra.mxu0 0.0
      %1946 = vmatpush.msra.mxu0 0.0
      %1947 = vmatpush.msra.mxu0 0.0
      %1948 = vmatpush.msra.mxu0 0.0
      %1949 = vmatpush.msra.mxu0 0.0
      %1950 = vmatpush.msra.mxu0 0.0
      %1951 = vmatpush.msra.mxu0 0.0
      %1952 = vmatpush.msra.mxu0 0.0
      %1953 = vmatpush.msra.mxu0 0.0
      %1954 = vmatpush.msra.mxu0 0.0
      %1955 = vmatpush.msra.mxu0 0.0
      %1956 = vmatpush.msra.mxu0 0.0
      %1957 = vmatpush.msra.mxu0 %v1937
      %1958 = vmatmul.f32.gmra.mxu0 %v1934
      %v1959 = vpop.f32.mrf.mxu0
      %v1960 = vadd.f32 0.0, %v1959
      %1961 = vdwg.mxu0
      %1962 = vmatpush.msra.mxu0 0.0
      %1963 = vmatpush.msra.mxu0 0.0
      %1964 = vmatpush.msra.mxu0 0.0
      %1965 = vmatpush.msra.mxu0 0.0
      %1966 = vmatpush.msra.mxu0 0.0
      %1967 = vmatpush.msra.mxu0 0.0
      %1968 = vmatpush.msra.mxu0 0.0
      %1969 = vmatpush.msra.mxu0 0.0
      %1970 = vmatpush.msra.mxu0 0.0
      %1971 = vmatpush.msra.mxu0 0.0
      %1972 = vmatpush.msra.mxu0 0.0
      %1973 = vmatpush.msra.mxu0 0.0
      %1974 = vmatpush.msra.mxu0 0.0
      %1975 = vmatpush.msra.mxu0 0.0
      %1976 = vmatpush.msra.mxu0 0.0
      %1977 = vmatpush.msra.mxu0 %v1940
      %1978 = vmatmul.f32.gmra.mxu0 %v1934
      %v1979 = vpop.f32.mrf.mxu0
      %v1980 = vadd.f32 0.0, %v1979
      %1981 = vdwg.mxu0
      %v1982 = vadd.f32 %v1916, %v1960
      %v1983 = vadd.f32 %v1917, %v1980
      %1984 = vrot.lane.b32.xlu0 %v1471, 111
      %v1985 = vpop.permute.xlu0 %1984
      %1986 = vrot.lane.b32.xlu0 %v1472, 111
      %v1987 = vpop.permute.xlu0 %1986
      %v1988 = vsel %vm789, %v1985, %v1987
      %v1989 = vsel %vm789, %v1987, %v1985
      %1990 = vst [vmem:[#allocation1] ss:$2 sm:$0xff] %v793
      %v1991 = vld.sshfl [vmem:[#allocation1] sm:$0xff pattern:$0x75316420]
      %v1992 = vld.sshfl [vmem:[#allocation1 + $0x8] sm:$0xff pattern:$0x75316420]
      %v1995 = vmul.f32 %v1988, %v1991
      %v1996 = vmul.f32 %v1989, %v1992
      %s1997 = scalar_lea.vmem %s1, 104
      %v1998 = vld [vmem:[%s1997] sm:$0xf]
      %v2000 = vsel %vm251, %v1998, 0
      %v2003 = vsel %vm255, %v1995, 0
      %v2006 = vsel %vm255, %v1996, 0
      %2008 = vmatpush.msra.mxu0 0.0
      %2009 = vmatpush.msra.mxu0 0.0
      %2010 = vmatpush.msra.mxu0 0.0
      %2011 = vmatpush.msra.mxu0 0.0
      %2012 = vmatpush.msra.mxu0 0.0
      %2013 = vmatpush.msra.mxu0 0.0
      %2014 = vmatpush.msra.mxu0 0.0
      %2015 = vmatpush.msra.mxu0 0.0
      %2016 = vmatpush.msra.mxu0 0.0
      %2017 = vmatpush.msra.mxu0 0.0
      %2018 = vmatpush.msra.mxu0 0.0
      %2019 = vmatpush.msra.mxu0 0.0
      %2020 = vmatpush.msra.mxu0 0.0
      %2021 = vmatpush.msra.mxu0 0.0
      %2022 = vmatpush.msra.mxu0 0.0
      %2023 = vmatpush.msra.mxu0 %v2003
      %2024 = vmatmul.f32.gmra.mxu0 %v2000
      %v2025 = vpop.f32.mrf.mxu0
      %v2026 = vadd.f32 0.0, %v2025
      %2027 = vdwg.mxu0
      %2028 = vmatpush.msra.mxu0 0.0
      %2029 = vmatpush.msra.mxu0 0.0
      %2030 = vmatpush.msra.mxu0 0.0
      %2031 = vmatpush.msra.mxu0 0.0
      %2032 = vmatpush.msra.mxu0 0.0
      %2033 = vmatpush.msra.mxu0 0.0
      %2034 = vmatpush.msra.mxu0 0.0
      %2035 = vmatpush.msra.mxu0 0.0
      %2036 = vmatpush.msra.mxu0 0.0
      %2037 = vmatpush.msra.mxu0 0.0
      %2038 = vmatpush.msra.mxu0 0.0
      %2039 = vmatpush.msra.mxu0 0.0
      %2040 = vmatpush.msra.mxu0 0.0
      %2041 = vmatpush.msra.mxu0 0.0
      %2042 = vmatpush.msra.mxu0 0.0
      %2043 = vmatpush.msra.mxu0 %v2006
      %2044 = vmatmul.f32.gmra.mxu0 %v2000
      %v2045 = vpop.f32.mrf.mxu0
      %v2046 = vadd.f32 0.0, %v2045
      %2047 = vdwg.mxu0
      %v2048 = vadd.f32 %v1982, %v2026
      %v2049 = vadd.f32 %v1983, %v2046
      %s2050 = scalar_lea.vmem %s2, 8
      %v2051 = vld [vmem:[%s2050] sm:$0xf]
      %2053 = vset.pattern.permute.xlu0 0
      %2054 = vperm.xlu0 %2053, %v2051
      %v2055 = vpop.permute.xlu0 %2054
      %v2057 = vadd.f32 %v2048, %v2055
      %v2058 = vadd.f32 %v2049, %v2055
      %vm2059 = vcmp.gt.f32.partialorder %v2057, 0.0
      %vm2060 = vcmp.gt.f32.partialorder %v2058, 0.0
      %v2061 = vmin.f32 %v2057, 0.0
      %v2062 = vmin.f32 %v2058, 0.0
      %v2063 = vmul.f32 %v2061, 1.442695
      %v2064 = vpow.pop %v2063
      %v2065 = vmul.f32 %v2062, 1.442695
      %v2066 = vpow.pop %v2065
      %v2067 = vsub.f32 %v2064, 1.0
      %v2068 = vsub.f32 %v2066, 1.0
      %v2069 = vsel %vm2059, %v2057, %v2067
      %v2070 = vsel %vm2060, %v2058, %v2068
      %2071 = vrot.lane.b32.xlu0 %v2069, 17
      %v2072 = vpop.permute.xlu0 %2071
      %2073 = vrot.lane.b32.xlu0 %v2070, 17
      %v2074 = vpop.permute.xlu0 %2073
      %v2075 = vsel %vm214, %v2072, %v2074
      %v2076 = vsel %vm214, %v2074, %v2072
      %2077 = vst [vmem:[#allocation1] ss:$2 sm:$0xff] %v217
      %v2078 = vld.sshfl [vmem:[#allocation1] sm:$0xff pattern:$0x75316420]
      %v2079 = vld.sshfl [vmem:[#allocation1 + $0x8] sm:$0xff pattern:$0x75316420]
      %v2082 = vmul.f32 %v2076, %v2078
      %v2083 = vmul.f32 %v2075, %v2079
      %s2084 = scalar_lea.vmem %s1, 108
      %v2085 = vld [vmem:[%s2084] sm:$0xf]
      %2086 = vrot.lane.b32.xlu0 %v2069, 16
      %v2087 = vpop.permute.xlu0 %2086
      %2088 = vrot.lane.b32.xlu0 %v2070, 16
      %v2089 = vpop.permute.xlu0 %2088
      %v2090 = vsel %vm236, %v2087, %v2089
      %v2091 = vsel %vm236, %v2089, %v2087
      %2092 = vst [vmem:[#allocation1] ss:$2 sm:$0xff] %v240
      %v2093 = vld.sshfl [vmem:[#allocation1] sm:$0xff pattern:$0x75316420]
      %v2094 = vld.sshfl [vmem:[#allocation1 + $0x8] sm:$0xff pattern:$0x75316420]
      %v2097 = vmul.f32 %v2091, %v2093
      %v2098 = vmul.f32 %v2090, %v2094
      %s2099 = scalar_lea.vmem %s1, 112
      %v2100 = vld [vmem:[%s2099] sm:$0xf]
      %v2102 = vsel %vm251, %v2100, 0
      %v2105 = vsel %vm255, %v2097, 0
      %v2108 = vsel %vm255, %v2098, 0
      %2110 = vmatpush.msra.mxu0 0.0
      %2111 = vmatpush.msra.mxu0 0.0
      %2112 = vmatpush.msra.mxu0 0.0
      %2113 = vmatpush.msra.mxu0 0.0
      %2114 = vmatpush.msra.mxu0 0.0
      %2115 = vmatpush.msra.mxu0 0.0
      %2116 = vmatpush.msra.mxu0 0.0
      %2117 = vmatpush.msra.mxu0 0.0
      %2118 = vmatpush.msra.mxu0 0.0
      %2119 = vmatpush.msra.mxu0 0.0
      %2120 = vmatpush.msra.mxu0 0.0
      %2121 = vmatpush.msra.mxu0 0.0
      %2122 = vmatpush.msra.mxu0 0.0
      %2123 = vmatpush.msra.mxu0 0.0
      %2124 = vmatpush.msra.mxu0 0.0
      %2125 = vmatpush.msra.mxu0 %v2105
      %2126 = vmatmul.f32.gmra.mxu0 %v2102
      %v2127 = vpop.f32.mrf.mxu0
      %v2128 = vadd.f32 0.0, %v2127
      %2129 = vdwg.mxu0
      %2130 = vmatpush.msra.mxu0 0.0
      %2131 = vmatpush.msra.mxu0 0.0
      %2132 = vmatpush.msra.mxu0 0.0
      %2133 = vmatpush.msra.mxu0 0.0
      %2134 = vmatpush.msra.mxu0 0.0
      %2135 = vmatpush.msra.mxu0 0.0
      %2136 = vmatpush.msra.mxu0 0.0
      %2137 = vmatpush.msra.mxu0 0.0
      %2138 = vmatpush.msra.mxu0 0.0
      %2139 = vmatpush.msra.mxu0 0.0
      %2140 = vmatpush.msra.mxu0 0.0
      %2141 = vmatpush.msra.mxu0 0.0
      %2142 = vmatpush.msra.mxu0 0.0
      %2143 = vmatpush.msra.mxu0 0.0
      %2144 = vmatpush.msra.mxu0 0.0
      %2145 = vmatpush.msra.mxu0 %v2108
      %2146 = vmatmul.f32.gmra.mxu0 %v2102
      %v2147 = vpop.f32.mrf.mxu0
      %v2148 = vadd.f32 0.0, %v2147
      %2149 = vdwg.mxu0
      %v2151 = vsel %vm251, %v2085, 0
      %v2154 = vsel %vm255, %v2082, 0
      %v2157 = vsel %vm255, %v2083, 0
      %2159 = vmatpush.msra.mxu0 0.0
      %2160 = vmatpush.msra.mxu0 0.0
      %2161 = vmatpush.msra.mxu0 0.0
      %2162 = vmatpush.msra.mxu0 0.0
      %2163 = vmatpush.msra.mxu0 0.0
      %2164 = vmatpush.msra.mxu0 0.0
      %2165 = vmatpush.msra.mxu0 0.0
      %2166 = vmatpush.msra.mxu0 0.0
      %2167 = vmatpush.msra.mxu0 0.0
      %2168 = vmatpush.msra.mxu0 0.0
      %2169 = vmatpush.msra.mxu0 0.0
      %2170 = vmatpush.msra.mxu0 0.0
      %2171 = vmatpush.msra.mxu0 0.0
      %2172 = vmatpush.msra.mxu0 0.0
      %2173 = vmatpush.msra.mxu0 0.0
      %2174 = vmatpush.msra.mxu0 %v2154
      %2175 = vmatmul.f32.gmra.mxu0 %v2151
      %v2176 = vpop.f32.mrf.mxu0
      %v2177 = vadd.f32 %v2128, %v2176
      %2178 = vdwg.mxu0
      %2179 = vmatpush.msra.mxu0 0.0
      %2180 = vmatpush.msra.mxu0 0.0
      %2181 = vmatpush.msra.mxu0 0.0
      %2182 = vmatpush.msra.mxu0 0.0
      %2183 = vmatpush.msra.mxu0 0.0
      %2184 = vmatpush.msra.mxu0 0.0
      %2185 = vmatpush.msra.mxu0 0.0
      %2186 = vmatpush.msra.mxu0 0.0
      %2187 = vmatpush.msra.mxu0 0.0
      %2188 = vmatpush.msra.mxu0 0.0
      %2189 = vmatpush.msra.mxu0 0.0
      %2190 = vmatpush.msra.mxu0 0.0
      %2191 = vmatpush.msra.mxu0 0.0
      %2192 = vmatpush.msra.mxu0 0.0
      %2193 = vmatpush.msra.mxu0 0.0
      %2194 = vmatpush.msra.mxu0 %v2157
      %2195 = vmatmul.f32.gmra.mxu0 %v2151
      %v2196 = vpop.f32.mrf.mxu0
      %v2197 = vadd.f32 %v2148, %v2196
      %2198 = vdwg.mxu0
      %2199 = vrot.lane.b32.xlu0 %v2069, 15
      %v2200 = vpop.permute.xlu0 %2199
      %2201 = vrot.lane.b32.xlu0 %v2070, 15
      %v2202 = vpop.permute.xlu0 %2201
      %v2203 = vsel %vm360, %v2200, %v2202
      %v2204 = vsel %vm360, %v2202, %v2200
      %2205 = vst [vmem:[#allocation1] ss:$2 sm:$0xff] %v364
      %v2206 = vld.sshfl [vmem:[#allocation1] sm:$0xff pattern:$0x75316420]
      %v2207 = vld.sshfl [vmem:[#allocation1 + $0x8] sm:$0xff pattern:$0x75316420]
      %v2210 = vmul.f32 %v2204, %v2206
      %v2211 = vmul.f32 %v2203, %v2207
      %s2212 = scalar_lea.vmem %s1, 116
      %v2213 = vld [vmem:[%s2212] sm:$0xf]
      %v2215 = vsel %vm251, %v2213, 0
      %v2218 = vsel %vm255, %v2210, 0
      %v2221 = vsel %vm255, %v2211, 0
      %2223 = vmatpush.msra.mxu0 0.0
      %2224 = vmatpush.msra.mxu0 0.0
      %2225 = vmatpush.msra.mxu0 0.0
      %2226 = vmatpush.msra.mxu0 0.0
      %2227 = vmatpush.msra.mxu0 0.0
      %2228 = vmatpush.msra.mxu0 0.0
      %2229 = vmatpush.msra.mxu0 0.0
      %2230 = vmatpush.msra.mxu0 0.0
      %2231 = vmatpush.msra.mxu0 0.0
      %2232 = vmatpush.msra.mxu0 0.0
      %2233 = vmatpush.msra.mxu0 0.0
      %2234 = vmatpush.msra.mxu0 0.0
      %2235 = vmatpush.msra.mxu0 0.0
      %2236 = vmatpush.msra.mxu0 0.0
      %2237 = vmatpush.msra.mxu0 0.0
      %2238 = vmatpush.msra.mxu0 %v2218
      %2239 = vmatmul.f32.gmra.mxu0 %v2215
      %v2240 = vpop.f32.mrf.mxu0
      %v2241 = vadd.f32 0.0, %v2240
      %2242 = vdwg.mxu0
      %2243 = vmatpush.msra.mxu0 0.0
      %2244 = vmatpush.msra.mxu0 0.0
      %2245 = vmatpush.msra.mxu0 0.0
      %2246 = vmatpush.msra.mxu0 0.0
      %2247 = vmatpush.msra.mxu0 0.0
      %2248 = vmatpush.msra.mxu0 0.0
      %2249 = vmatpush.msra.mxu0 0.0
      %2250 = vmatpush.msra.mxu0 0.0
      %2251 = vmatpush.msra.mxu0 0.0
      %2252 = vmatpush.msra.mxu0 0.0
      %2253 = vmatpush.msra.mxu0 0.0
      %2254 = vmatpush.msra.mxu0 0.0
      %2255 = vmatpush.msra.mxu0 0.0
      %2256 = vmatpush.msra.mxu0 0.0
      %2257 = vmatpush.msra.mxu0 0.0
      %2258 = vmatpush.msra.mxu0 %v2221
      %2259 = vmatmul.f32.gmra.mxu0 %v2215
      %v2260 = vpop.f32.mrf.mxu0
      %v2261 = vadd.f32 0.0, %v2260
      %2262 = vdwg.mxu0
      %v2263 = vadd.f32 %v2177, %v2241
      %v2264 = vadd.f32 %v2197, %v2261
      %2265 = vrot.lane.b32.xlu0 %v2069, 1
      %v2266 = vpop.permute.xlu0 %2265
      %2267 = vrot.lane.b32.xlu0 %v2070, 1
      %v2268 = vpop.permute.xlu0 %2267
      %v2269 = vsel %vm435, %v2266, %v2268
      %v2270 = vsel %vm435, %v2268, %v2266
      %2271 = vst [vmem:[#allocation1] ss:$2 sm:$0xff] %v439
      %v2272 = vld.sshfl [vmem:[#allocation1] sm:$0xff pattern:$0x75316420]
      %v2273 = vld.sshfl [vmem:[#allocation1 + $0x8] sm:$0xff pattern:$0x75316420]
      %v2276 = vmul.f32 %v2270, %v2272
      %v2277 = vmul.f32 %v2269, %v2273
      %s2278 = scalar_lea.vmem %s1, 120
      %v2279 = vld [vmem:[%s2278] sm:$0xf]
      %v2281 = vsel %vm251, %v2279, 0
      %v2284 = vsel %vm255, %v2276, 0
      %v2287 = vsel %vm255, %v2277, 0
      %2289 = vmatpush.msra.mxu0 0.0
      %2290 = vmatpush.msra.mxu0 0.0
      %2291 = vmatpush.msra.mxu0 0.0
      %2292 = vmatpush.msra.mxu0 0.0
      %2293 = vmatpush.msra.mxu0 0.0
      %2294 = vmatpush.msra.mxu0 0.0
      %2295 = vmatpush.msra.mxu0 0.0
      %2296 = vmatpush.msra.mxu0 0.0
      %2297 = vmatpush.msra.mxu0 0.0
      %2298 = vmatpush.msra.mxu0 0.0
      %2299 = vmatpush.msra.mxu0 0.0
      %2300 = vmatpush.msra.mxu0 0.0
      %2301 = vmatpush.msra.mxu0 0.0
      %2302 = vmatpush.msra.mxu0 0.0
      %2303 = vmatpush.msra.mxu0 0.0
      %2304 = vmatpush.msra.mxu0 %v2284
      %2305 = vmatmul.f32.gmra.mxu0 %v2281
      %v2306 = vpop.f32.mrf.mxu0
      %v2307 = vadd.f32 0.0, %v2306
      %2308 = vdwg.mxu0
      %2309 = vmatpush.msra.mxu0 0.0
      %2310 = vmatpush.msra.mxu0 0.0
      %2311 = vmatpush.msra.mxu0 0.0
      %2312 = vmatpush.msra.mxu0 0.0
      %2313 = vmatpush.msra.mxu0 0.0
      %2314 = vmatpush.msra.mxu0 0.0
      %2315 = vmatpush.msra.mxu0 0.0
      %2316 = vmatpush.msra.mxu0 0.0
      %2317 = vmatpush.msra.mxu0 0.0
      %2318 = vmatpush.msra.mxu0 0.0
      %2319 = vmatpush.msra.mxu0 0.0
      %2320 = vmatpush.msra.mxu0 0.0
      %2321 = vmatpush.msra.mxu0 0.0
      %2322 = vmatpush.msra.mxu0 0.0
      %2323 = vmatpush.msra.mxu0 0.0
      %2324 = vmatpush.msra.mxu0 %v2287
      %2325 = vmatmul.f32.gmra.mxu0 %v2281
      %v2326 = vpop.f32.mrf.mxu0
      %v2327 = vadd.f32 0.0, %v2326
      %2328 = vdwg.mxu0
      %v2329 = vadd.f32 %v2263, %v2307
      %v2330 = vadd.f32 %v2264, %v2327
      %s2331 = scalar_lea.vmem %s1, 124
      %v2332 = vld [vmem:[%s2331] sm:$0xf]
      %v2334 = vsel %vm251, %v2332, 0
      %v2337 = vsel %vm255, %v2069, 0
      %v2340 = vsel %vm255, %v2070, 0
      %2342 = vmatpush.msra.mxu0 0.0
      %2343 = vmatpush.msra.mxu0 0.0
      %2344 = vmatpush.msra.mxu0 0.0
      %2345 = vmatpush.msra.mxu0 0.0
      %2346 = vmatpush.msra.mxu0 0.0
      %2347 = vmatpush.msra.mxu0 0.0
      %2348 = vmatpush.msra.mxu0 0.0
      %2349 = vmatpush.msra.mxu0 0.0
      %2350 = vmatpush.msra.mxu0 0.0
      %2351 = vmatpush.msra.mxu0 0.0
      %2352 = vmatpush.msra.mxu0 0.0
      %2353 = vmatpush.msra.mxu0 0.0
      %2354 = vmatpush.msra.mxu0 0.0
      %2355 = vmatpush.msra.mxu0 0.0
      %2356 = vmatpush.msra.mxu0 0.0
      %2357 = vmatpush.msra.mxu0 %v2337
      %2358 = vmatmul.f32.gmra.mxu0 %v2334
      %v2359 = vpop.f32.mrf.mxu0
      %v2360 = vadd.f32 0.0, %v2359
      %2361 = vdwg.mxu0
      %2362 = vmatpush.msra.mxu0 0.0
      %2363 = vmatpush.msra.mxu0 0.0
      %2364 = vmatpush.msra.mxu0 0.0
      %2365 = vmatpush.msra.mxu0 0.0
      %2366 = vmatpush.msra.mxu0 0.0
      %2367 = vmatpush.msra.mxu0 0.0
      %2368 = vmatpush.msra.mxu0 0.0
      %2369 = vmatpush.msra.mxu0 0.0
      %2370 = vmatpush.msra.mxu0 0.0
      %2371 = vmatpush.msra.mxu0 0.0
      %2372 = vmatpush.msra.mxu0 0.0
      %2373 = vmatpush.msra.mxu0 0.0
      %2374 = vmatpush.msra.mxu0 0.0
      %2375 = vmatpush.msra.mxu0 0.0
      %2376 = vmatpush.msra.mxu0 0.0
      %2377 = vmatpush.msra.mxu0 %v2340
      %2378 = vmatmul.f32.gmra.mxu0 %v2334
      %v2379 = vpop.f32.mrf.mxu0
      %v2380 = vadd.f32 0.0, %v2379
      %2381 = vdwg.mxu0
      %v2382 = vadd.f32 %v2329, %v2360
      %v2383 = vadd.f32 %v2330, %v2380
      %2384 = vrot.lane.b32.xlu0 %v2069, 127
      %v2385 = vpop.permute.xlu0 %2384
      %2386 = vrot.lane.b32.xlu0 %v2070, 127
      %v2387 = vpop.permute.xlu0 %2386
      %v2388 = vsel %vm564, %v2385, %v2387
      %v2389 = vsel %vm564, %v2387, %v2385
      %2390 = vst [vmem:[#allocation1] ss:$2 sm:$0xff] %v568
      %v2391 = vld.sshfl [vmem:[#allocation1] sm:$0xff pattern:$0x75316420]
      %v2392 = vld.sshfl [vmem:[#allocation1 + $0x8] sm:$0xff pattern:$0x75316420]
      %v2395 = vmul.f32 %v2388, %v2391
      %v2396 = vmul.f32 %v2389, %v2392
      %s2397 = scalar_lea.vmem %s1, 128
      %v2398 = vld [vmem:[%s2397] sm:$0xf]
      %v2400 = vsel %vm251, %v2398, 0
      %v2403 = vsel %vm255, %v2395, 0
      %v2406 = vsel %vm255, %v2396, 0
      %2408 = vmatpush.msra.mxu0 0.0
      %2409 = vmatpush.msra.mxu0 0.0
      %2410 = vmatpush.msra.mxu0 0.0
      %2411 = vmatpush.msra.mxu0 0.0
      %2412 = vmatpush.msra.mxu0 0.0
      %2413 = vmatpush.msra.mxu0 0.0
      %2414 = vmatpush.msra.mxu0 0.0
      %2415 = vmatpush.msra.mxu0 0.0
      %2416 = vmatpush.msra.mxu0 0.0
      %2417 = vmatpush.msra.mxu0 0.0
      %2418 = vmatpush.msra.mxu0 0.0
      %2419 = vmatpush.msra.mxu0 0.0
      %2420 = vmatpush.msra.mxu0 0.0
      %2421 = vmatpush.msra.mxu0 0.0
      %2422 = vmatpush.msra.mxu0 0.0
      %2423 = vmatpush.msra.mxu0 %v2403
      %2424 = vmatmul.f32.gmra.mxu0 %v2400
      %v2425 = vpop.f32.mrf.mxu0
      %v2426 = vadd.f32 0.0, %v2425
      %2427 = vdwg.mxu0
      %2428 = vmatpush.msra.mxu0 0.0
      %2429 = vmatpush.msra.mxu0 0.0
      %2430 = vmatpush.msra.mxu0 0.0
      %2431 = vmatpush.msra.mxu0 0.0
      %2432 = vmatpush.msra.mxu0 0.0
      %2433 = vmatpush.msra.mxu0 0.0
      %2434 = vmatpush.msra.mxu0 0.0
      %2435 = vmatpush.msra.mxu0 0.0
      %2436 = vmatpush.msra.mxu0 0.0
      %2437 = vmatpush.msra.mxu0 0.0
      %2438 = vmatpush.msra.mxu0 0.0
      %2439 = vmatpush.msra.mxu0 0.0
      %2440 = vmatpush.msra.mxu0 0.0
      %2441 = vmatpush.msra.mxu0 0.0
      %2442 = vmatpush.msra.mxu0 0.0
      %2443 = vmatpush.msra.mxu0 %v2406
      %2444 = vmatmul.f32.gmra.mxu0 %v2400
      %v2445 = vpop.f32.mrf.mxu0
      %v2446 = vadd.f32 0.0, %v2445
      %2447 = vdwg.mxu0
      %v2448 = vadd.f32 %v2382, %v2426
      %v2449 = vadd.f32 %v2383, %v2446
      %2450 = vrot.lane.b32.xlu0 %v2069, 113
      %v2451 = vpop.permute.xlu0 %2450
      %2452 = vrot.lane.b32.xlu0 %v2070, 113
      %v2453 = vpop.permute.xlu0 %2452
      %v2454 = vsel %vm639, %v2451, %v2453
      %v2455 = vsel %vm639, %v2453, %v2451
      %2456 = vst [vmem:[#allocation1] ss:$2 sm:$0xff] %v643
      %v2457 = vld.sshfl [vmem:[#allocation1] sm:$0xff pattern:$0x75316420]
      %v2458 = vld.sshfl [vmem:[#allocation1 + $0x8] sm:$0xff pattern:$0x75316420]
      %v2461 = vmul.f32 %v2454, %v2457
      %v2462 = vmul.f32 %v2455, %v2458
      %s2463 = scalar_lea.vmem %s1, 132
      %v2464 = vld [vmem:[%s2463] sm:$0xf]
      %v2466 = vsel %vm251, %v2464, 0
      %v2469 = vsel %vm255, %v2461, 0
      %v2472 = vsel %vm255, %v2462, 0
      %2474 = vmatpush.msra.mxu0 0.0
      %2475 = vmatpush.msra.mxu0 0.0
      %2476 = vmatpush.msra.mxu0 0.0
      %2477 = vmatpush.msra.mxu0 0.0
      %2478 = vmatpush.msra.mxu0 0.0
      %2479 = vmatpush.msra.mxu0 0.0
      %2480 = vmatpush.msra.mxu0 0.0
      %2481 = vmatpush.msra.mxu0 0.0
      %2482 = vmatpush.msra.mxu0 0.0
      %2483 = vmatpush.msra.mxu0 0.0
      %2484 = vmatpush.msra.mxu0 0.0
      %2485 = vmatpush.msra.mxu0 0.0
      %2486 = vmatpush.msra.mxu0 0.0
      %2487 = vmatpush.msra.mxu0 0.0
      %2488 = vmatpush.msra.mxu0 0.0
      %2489 = vmatpush.msra.mxu0 %v2469
      %2490 = vmatmul.f32.gmra.mxu0 %v2466
      %v2491 = vpop.f32.mrf.mxu0
      %v2492 = vadd.f32 0.0, %v2491
      %2493 = vdwg.mxu0
      %2494 = vmatpush.msra.mxu0 0.0
      %2495 = vmatpush.msra.mxu0 0.0
      %2496 = vmatpush.msra.mxu0 0.0
      %2497 = vmatpush.msra.mxu0 0.0
      %2498 = vmatpush.msra.mxu0 0.0
      %2499 = vmatpush.msra.mxu0 0.0
      %2500 = vmatpush.msra.mxu0 0.0
      %2501 = vmatpush.msra.mxu0 0.0
      %2502 = vmatpush.msra.mxu0 0.0
      %2503 = vmatpush.msra.mxu0 0.0
      %2504 = vmatpush.msra.mxu0 0.0
      %2505 = vmatpush.msra.mxu0 0.0
      %2506 = vmatpush.msra.mxu0 0.0
      %2507 = vmatpush.msra.mxu0 0.0
      %2508 = vmatpush.msra.mxu0 0.0
      %2509 = vmatpush.msra.mxu0 %v2472
      %2510 = vmatmul.f32.gmra.mxu0 %v2466
      %v2511 = vpop.f32.mrf.mxu0
      %v2512 = vadd.f32 0.0, %v2511
      %2513 = vdwg.mxu0
      %v2514 = vadd.f32 %v2448, %v2492
      %v2515 = vadd.f32 %v2449, %v2512
      %2516 = vrot.lane.b32.xlu0 %v2069, 112
      %v2517 = vpop.permute.xlu0 %2516
      %2518 = vrot.lane.b32.xlu0 %v2070, 112
      %v2519 = vpop.permute.xlu0 %2518
      %v2520 = vsel %vm714, %v2517, %v2519
      %v2521 = vsel %vm714, %v2519, %v2517
      %2522 = vst [vmem:[#allocation1] ss:$2 sm:$0xff] %v718
      %v2523 = vld.sshfl [vmem:[#allocation1] sm:$0xff pattern:$0x75316420]
      %v2524 = vld.sshfl [vmem:[#allocation1 + $0x8] sm:$0xff pattern:$0x75316420]
      %v2527 = vmul.f32 %v2520, %v2523
      %v2528 = vmul.f32 %v2521, %v2524
      %s2529 = scalar_lea.vmem %s1, 136
      %v2530 = vld [vmem:[%s2529] sm:$0xf]
      %v2532 = vsel %vm251, %v2530, 0
      %v2535 = vsel %vm255, %v2527, 0
      %v2538 = vsel %vm255, %v2528, 0
      %2540 = vmatpush.msra.mxu0 0.0
      %2541 = vmatpush.msra.mxu0 0.0
      %2542 = vmatpush.msra.mxu0 0.0
      %2543 = vmatpush.msra.mxu0 0.0
      %2544 = vmatpush.msra.mxu0 0.0
      %2545 = vmatpush.msra.mxu0 0.0
      %2546 = vmatpush.msra.mxu0 0.0
      %2547 = vmatpush.msra.mxu0 0.0
      %2548 = vmatpush.msra.mxu0 0.0
      %2549 = vmatpush.msra.mxu0 0.0
      %2550 = vmatpush.msra.mxu0 0.0
      %2551 = vmatpush.msra.mxu0 0.0
      %2552 = vmatpush.msra.mxu0 0.0
      %2553 = vmatpush.msra.mxu0 0.0
      %2554 = vmatpush.msra.mxu0 0.0
      %2555 = vmatpush.msra.mxu0 %v2535
      %2556 = vmatmul.f32.gmra.mxu0 %v2532
      %v2557 = vpop.f32.mrf.mxu0
      %v2558 = vadd.f32 0.0, %v2557
      %2559 = vdwg.mxu0
      %2560 = vmatpush.msra.mxu0 0.0
      %2561 = vmatpush.msra.mxu0 0.0
      %2562 = vmatpush.msra.mxu0 0.0
      %2563 = vmatpush.msra.mxu0 0.0
      %2564 = vmatpush.msra.mxu0 0.0
      %2565 = vmatpush.msra.mxu0 0.0
      %2566 = vmatpush.msra.mxu0 0.0
      %2567 = vmatpush.msra.mxu0 0.0
      %2568 = vmatpush.msra.mxu0 0.0
      %2569 = vmatpush.msra.mxu0 0.0
      %2570 = vmatpush.msra.mxu0 0.0
      %2571 = vmatpush.msra.mxu0 0.0
      %2572 = vmatpush.msra.mxu0 0.0
      %2573 = vmatpush.msra.mxu0 0.0
      %2574 = vmatpush.msra.mxu0 0.0
      %2575 = vmatpush.msra.mxu0 %v2538
      %2576 = vmatmul.f32.gmra.mxu0 %v2532
      %v2577 = vpop.f32.mrf.mxu0
      %v2578 = vadd.f32 0.0, %v2577
      %2579 = vdwg.mxu0
      %v2580 = vadd.f32 %v2514, %v2558
      %v2581 = vadd.f32 %v2515, %v2578
      %2582 = vrot.lane.b32.xlu0 %v2069, 111
      %v2583 = vpop.permute.xlu0 %2582
      %2584 = vrot.lane.b32.xlu0 %v2070, 111
      %v2585 = vpop.permute.xlu0 %2584
      %v2586 = vsel %vm789, %v2583, %v2585
      %v2587 = vsel %vm789, %v2585, %v2583
      %2588 = vst [vmem:[#allocation1] ss:$2 sm:$0xff] %v793
      %v2589 = vld.sshfl [vmem:[#allocation1] sm:$0xff pattern:$0x75316420]
      %v2590 = vld.sshfl [vmem:[#allocation1 + $0x8] sm:$0xff pattern:$0x75316420]
      %v2593 = vmul.f32 %v2586, %v2589
      %v2594 = vmul.f32 %v2587, %v2590
      %s2595 = scalar_lea.vmem %s1, 140
      %v2596 = vld [vmem:[%s2595] sm:$0xf]
      %v2598 = vsel %vm251, %v2596, 0
      %v2601 = vsel %vm255, %v2593, 0
      %v2604 = vsel %vm255, %v2594, 0
      %2606 = vmatpush.msra.mxu0 0.0
      %2607 = vmatpush.msra.mxu0 0.0
      %2608 = vmatpush.msra.mxu0 0.0
      %2609 = vmatpush.msra.mxu0 0.0
      %2610 = vmatpush.msra.mxu0 0.0
      %2611 = vmatpush.msra.mxu0 0.0
      %2612 = vmatpush.msra.mxu0 0.0
      %2613 = vmatpush.msra.mxu0 0.0
      %2614 = vmatpush.msra.mxu0 0.0
      %2615 = vmatpush.msra.mxu0 0.0
      %2616 = vmatpush.msra.mxu0 0.0
      %2617 = vmatpush.msra.mxu0 0.0
      %2618 = vmatpush.msra.mxu0 0.0
      %2619 = vmatpush.msra.mxu0 0.0
      %2620 = vmatpush.msra.mxu0 0.0
      %2621 = vmatpush.msra.mxu0 %v2601
      %2622 = vmatmul.f32.gmra.mxu0 %v2598
      %v2623 = vpop.f32.mrf.mxu0
      %v2624 = vadd.f32 0.0, %v2623
      %2625 = vdwg.mxu0
      %2626 = vmatpush.msra.mxu0 0.0
      %2627 = vmatpush.msra.mxu0 0.0
      %2628 = vmatpush.msra.mxu0 0.0
      %2629 = vmatpush.msra.mxu0 0.0
      %2630 = vmatpush.msra.mxu0 0.0
      %2631 = vmatpush.msra.mxu0 0.0
      %2632 = vmatpush.msra.mxu0 0.0
      %2633 = vmatpush.msra.mxu0 0.0
      %2634 = vmatpush.msra.mxu0 0.0
      %2635 = vmatpush.msra.mxu0 0.0
      %2636 = vmatpush.msra.mxu0 0.0
      %2637 = vmatpush.msra.mxu0 0.0
      %2638 = vmatpush.msra.mxu0 0.0
      %2639 = vmatpush.msra.mxu0 0.0
      %2640 = vmatpush.msra.mxu0 0.0
      %2641 = vmatpush.msra.mxu0 %v2604
      %2642 = vmatmul.f32.gmra.mxu0 %v2598
      %v2643 = vpop.f32.mrf.mxu0
      %v2644 = vadd.f32 0.0, %v2643
      %2645 = vdwg.mxu0
      %v2646 = vadd.f32 %v2580, %v2624
      %v2647 = vadd.f32 %v2581, %v2644
      %s2648 = scalar_lea.vmem %s2, 12
      %v2649 = vld [vmem:[%s2648] sm:$0xf]
      %2651 = vset.pattern.permute.xlu0 0
      %2652 = vperm.xlu0 %2651, %v2649
      %v2653 = vpop.permute.xlu0 %2652
      %v2655 = vadd.f32 %v2646, %v2653
      %v2656 = vadd.f32 %v2647, %v2653
      %vm2657 = vcmp.gt.f32.partialorder %v2655, 0.0
      %vm2658 = vcmp.gt.f32.partialorder %v2656, 0.0
      %v2659 = vmin.f32 %v2655, 0.0
      %v2660 = vmin.f32 %v2656, 0.0
      %v2661 = vmul.f32 %v2659, 1.442695
      %v2662 = vpow.pop %v2661
      %v2663 = vmul.f32 %v2660, 1.442695
      %v2664 = vpow.pop %v2663
      %v2665 = vsub.f32 %v2662, 1.0
      %v2666 = vsub.f32 %v2664, 1.0
      %v2667 = vsel %vm2657, %v2655, %v2665
      %v2668 = vsel %vm2658, %v2656, %v2666
      %2669 = vrot.lane.b32.xlu0 %v2667, 17
      %v2670 = vpop.permute.xlu0 %2669
      %2671 = vrot.lane.b32.xlu0 %v2668, 17
      %v2672 = vpop.permute.xlu0 %2671
      %v2673 = vsel %vm214, %v2670, %v2672
      %v2674 = vsel %vm214, %v2672, %v2670
      %2675 = vst [vmem:[#allocation1] ss:$2 sm:$0xff] %v217
      %v2676 = vld.sshfl [vmem:[#allocation1] sm:$0xff pattern:$0x75316420]
      %v2677 = vld.sshfl [vmem:[#allocation1 + $0x8] sm:$0xff pattern:$0x75316420]
      %v2680 = vmul.f32 %v2674, %v2676
      %v2681 = vmul.f32 %v2673, %v2677
      %s2682 = scalar_lea.vmem %s1, 144
      %v2683 = vld [vmem:[%s2682] sm:$0xf]
      %2684 = vrot.lane.b32.xlu0 %v2667, 16
      %v2685 = vpop.permute.xlu0 %2684
      %2686 = vrot.lane.b32.xlu0 %v2668, 16
      %v2687 = vpop.permute.xlu0 %2686
      %v2688 = vsel %vm236, %v2685, %v2687
      %v2689 = vsel %vm236, %v2687, %v2685
      %2690 = vst [vmem:[#allocation1] ss:$2 sm:$0xff] %v240
      %v2691 = vld.sshfl [vmem:[#allocation1] sm:$0xff pattern:$0x75316420]
      %v2692 = vld.sshfl [vmem:[#allocation1 + $0x8] sm:$0xff pattern:$0x75316420]
      %v2695 = vmul.f32 %v2689, %v2691
      %v2696 = vmul.f32 %v2688, %v2692
      %s2697 = scalar_lea.vmem %s1, 148
      %v2698 = vld [vmem:[%s2697] sm:$0xf]
      %v2700 = vsel %vm251, %v2698, 0
      %v2703 = vsel %vm255, %v2695, 0
      %v2706 = vsel %vm255, %v2696, 0
      %2708 = vmatpush.msra.mxu0 0.0
      %2709 = vmatpush.msra.mxu0 0.0
      %2710 = vmatpush.msra.mxu0 0.0
      %2711 = vmatpush.msra.mxu0 0.0
      %2712 = vmatpush.msra.mxu0 0.0
      %2713 = vmatpush.msra.mxu0 0.0
      %2714 = vmatpush.msra.mxu0 0.0
      %2715 = vmatpush.msra.mxu0 0.0
      %2716 = vmatpush.msra.mxu0 0.0
      %2717 = vmatpush.msra.mxu0 0.0
      %2718 = vmatpush.msra.mxu0 0.0
      %2719 = vmatpush.msra.mxu0 0.0
      %2720 = vmatpush.msra.mxu0 0.0
      %2721 = vmatpush.msra.mxu0 0.0
      %2722 = vmatpush.msra.mxu0 0.0
      %2723 = vmatpush.msra.mxu0 %v2703
      %2724 = vmatmul.f32.gmra.mxu0 %v2700
      %v2725 = vpop.f32.mrf.mxu0
      %v2726 = vadd.f32 0.0, %v2725
      %2727 = vdwg.mxu0
      %2728 = vmatpush.msra.mxu0 0.0
      %2729 = vmatpush.msra.mxu0 0.0
      %2730 = vmatpush.msra.mxu0 0.0
      %2731 = vmatpush.msra.mxu0 0.0
      %2732 = vmatpush.msra.mxu0 0.0
      %2733 = vmatpush.msra.mxu0 0.0
      %2734 = vmatpush.msra.mxu0 0.0
      %2735 = vmatpush.msra.mxu0 0.0
      %2736 = vmatpush.msra.mxu0 0.0
      %2737 = vmatpush.msra.mxu0 0.0
      %2738 = vmatpush.msra.mxu0 0.0
      %2739 = vmatpush.msra.mxu0 0.0
      %2740 = vmatpush.msra.mxu0 0.0
      %2741 = vmatpush.msra.mxu0 0.0
      %2742 = vmatpush.msra.mxu0 0.0
      %2743 = vmatpush.msra.mxu0 %v2706
      %2744 = vmatmul.f32.gmra.mxu0 %v2700
      %v2745 = vpop.f32.mrf.mxu0
      %v2746 = vadd.f32 0.0, %v2745
      %2747 = vdwg.mxu0
      %v2749 = vsel %vm251, %v2683, 0
      %v2752 = vsel %vm255, %v2680, 0
      %v2755 = vsel %vm255, %v2681, 0
      %2757 = vmatpush.msra.mxu0 0.0
      %2758 = vmatpush.msra.mxu0 0.0
      %2759 = vmatpush.msra.mxu0 0.0
      %2760 = vmatpush.msra.mxu0 0.0
      %2761 = vmatpush.msra.mxu0 0.0
      %2762 = vmatpush.msra.mxu0 0.0
      %2763 = vmatpush.msra.mxu0 0.0
      %2764 = vmatpush.msra.mxu0 0.0
      %2765 = vmatpush.msra.mxu0 0.0
      %2766 = vmatpush.msra.mxu0 0.0
      %2767 = vmatpush.msra.mxu0 0.0
      %2768 = vmatpush.msra.mxu0 0.0
      %2769 = vmatpush.msra.mxu0 0.0
      %2770 = vmatpush.msra.mxu0 0.0
      %2771 = vmatpush.msra.mxu0 0.0
      %2772 = vmatpush.msra.mxu0 %v2752
      %2773 = vmatmul.f32.gmra.mxu0 %v2749
      %v2774 = vpop.f32.mrf.mxu0
      %v2775 = vadd.f32 %v2726, %v2774
      %2776 = vdwg.mxu0
      %2777 = vmatpush.msra.mxu0 0.0
      %2778 = vmatpush.msra.mxu0 0.0
      %2779 = vmatpush.msra.mxu0 0.0
      %2780 = vmatpush.msra.mxu0 0.0
      %2781 = vmatpush.msra.mxu0 0.0
      %2782 = vmatpush.msra.mxu0 0.0
      %2783 = vmatpush.msra.mxu0 0.0
      %2784 = vmatpush.msra.mxu0 0.0
      %2785 = vmatpush.msra.mxu0 0.0
      %2786 = vmatpush.msra.mxu0 0.0
      %2787 = vmatpush.msra.mxu0 0.0
      %2788 = vmatpush.msra.mxu0 0.0
      %2789 = vmatpush.msra.mxu0 0.0
      %2790 = vmatpush.msra.mxu0 0.0
      %2791 = vmatpush.msra.mxu0 0.0
      %2792 = vmatpush.msra.mxu0 %v2755
      %2793 = vmatmul.f32.gmra.mxu0 %v2749
      %v2794 = vpop.f32.mrf.mxu0
      %v2795 = vadd.f32 %v2746, %v2794
      %2796 = vdwg.mxu0
      %2797 = vrot.lane.b32.xlu0 %v2667, 15
      %v2798 = vpop.permute.xlu0 %2797
      %2799 = vrot.lane.b32.xlu0 %v2668, 15
      %v2800 = vpop.permute.xlu0 %2799
      %v2801 = vsel %vm360, %v2798, %v2800
      %v2802 = vsel %vm360, %v2800, %v2798
      %2803 = vst [vmem:[#allocation1] ss:$2 sm:$0xff] %v364
      %v2804 = vld.sshfl [vmem:[#allocation1] sm:$0xff pattern:$0x75316420]
      %v2805 = vld.sshfl [vmem:[#allocation1 + $0x8] sm:$0xff pattern:$0x75316420]
      %v2808 = vmul.f32 %v2802, %v2804
      %v2809 = vmul.f32 %v2801, %v2805
      %s2810 = scalar_lea.vmem %s1, 152
      %v2811 = vld [vmem:[%s2810] sm:$0xf]
      %v2813 = vsel %vm251, %v2811, 0
      %v2816 = vsel %vm255, %v2808, 0
      %v2819 = vsel %vm255, %v2809, 0
      %2821 = vmatpush.msra.mxu0 0.0
      %2822 = vmatpush.msra.mxu0 0.0
      %2823 = vmatpush.msra.mxu0 0.0
      %2824 = vmatpush.msra.mxu0 0.0
      %2825 = vmatpush.msra.mxu0 0.0
      %2826 = vmatpush.msra.mxu0 0.0
      %2827 = vmatpush.msra.mxu0 0.0
      %2828 = vmatpush.msra.mxu0 0.0
      %2829 = vmatpush.msra.mxu0 0.0
      %2830 = vmatpush.msra.mxu0 0.0
      %2831 = vmatpush.msra.mxu0 0.0
      %2832 = vmatpush.msra.mxu0 0.0
      %2833 = vmatpush.msra.mxu0 0.0
      %2834 = vmatpush.msra.mxu0 0.0
      %2835 = vmatpush.msra.mxu0 0.0
      %2836 = vmatpush.msra.mxu0 %v2816
      %2837 = vmatmul.f32.gmra.mxu0 %v2813
      %v2838 = vpop.f32.mrf.mxu0
      %v2839 = vadd.f32 0.0, %v2838
      %2840 = vdwg.mxu0
      %2841 = vmatpush.msra.mxu0 0.0
      %2842 = vmatpush.msra.mxu0 0.0
      %2843 = vmatpush.msra.mxu0 0.0
      %2844 = vmatpush.msra.mxu0 0.0
      %2845 = vmatpush.msra.mxu0 0.0
      %2846 = vmatpush.msra.mxu0 0.0
      %2847 = vmatpush.msra.mxu0 0.0
      %2848 = vmatpush.msra.mxu0 0.0
      %2849 = vmatpush.msra.mxu0 0.0
      %2850 = vmatpush.msra.mxu0 0.0
      %2851 = vmatpush.msra.mxu0 0.0
      %2852 = vmatpush.msra.mxu0 0.0
      %2853 = vmatpush.msra.mxu0 0.0
      %2854 = vmatpush.msra.mxu0 0.0
      %2855 = vmatpush.msra.mxu0 0.0
      %2856 = vmatpush.msra.mxu0 %v2819
      %2857 = vmatmul.f32.gmra.mxu0 %v2813
      %v2858 = vpop.f32.mrf.mxu0
      %v2859 = vadd.f32 0.0, %v2858
      %2860 = vdwg.mxu0
      %v2861 = vadd.f32 %v2775, %v2839
      %v2862 = vadd.f32 %v2795, %v2859
      %2863 = vrot.lane.b32.xlu0 %v2667, 1
      %v2864 = vpop.permute.xlu0 %2863
      %2865 = vrot.lane.b32.xlu0 %v2668, 1
      %v2866 = vpop.permute.xlu0 %2865
      %v2867 = vsel %vm435, %v2864, %v2866
      %v2868 = vsel %vm435, %v2866, %v2864
      %2869 = vst [vmem:[#allocation1] ss:$2 sm:$0xff] %v439
      %v2870 = vld.sshfl [vmem:[#allocation1] sm:$0xff pattern:$0x75316420]
      %v2871 = vld.sshfl [vmem:[#allocation1 + $0x8] sm:$0xff pattern:$0x75316420]
      %v2874 = vmul.f32 %v2868, %v2870
      %v2875 = vmul.f32 %v2867, %v2871
      %s2876 = scalar_lea.vmem %s1, 156
      %v2877 = vld [vmem:[%s2876] sm:$0xf]
      %v2879 = vsel %vm251, %v2877, 0
      %v2882 = vsel %vm255, %v2874, 0
      %v2885 = vsel %vm255, %v2875, 0
      %2887 = vmatpush.msra.mxu0 0.0
      %2888 = vmatpush.msra.mxu0 0.0
      %2889 = vmatpush.msra.mxu0 0.0
      %2890 = vmatpush.msra.mxu0 0.0
      %2891 = vmatpush.msra.mxu0 0.0
      %2892 = vmatpush.msra.mxu0 0.0
      %2893 = vmatpush.msra.mxu0 0.0
      %2894 = vmatpush.msra.mxu0 0.0
      %2895 = vmatpush.msra.mxu0 0.0
      %2896 = vmatpush.msra.mxu0 0.0
      %2897 = vmatpush.msra.mxu0 0.0
      %2898 = vmatpush.msra.mxu0 0.0
      %2899 = vmatpush.msra.mxu0 0.0
      %2900 = vmatpush.msra.mxu0 0.0
      %2901 = vmatpush.msra.mxu0 0.0
      %2902 = vmatpush.msra.mxu0 %v2882
      %2903 = vmatmul.f32.gmra.mxu0 %v2879
      %v2904 = vpop.f32.mrf.mxu0
      %v2905 = vadd.f32 0.0, %v2904
      %2906 = vdwg.mxu0
      %2907 = vmatpush.msra.mxu0 0.0
      %2908 = vmatpush.msra.mxu0 0.0
      %2909 = vmatpush.msra.mxu0 0.0
      %2910 = vmatpush.msra.mxu0 0.0
      %2911 = vmatpush.msra.mxu0 0.0
      %2912 = vmatpush.msra.mxu0 0.0
      %2913 = vmatpush.msra.mxu0 0.0
      %2914 = vmatpush.msra.mxu0 0.0
      %2915 = vmatpush.msra.mxu0 0.0
      %2916 = vmatpush.msra.mxu0 0.0
      %2917 = vmatpush.msra.mxu0 0.0
      %2918 = vmatpush.msra.mxu0 0.0
      %2919 = vmatpush.msra.mxu0 0.0
      %2920 = vmatpush.msra.mxu0 0.0
      %2921 = vmatpush.msra.mxu0 0.0
      %2922 = vmatpush.msra.mxu0 %v2885
      %2923 = vmatmul.f32.gmra.mxu0 %v2879
      %v2924 = vpop.f32.mrf.mxu0
      %v2925 = vadd.f32 0.0, %v2924
      %2926 = vdwg.mxu0
      %v2927 = vadd.f32 %v2861, %v2905
      %v2928 = vadd.f32 %v2862, %v2925
      %s2929 = scalar_lea.vmem %s1, 160
      %v2930 = vld [vmem:[%s2929] sm:$0xf]
      %v2932 = vsel %vm251, %v2930, 0
      %v2935 = vsel %vm255, %v2667, 0
      %v2938 = vsel %vm255, %v2668, 0
      %2940 = vmatpush.msra.mxu0 0.0
      %2941 = vmatpush.msra.mxu0 0.0
      %2942 = vmatpush.msra.mxu0 0.0
      %2943 = vmatpush.msra.mxu0 0.0
      %2944 = vmatpush.msra.mxu0 0.0
      %2945 = vmatpush.msra.mxu0 0.0
      %2946 = vmatpush.msra.mxu0 0.0
      %2947 = vmatpush.msra.mxu0 0.0
      %2948 = vmatpush.msra.mxu0 0.0
      %2949 = vmatpush.msra.mxu0 0.0
      %2950 = vmatpush.msra.mxu0 0.0
      %2951 = vmatpush.msra.mxu0 0.0
      %2952 = vmatpush.msra.mxu0 0.0
      %2953 = vmatpush.msra.mxu0 0.0
      %2954 = vmatpush.msra.mxu0 0.0
      %2955 = vmatpush.msra.mxu0 %v2935
      %2956 = vmatmul.f32.gmra.mxu0 %v2932
      %v2957 = vpop.f32.mrf.mxu0
      %v2958 = vadd.f32 0.0, %v2957
      %2959 = vdwg.mxu0
      %2960 = vmatpush.msra.mxu0 0.0
      %2961 = vmatpush.msra.mxu0 0.0
      %2962 = vmatpush.msra.mxu0 0.0
      %2963 = vmatpush.msra.mxu0 0.0
      %2964 = vmatpush.msra.mxu0 0.0
      %2965 = vmatpush.msra.mxu0 0.0
      %2966 = vmatpush.msra.mxu0 0.0
      %2967 = vmatpush.msra.mxu0 0.0
      %2968 = vmatpush.msra.mxu0 0.0
      %2969 = vmatpush.msra.mxu0 0.0
      %2970 = vmatpush.msra.mxu0 0.0
      %2971 = vmatpush.msra.mxu0 0.0
      %2972 = vmatpush.msra.mxu0 0.0
      %2973 = vmatpush.msra.mxu0 0.0
      %2974 = vmatpush.msra.mxu0 0.0
      %2975 = vmatpush.msra.mxu0 %v2938
      %2976 = vmatmul.f32.gmra.mxu0 %v2932
      %v2977 = vpop.f32.mrf.mxu0
      %v2978 = vadd.f32 0.0, %v2977
      %2979 = vdwg.mxu0
      %v2980 = vadd.f32 %v2927, %v2958
      %v2981 = vadd.f32 %v2928, %v2978
      %2982 = vrot.lane.b32.xlu0 %v2667, 127
      %v2983 = vpop.permute.xlu0 %2982
      %2984 = vrot.lane.b32.xlu0 %v2668, 127
      %v2985 = vpop.permute.xlu0 %2984
      %v2986 = vsel %vm564, %v2983, %v2985
      %v2987 = vsel %vm564, %v2985, %v2983
      %2988 = vst [vmem:[#allocation1] ss:$2 sm:$0xff] %v568
      %v2989 = vld.sshfl [vmem:[#allocation1] sm:$0xff pattern:$0x75316420]
      %v2990 = vld.sshfl [vmem:[#allocation1 + $0x8] sm:$0xff pattern:$0x75316420]
      %v2993 = vmul.f32 %v2986, %v2989
      %v2994 = vmul.f32 %v2987, %v2990
      %s2995 = scalar_lea.vmem %s1, 164
      %v2996 = vld [vmem:[%s2995] sm:$0xf]
      %v2998 = vsel %vm251, %v2996, 0
      %v3001 = vsel %vm255, %v2993, 0
      %v3004 = vsel %vm255, %v2994, 0
      %3006 = vmatpush.msra.mxu0 0.0
      %3007 = vmatpush.msra.mxu0 0.0
      %3008 = vmatpush.msra.mxu0 0.0
      %3009 = vmatpush.msra.mxu0 0.0
      %3010 = vmatpush.msra.mxu0 0.0
      %3011 = vmatpush.msra.mxu0 0.0
      %3012 = vmatpush.msra.mxu0 0.0
      %3013 = vmatpush.msra.mxu0 0.0
      %3014 = vmatpush.msra.mxu0 0.0
      %3015 = vmatpush.msra.mxu0 0.0
      %3016 = vmatpush.msra.mxu0 0.0
      %3017 = vmatpush.msra.mxu0 0.0
      %3018 = vmatpush.msra.mxu0 0.0
      %3019 = vmatpush.msra.mxu0 0.0
      %3020 = vmatpush.msra.mxu0 0.0
      %3021 = vmatpush.msra.mxu0 %v3001
      %3022 = vmatmul.f32.gmra.mxu0 %v2998
      %v3023 = vpop.f32.mrf.mxu0
      %v3024 = vadd.f32 0.0, %v3023
      %3025 = vdwg.mxu0
      %3026 = vmatpush.msra.mxu0 0.0
      %3027 = vmatpush.msra.mxu0 0.0
      %3028 = vmatpush.msra.mxu0 0.0
      %3029 = vmatpush.msra.mxu0 0.0
      %3030 = vmatpush.msra.mxu0 0.0
      %3031 = vmatpush.msra.mxu0 0.0
      %3032 = vmatpush.msra.mxu0 0.0
      %3033 = vmatpush.msra.mxu0 0.0
      %3034 = vmatpush.msra.mxu0 0.0
      %3035 = vmatpush.msra.mxu0 0.0
      %3036 = vmatpush.msra.mxu0 0.0
      %3037 = vmatpush.msra.mxu0 0.0
      %3038 = vmatpush.msra.mxu0 0.0
      %3039 = vmatpush.msra.mxu0 0.0
      %3040 = vmatpush.msra.mxu0 0.0
      %3041 = vmatpush.msra.mxu0 %v3004
      %3042 = vmatmul.f32.gmra.mxu0 %v2998
      %v3043 = vpop.f32.mrf.mxu0
      %v3044 = vadd.f32 0.0, %v3043
      %3045 = vdwg.mxu0
      %v3046 = vadd.f32 %v2980, %v3024
      %v3047 = vadd.f32 %v2981, %v3044
      %3048 = vrot.lane.b32.xlu0 %v2667, 113
      %v3049 = vpop.permute.xlu0 %3048
      %3050 = vrot.lane.b32.xlu0 %v2668, 113
      %v3051 = vpop.permute.xlu0 %3050
      %v3052 = vsel %vm639, %v3049, %v3051
      %v3053 = vsel %vm639, %v3051, %v3049
      %3054 = vst [vmem:[#allocation1] ss:$2 sm:$0xff] %v643
      %v3055 = vld.sshfl [vmem:[#allocation1] sm:$0xff pattern:$0x75316420]
      %v3056 = vld.sshfl [vmem:[#allocation1 + $0x8] sm:$0xff pattern:$0x75316420]
      %v3059 = vmul.f32 %v3052, %v3055
      %v3060 = vmul.f32 %v3053, %v3056
      %s3061 = scalar_lea.vmem %s1, 168
      %v3062 = vld [vmem:[%s3061] sm:$0xf]
      %v3064 = vsel %vm251, %v3062, 0
      %v3067 = vsel %vm255, %v3059, 0
      %v3070 = vsel %vm255, %v3060, 0
      %3072 = vmatpush.msra.mxu0 0.0
      %3073 = vmatpush.msra.mxu0 0.0
      %3074 = vmatpush.msra.mxu0 0.0
      %3075 = vmatpush.msra.mxu0 0.0
      %3076 = vmatpush.msra.mxu0 0.0
      %3077 = vmatpush.msra.mxu0 0.0
      %3078 = vmatpush.msra.mxu0 0.0
      %3079 = vmatpush.msra.mxu0 0.0
      %3080 = vmatpush.msra.mxu0 0.0
      %3081 = vmatpush.msra.mxu0 0.0
      %3082 = vmatpush.msra.mxu0 0.0
      %3083 = vmatpush.msra.mxu0 0.0
      %3084 = vmatpush.msra.mxu0 0.0
      %3085 = vmatpush.msra.mxu0 0.0
      %3086 = vmatpush.msra.mxu0 0.0
      %3087 = vmatpush.msra.mxu0 %v3067
      %3088 = vmatmul.f32.gmra.mxu0 %v3064
      %v3089 = vpop.f32.mrf.mxu0
      %v3090 = vadd.f32 0.0, %v3089
      %3091 = vdwg.mxu0
      %3092 = vmatpush.msra.mxu0 0.0
      %3093 = vmatpush.msra.mxu0 0.0
      %3094 = vmatpush.msra.mxu0 0.0
      %3095 = vmatpush.msra.mxu0 0.0
      %3096 = vmatpush.msra.mxu0 0.0
      %3097 = vmatpush.msra.mxu0 0.0
      %3098 = vmatpush.msra.mxu0 0.0
      %3099 = vmatpush.msra.mxu0 0.0
      %3100 = vmatpush.msra.mxu0 0.0
      %3101 = vmatpush.msra.mxu0 0.0
      %3102 = vmatpush.msra.mxu0 0.0
      %3103 = vmatpush.msra.mxu0 0.0
      %3104 = vmatpush.msra.mxu0 0.0
      %3105 = vmatpush.msra.mxu0 0.0
      %3106 = vmatpush.msra.mxu0 0.0
      %3107 = vmatpush.msra.mxu0 %v3070
      %3108 = vmatmul.f32.gmra.mxu0 %v3064
      %v3109 = vpop.f32.mrf.mxu0
      %v3110 = vadd.f32 0.0, %v3109
      %3111 = vdwg.mxu0
      %v3112 = vadd.f32 %v3046, %v3090
      %v3113 = vadd.f32 %v3047, %v3110
      %3114 = vrot.lane.b32.xlu0 %v2667, 112
      %v3115 = vpop.permute.xlu0 %3114
      %3116 = vrot.lane.b32.xlu0 %v2668, 112
      %v3117 = vpop.permute.xlu0 %3116
      %v3118 = vsel %vm714, %v3115, %v3117
      %v3119 = vsel %vm714, %v3117, %v3115
      %3120 = vst [vmem:[#allocation1] ss:$2 sm:$0xff] %v718
      %v3121 = vld.sshfl [vmem:[#allocation1] sm:$0xff pattern:$0x75316420]
      %v3122 = vld.sshfl [vmem:[#allocation1 + $0x8] sm:$0xff pattern:$0x75316420]
      %v3125 = vmul.f32 %v3118, %v3121
      %v3126 = vmul.f32 %v3119, %v3122
      %s3127 = scalar_lea.vmem %s1, 172
      %v3128 = vld [vmem:[%s3127] sm:$0xf]
      %v3130 = vsel %vm251, %v3128, 0
      %v3133 = vsel %vm255, %v3125, 0
      %v3136 = vsel %vm255, %v3126, 0
      %3138 = vmatpush.msra.mxu0 0.0
      %3139 = vmatpush.msra.mxu0 0.0
      %3140 = vmatpush.msra.mxu0 0.0
      %3141 = vmatpush.msra.mxu0 0.0
      %3142 = vmatpush.msra.mxu0 0.0
      %3143 = vmatpush.msra.mxu0 0.0
      %3144 = vmatpush.msra.mxu0 0.0
      %3145 = vmatpush.msra.mxu0 0.0
      %3146 = vmatpush.msra.mxu0 0.0
      %3147 = vmatpush.msra.mxu0 0.0
      %3148 = vmatpush.msra.mxu0 0.0
      %3149 = vmatpush.msra.mxu0 0.0
      %3150 = vmatpush.msra.mxu0 0.0
      %3151 = vmatpush.msra.mxu0 0.0
      %3152 = vmatpush.msra.mxu0 0.0
      %3153 = vmatpush.msra.mxu0 %v3133
      %3154 = vmatmul.f32.gmra.mxu0 %v3130
      %v3155 = vpop.f32.mrf.mxu0
      %v3156 = vadd.f32 0.0, %v3155
      %3157 = vdwg.mxu0
      %3158 = vmatpush.msra.mxu0 0.0
      %3159 = vmatpush.msra.mxu0 0.0
      %3160 = vmatpush.msra.mxu0 0.0
      %3161 = vmatpush.msra.mxu0 0.0
      %3162 = vmatpush.msra.mxu0 0.0
      %3163 = vmatpush.msra.mxu0 0.0
      %3164 = vmatpush.msra.mxu0 0.0
      %3165 = vmatpush.msra.mxu0 0.0
      %3166 = vmatpush.msra.mxu0 0.0
      %3167 = vmatpush.msra.mxu0 0.0
      %3168 = vmatpush.msra.mxu0 0.0
      %3169 = vmatpush.msra.mxu0 0.0
      %3170 = vmatpush.msra.mxu0 0.0
      %3171 = vmatpush.msra.mxu0 0.0
      %3172 = vmatpush.msra.mxu0 0.0
      %3173 = vmatpush.msra.mxu0 %v3136
      %3174 = vmatmul.f32.gmra.mxu0 %v3130
      %v3175 = vpop.f32.mrf.mxu0
      %v3176 = vadd.f32 0.0, %v3175
      %3177 = vdwg.mxu0
      %v3178 = vadd.f32 %v3112, %v3156
      %v3179 = vadd.f32 %v3113, %v3176
      %3180 = vrot.lane.b32.xlu0 %v2667, 111
      %v3181 = vpop.permute.xlu0 %3180
      %3182 = vrot.lane.b32.xlu0 %v2668, 111
      %v3183 = vpop.permute.xlu0 %3182
      %v3184 = vsel %vm789, %v3181, %v3183
      %v3185 = vsel %vm789, %v3183, %v3181
      %3186 = vst [vmem:[#allocation1] ss:$2 sm:$0xff] %v793
      %v3187 = vld.sshfl [vmem:[#allocation1] sm:$0xff pattern:$0x75316420]
      %v3188 = vld.sshfl [vmem:[#allocation1 + $0x8] sm:$0xff pattern:$0x75316420]
      %v3191 = vmul.f32 %v3184, %v3187
      %v3192 = vmul.f32 %v3185, %v3188
      %s3193 = scalar_lea.vmem %s1, 176
      %v3194 = vld [vmem:[%s3193] sm:$0xf]
      %v3196 = vsel %vm251, %v3194, 0
      %v3199 = vsel %vm255, %v3191, 0
      %v3202 = vsel %vm255, %v3192, 0
      %3204 = vmatpush.msra.mxu0 0.0
      %3205 = vmatpush.msra.mxu0 0.0
      %3206 = vmatpush.msra.mxu0 0.0
      %3207 = vmatpush.msra.mxu0 0.0
      %3208 = vmatpush.msra.mxu0 0.0
      %3209 = vmatpush.msra.mxu0 0.0
      %3210 = vmatpush.msra.mxu0 0.0
      %3211 = vmatpush.msra.mxu0 0.0
      %3212 = vmatpush.msra.mxu0 0.0
      %3213 = vmatpush.msra.mxu0 0.0
      %3214 = vmatpush.msra.mxu0 0.0
      %3215 = vmatpush.msra.mxu0 0.0
      %3216 = vmatpush.msra.mxu0 0.0
      %3217 = vmatpush.msra.mxu0 0.0
      %3218 = vmatpush.msra.mxu0 0.0
      %3219 = vmatpush.msra.mxu0 %v3199
      %3220 = vmatmul.f32.gmra.mxu0 %v3196
      %v3221 = vpop.f32.mrf.mxu0
      %v3222 = vadd.f32 0.0, %v3221
      %3223 = vdwg.mxu0
      %3224 = vmatpush.msra.mxu0 0.0
      %3225 = vmatpush.msra.mxu0 0.0
      %3226 = vmatpush.msra.mxu0 0.0
      %3227 = vmatpush.msra.mxu0 0.0
      %3228 = vmatpush.msra.mxu0 0.0
      %3229 = vmatpush.msra.mxu0 0.0
      %3230 = vmatpush.msra.mxu0 0.0
      %3231 = vmatpush.msra.mxu0 0.0
      %3232 = vmatpush.msra.mxu0 0.0
      %3233 = vmatpush.msra.mxu0 0.0
      %3234 = vmatpush.msra.mxu0 0.0
      %3235 = vmatpush.msra.mxu0 0.0
      %3236 = vmatpush.msra.mxu0 0.0
      %3237 = vmatpush.msra.mxu0 0.0
      %3238 = vmatpush.msra.mxu0 0.0
      %3239 = vmatpush.msra.mxu0 %v3202
      %3240 = vmatmul.f32.gmra.mxu0 %v3196
      %v3241 = vpop.f32.mrf.mxu0
      %v3242 = vadd.f32 0.0, %v3241
      %3243 = vdwg.mxu0
      %v3244 = vadd.f32 %v3178, %v3222
      %v3245 = vadd.f32 %v3179, %v3242
      %s3246 = scalar_lea.vmem %s2, 16
      %v3247 = vld [vmem:[%s3246] sm:$0xf]
      %3249 = vset.pattern.permute.xlu0 0
      %3250 = vperm.xlu0 %3249, %v3247
      %v3251 = vpop.permute.xlu0 %3250
      %v3253 = vadd.f32 %v3244, %v3251
      %v3254 = vadd.f32 %v3245, %v3251
      %vm3255 = vcmp.gt.f32.partialorder %v3253, 0.0
      %vm3256 = vcmp.gt.f32.partialorder %v3254, 0.0
      %v3257 = vmin.f32 %v3253, 0.0
      %v3258 = vmin.f32 %v3254, 0.0
      %v3259 = vmul.f32 %v3257, 1.442695
      %v3260 = vpow.pop %v3259
      %v3261 = vmul.f32 %v3258, 1.442695
      %v3262 = vpow.pop %v3261
      %v3263 = vsub.f32 %v3260, 1.0
      %v3264 = vsub.f32 %v3262, 1.0
      %v3265 = vsel %vm3255, %v3253, %v3263
      %v3266 = vsel %vm3256, %v3254, %v3264
      %v3269 = vrot.slane %v3266, 4
      %v3270 = vsel %vm255, %v3265, %v3269
      %3272 = vst [vmem:[%s199] sm:$0xff] %v3270
      %s3273 = smul.u32 2, %s15
      %p3274 = scmp.lt.s32.totalorder %s3273, 3
      %s3275 = scalar_select %p3274, %s3273, 3
      %s3276 = smul.addr %s3275, 4
      %s3277 = scalar_lea.vmem %s4, %s3276
      // Predicated region
      $region37: #{mult_deconv_forward.1} parent=35 // pred_check
        %p3278 = pneg %p122
      $region38: #{mult_deconv_forward.1} parent=35 // pred_check_branch
        %3280 = sbr.rel (%p3278) target = $region40
      $region39: #{mult_deconv_forward.1} parent=35 // pred_region
        %s3281 = smul.u32 2, %s15
      $region40: #{mult_deconv_forward.1} parent=35 // pred_fallthru
        _
    $region36: #{mult_deconv_forward.1} parent=5 // pred_fallthru
      _
    %p3282 = scmp.le.s32.totalorder 2, %s10
    // Predicated region
    $region41: #{mult_deconv_forward.1} parent=5 // pred_check
      %p3283 = pneg %p3282
    $region42: #{mult_deconv_forward.1} parent=5 // pred_check_branch
      %3285 = sbr.rel (%p3283) target = $region44
    $region43: #{mult_deconv_forward.1} parent=5 // pred_region
      %s3286 = ssub.s32 %s10, 2
      // Predicated region
      $region45: #{mult_deconv_forward.1} parent=43 // pred_check
        %p3287 = pneg %p128
      $region46: #{mult_deconv_forward.1} parent=43 // pred_check_branch
        %3289 = sbr.rel (%p3287) target = $region48
      $region47: #{mult_deconv_forward.1} parent=43 // pred_region
        %s3290 = smul.u32 2, %s16
        %p3291 = scmp.lt.s32.totalorder %s3290, 3
        %s3292 = scalar_select %p3291, %s3290, 3
        %s3293 = smul.addr %s3292, 4
        %s3294 = scalar_lea.vmem %s4, %s3293
      $region48: #{mult_deconv_forward.1} parent=43 // pred_fallthru
        _
    $region44: #{mult_deconv_forward.1} parent=5 // pred_fallthru
      _
  $region6: #{mult_deconv_forward.1} parent=0 // loop_footer
    %s14 = sadd.s32 1, %s10
  $region7: #{mult_deconv_forward.1} parent=0 // loop_footer_branch
    %9 = sbr.rel target = $region3
  $region8: #{mult_deconv_forward.1} parent=0 // loop_exit
    _

</llo_original>
